<compile_context>
chip_gen: v5e
topology: v5e:2x2
jax: 0.10.0
libtpu: 0.0.40
codegen_flags: <defaults>
</compile_context>

<pallas_src>
import math
import functools
import numpy as np

import jax
import jax.numpy as jnp
from jax.experimental import pallas as pl
from jax.experimental.pallas import tpu as pltpu

# ---------------- config (stand-in for H) ----------------
BERT_N_EMB = 128          # C
BERT_N_HEAD = 4           # nh  (divisible by num_splits = 4)
SAMPLER = "absorbing"     # -> causal = False
DILATIONS = [1, 4, 8, 16]
KERNEL_SIZES = [7, 7, 7, 7]
NUM_SPLITS = len(KERNEL_SIZES)
ROTARY_DIM = 32           # RotaryEmbedding(dim=32)
ROPE_THETA = 10000.0
NEG_INF = -1e30


# ---------------- Pallas kernel: fused QKV projection ----------------
def _linear_kernel(x_ref, wt_ref, b_ref, o_ref):
    # y = x @ W^T + b ; x cast to bf16 at the MXU, f32 accumulation.
    x = x_ref[...].astype(jnp.bfloat16)
    acc = jnp.dot(x, wt_ref[...], preferred_element_type=jnp.float32)
    o_ref[...] = (acc + b_ref[...]).astype(o_ref.dtype)


def linear_pallas(x2d, wt_bf16, b_row, *, tm=None):
    """x2d: (M, Cin) f32; wt_bf16: (Cin, Cout) bf16 (already W^T); b_row: (1, Cout) f32."""
    M, Cin = x2d.shape
    Cout = wt_bf16.shape[1]
    if tm is None:
        tm = M                      # single grid step at these sizes
    assert M % tm == 0
    return pl.pallas_call(
        _linear_kernel,
        out_shape=jax.ShapeDtypeStruct((M, Cout), jnp.float32),
        grid_spec=pl.GridSpec(
            grid=(M // tm,),
            in_specs=[pl.BlockSpec((tm, Cin), lambda i: (i, 0)),
                      pl.BlockSpec((Cin, Cout), lambda i: (0, 0)),
                      pl.BlockSpec((1, Cout), lambda i: (0, 0))],
            out_specs=pl.BlockSpec((tm, Cout), lambda i: (i, 0))),
        compiler_params=pltpu.CompilerParams(dimension_semantics=("parallel",)),
    )(x2d, wt_bf16, b_row)


# ---------------- Pallas kernel: neighborhood attention + output proj ----------------
def _na_attn_proj_kernel(q_ref, k_ref, v_ref, bias_ref, wp_ref, bp_ref, o_ref,
                         *, scale, n_head, n_groups):
    # One grid step == one batch element.  q_ref/k_ref/v_ref: (nh, T, hs) bf16.
    # q rows are pre-permuted: row rho = j*Tg + m holds query tau = n_groups*m + j,
    # so head h's output slab lands contiguously at o_ref rows [h*Tg, (h+1)*Tg)
    # in exactly the reference's cat(dim=1).reshape(B, T, C) layout.
    T = q_ref.shape[1]
    hs = q_ref.shape[2]
    Tg = T // n_groups
    bp = bp_ref[...]                                   # (1, C) f32

    for h in range(n_head):
        q_h = q_ref[h]                                 # (T, hs) bf16
        k_h = k_ref[h]                                 # (T, hs) bf16
        v_h = v_ref[h]                                 # (T, hs) bf16

        # scores (f32 accumulation on the MXU) + additive neighborhood bias
        s = jax.lax.dot_general(q_h, k_h, (((1,), (1,)), ((), ())),
                                preferred_element_type=jnp.float32)   # (T, T)
        s = s * scale + bias_ref[h]

        # softmax (all elementwise math in f32; reciprocal on the EUP)
        s = s - jnp.max(s, axis=-1, keepdims=True)
        p = jnp.exp(s)
        p = p * pl.reciprocal(jnp.sum(p, axis=-1, keepdims=True), approx=True)

        out_h = jnp.dot(p.astype(jnp.bfloat16), v_h,
                        preferred_element_type=jnp.float32)           # (T, hs) f32

        # Fused output projection, distributed over the n_groups column groups
        # of the "weird" reshape layout:
        #   y[h*Tg + m, :] = sum_j out_h[j*Tg + m, :] @ Wp^T[j*hs:(j+1)*hs, :] + bp
        y_h = None
        for g in range(n_groups):
            part = jnp.dot(out_h[g * Tg:(g + 1) * Tg, :].astype(jnp.bfloat16),
                           wp_ref[g * hs:(g + 1) * hs, :],
                           preferred_element_type=jnp.float32)        # (Tg, C)
            y_h = part if y_h is None else y_h + part
        y_h = y_h + bp
        # lane-dense (Tg, C=128) store at a static sublane offset
        o_ref[h * Tg:(h + 1) * Tg, :] = y_h.astype(o_ref.dtype)


def na_attention_proj_pallas(q_p, k_r, v, bias_p, wp_t_bf16, bp_row):
    """q_p/k_r/v: (B, nh, T, hs) bf16; bias_p: (nh, T, T) f32;
    wp_t_bf16: (C, C) bf16 (W_proj^T); bp_row: (1, C) f32.  Returns (B, T, C) f32."""
    B, nh, T, hs = q_p.shape
    C = nh * hs
    scale = 1.0 / math.sqrt(hs)
    kern = functools.partial(_na_attn_proj_kernel,
                             scale=scale, n_head=nh, n_groups=C // hs)
    return pl.pallas_call(
        kern,
        out_shape=jax.ShapeDtypeStruct((B, T, C), jnp.float32),
        grid_spec=pl.GridSpec(
            grid=(B,),
            in_specs=[pl.BlockSpec((None, nh, T, hs), lambda b: (b, 0, 0, 0)),
                      pl.BlockSpec((None, nh, T, hs), lambda b: (b, 0, 0, 0)),
                      pl.BlockSpec((None, nh, T, hs), lambda b: (b, 0, 0, 0)),
                      pl.BlockSpec((nh, T, T), lambda b: (0, 0, 0)),   # resident
                      pl.BlockSpec((C, C), lambda b: (0, 0)),          # resident
                      pl.BlockSpec((1, C), lambda b: (0, 0))],         # resident
            out_specs=pl.BlockSpec((None, T, C), lambda b: (b, 0, 0))),
        compiler_params=pltpu.CompilerParams(dimension_semantics=("parallel",)),
    )(q_p, k_r, v, bias_p, wp_t_bf16, bp_row)


# ---------------- glue: NATTEN 1D neighborhood bias ----------------
def na1d_neighborhood_mask(T, K, d):
    """Boolean (T, T): mask[i, j] == True iff j is in the NATTEN-1D neighborhood
    of query i (kernel_size=K, dilation=d, non-causal, with edge clamping)."""
    assert K * d <= T, "NATTEN requires kernel_size * dilation <= seqlen"
    i = np.arange(T)
    g = i % d                                # dilation group
    ni = i // d                              # index within the group
    Lg = (T - g + d - 1) // d                # group length
    start = np.clip(ni - K // 2, 0, Lg - K)  # window start, group coords
    mask = np.zeros((T, T), dtype=bool)
    for t in range(K):
        j = g + (start + t) * d
        mask[i, j] = True
    return mask


def build_attn_bias(T, n_head):
    """(nh, T, T) f32 additive bias {0, -1e30}, with query rows permuted to the
    kernel's (column-group, row) order: rho = j*Tg + m  <-  tau = nG*m + j."""
    nh_s = n_head // NUM_SPLITS
    nG = n_head // nh_s if nh_s else n_head   # == C // hs when nh_s == 1
    Tg = T // nG
    perm = np.arange(T).reshape(Tg, nG).T.reshape(-1)    # perm[rho] = tau
    biases = []
    for h in range(n_head):
        split = h // nh_s
        m = na1d_neighborhood_mask(T, KERNEL_SIZES[split], DILATIONS[split])
        b = np.where(m, 0.0, NEG_INF).astype(np.float32)
        biases.append(b[perm, :])
    return jnp.asarray(np.stack(biases))


# ---------------- glue: RoPE (rotary_embedding_torch semantics) ----------------
def apply_rope(x, rot_dim=ROTARY_DIM, theta=ROPE_THETA):
    """x: (..., T, D); rotate the first rot_dim channels along the last axis
    using interleaved pairs (rotary_embedding_torch default)."""
    T, D = x.shape[-2], x.shape[-1]
    assert rot_dim <= D
    inv_freq = 1.0 / (theta ** (jnp.arange(0, rot_dim, 2, dtype=jnp.float32) / rot_dim))
    pos = jnp.arange(T, dtype=jnp.float32)
    freqs = pos[:, None] * inv_freq[None, :]        # (T, rot_dim//2)
    freqs = jnp.repeat(freqs, 2, axis=-1)           # (T, rot_dim) [f0,f0,f1,f1,...]
    cos, sin = jnp.cos(freqs), jnp.sin(freqs)
    x_rot = x[..., :rot_dim]
    x1 = x_rot[..., 0::2]
    x2 = x_rot[..., 1::2]
    rot_half = jnp.stack([-x2, x1], axis=-1).reshape(x_rot.shape)
    out = x_rot * cos + rot_half * sin
    if rot_dim == D:
        return out
    return jnp.concatenate([out, x[..., rot_dim:]], axis=-1)


# ---------------- parameter init (deterministic, torch Linear default) ----------------
def init_params(key, C):
    ks = jax.random.split(key, 8)
    bound = 1.0 / math.sqrt(C)

    def lin(kw, kb):
        w = jax.random.uniform(kw, (C, C), jnp.float32, -bound, bound)
        b = jax.random.uniform(kb, (C,), jnp.float32, -bound, bound)
        return (w, b)

    return {
        "key": lin(ks[0], ks[1]),
        "query": lin(ks[2], ks[3]),
        "value": lin(ks[4], ks[5]),
        "proj": lin(ks[6], ks[7]),
    }
    # TODO(synk): self.rpb ParameterList is unused on the use_rpb=False path; not materialized.


# ---------------- forward ----------------
def hydra_na_forward(params, x, attn_bias_p):
    B, T, C = x.shape
    nh = BERT_N_HEAD
    hs = C // nh
    nh_s = nh // NUM_SPLITS
    nG = C // hs                    # == nh when nh_s == 1
    Tg = T // nG
    # The fused output-layout path relies on one head per split and T % nG == 0;
    # both hold for this module's config (nh == num_splits == 4, T multiple of 4).
    assert nh_s == 1 and T % nG == 0
    assert hs == ROTARY_DIM         # per-split RoPE == whole-head RoPE only then

    x2d = x.reshape(B * T, C)

    # fused q/k/v projection: one Pallas matmul over (B*T, C) @ (C, 3C)
    (wq, bq) = params["query"]
    (wk, bk) = params["key"]
    (wv, bv) = params["value"]
    wqkv_t = jnp.concatenate([wq.T, wk.T, wv.T], axis=1).astype(jnp.bfloat16)
    bqkv = jnp.concatenate([bq, bk, bv]).reshape(1, 3 * C)
    qkv = linear_pallas(x2d, wqkv_t, bqkv)                       # (B*T, 3C) f32

    def to_heads(y2d):
        return y2d.reshape(B, T, nh, hs).transpose(0, 2, 1, 3)   # (B, nh, T, hs)

    q = to_heads(qkv[:, :C])
    k = to_heads(qkv[:, C:2 * C])
    v = to_heads(qkv[:, 2 * C:])

    present = jnp.stack([k, v])                                  # (2, B, nh, T, hs) f32

    # RoPE on q/k (fuses with the head transpose above in XLA); v untouched.
    q_r = apply_rope(q)
    k_r = apply_rope(k)

    # permute q rows so each head's in-kernel output slab is a contiguous,
    # lane-dense (Tg, C) tile of the reference cat(dim=1).reshape(B,T,C) layout.
    q_p = q_r.reshape(B, nh, Tg, nG, hs).swapaxes(2, 3).reshape(B, nh, T, hs)

    wp, bp = params["proj"]
    y = na_attention_proj_pallas(
        q_p.astype(jnp.bfloat16),
        k_r.astype(jnp.bfloat16),
        v.astype(jnp.bfloat16),
        attn_bias_p,
        wp.T.astype(jnp.bfloat16),
        bp.reshape(1, C),
    )
    # attn_drop / resid_drop: identity (p = 0 / inference)
    return y, present


# ---------------- main ----------------
if __name__ == "__main__":
    B, T, C = 2, 128, BERT_N_EMB     # T >= max(kernel*dilation) = 7*16 = 112
    nh = BERT_N_HEAD
    hs = C // nh
    assert C % nh == 0 and nh % NUM_SPLITS == 0 and hs == ROTARY_DIM
    assert max(kk * dd for kk, dd in zip(KERNEL_SIZES, DILATIONS)) <= T

    root = jax.random.PRNGKey(0)
    kx, kp = jax.random.split(root)
    x = jax.random.normal(kx, (B, T, C), dtype=jnp.float32)
    params = init_params(kp, C)

    # per-head additive neighborhood bias (rows pre-permuted for the kernel)
    attn_bias_p = build_attn_bias(T, nh)

    fwd = jax.jit(hydra_na_forward)
    y, present = fwd(params, x, attn_bias_p)
    jax.block_until_ready(y)
    jax.block_until_ready(present)

    assert y.shape == (B, T, C)
    assert present.shape == (2, B, nh, T, hs)
    assert bool(jnp.all(jnp.isfinite(y)))
    print("KERNEL_OK")
</pallas_src>

<mosaic_0001>
module attributes {stable_mosaic.version = 11 : i64} {
  func.func @_linear_kernel(%arg0: i32, %arg1: memref<256x128xf32, #tpu.memory_space<vmem>>, %arg2: memref<128x384xbf16, #tpu.memory_space<vmem>>, %arg3: memref<1x384xf32, #tpu.memory_space<vmem>>, %arg4: memref<256x384xf32, #tpu.memory_space<vmem>>) attributes {dimension_semantics = [#tpu.dimension_semantics<parallel>], iteration_bounds = array<i64: 1>, scalar_prefetch = 0 : i64, scratch_operands = 0 : i64, tpu.core_type = #tpu.core_type<tc>, window_params = [{transform_indices = @transform_0, window_bounds = array<i64: 256, 128>}, {pipeline_mode = #tpu.pipeline_mode<synchronous>, transform_indices = @transform_1, window_bounds = array<i64: 128, 384>}, {pipeline_mode = #tpu.pipeline_mode<synchronous>, transform_indices = @transform_2, window_bounds = array<i64: 1, 384>}, {transform_indices = @transform_3, window_bounds = array<i64: 256, 384>}]} {
    %c0 = arith.constant 0 : index
    %c0_0 = arith.constant 0 : index
    %0 = vector.load %arg1[%c0, %c0_0] : memref<256x128xf32, #tpu.memory_space<vmem>>, vector<256x128xf32>
    %1 = arith.truncf %0 : vector<256x128xf32> to vector<256x128xbf16>
    %c0_1 = arith.constant 0 : index
    %c0_2 = arith.constant 0 : index
    %2 = vector.load %arg2[%c0_1, %c0_2] : memref<128x384xbf16, #tpu.memory_space<vmem>>, vector<128x384xbf16>
    %cst = arith.constant dense<0.000000e+00> : vector<256x384xf32>
    %3 = tpu.matmul %1, %2, %cst {dimension_numbers = #tpu.dot_dimension_numbers<[1], [0], [0], [1], [0, 0, 1, 1], [], []>} : vector<256x128xbf16>, vector<128x384xbf16>, vector<256x384xf32> -> vector<256x384xf32>
    %c0_3 = arith.constant 0 : index
    %c0_4 = arith.constant 0 : index
    %4 = vector.load %arg3[%c0_3, %c0_4] : memref<1x384xf32, #tpu.memory_space<vmem>>, vector<1x384xf32>
    %5 = vector.broadcast %4 : vector<1x384xf32> to vector<256x384xf32>
    %6 = arith.addf %3, %5 : vector<256x384xf32>
    %c0_5 = arith.constant 0 : index
    %c0_6 = arith.constant 0 : index
    %7 = vector.load %arg4[%c0_5, %c0_6] : memref<256x384xf32, #tpu.memory_space<vmem>>, vector<256x384xf32>
    tpu.vector_store %arg4[%c0_5, %c0_6], %6 {strides = array<i32>} : memref<256x384xf32, #tpu.memory_space<vmem>>, vector<256x384xf32>,
    return
  }
  func.func @transform_0(%arg0: i32) -> (i32, i32) {
    %c0_i32 = arith.constant 0 : i32
    %c0_i32_0 = arith.constant 0 : i32
    return %arg0, %c0_i32 : i32, i32
  }
  func.func @transform_1(%arg0: i32) -> (i32, i32) {
    %c0_i32 = arith.constant 0 : i32
    %c0_i32_0 = arith.constant 0 : i32
    %c0_i32_1 = arith.constant 0 : i32
    return %c0_i32, %c0_i32_0 : i32, i32
  }
  func.func @transform_2(%arg0: i32) -> (i32, i32) {
    %c0_i32 = arith.constant 0 : i32
    %c0_i32_0 = arith.constant 0 : i32
    %c0_i32_1 = arith.constant 0 : i32
    return %c0_i32, %c0_i32_0 : i32, i32
  }
  func.func @transform_3(%arg0: i32) -> (i32, i32) {
    %c0_i32 = arith.constant 0 : i32
    %c0_i32_0 = arith.constant 0 : i32
    return %arg0, %c0_i32 : i32, i32
  }
}

module attributes {stable_mosaic.version = 11 : i64} {
  func.func @_na_attn_proj_kernel(%arg0: i32, %arg1: memref<1x4x128x32xbf16, #tpu.memory_space<vmem>>, %arg2: memref<1x4x128x32xbf16, #tpu.memory_space<vmem>>, %arg3: memref<1x4x128x32xbf16, #tpu.memory_space<vmem>>, %arg4: memref<4x128x128xf32, #tpu.memory_space<vmem>>, %arg5: memref<128x128xbf16, #tpu.memory_space<vmem>>, %arg6: memref<1x128xf32, #tpu.memory_space<vmem>>, %arg7: memref<1x128x128xf32, #tpu.memory_space<vmem>>) attributes {dimension_semantics = [#tpu.dimension_semantics<parallel>], iteration_bounds = array<i64: 2>, scalar_prefetch = 0 : i64, scratch_operands = 0 : i64, tpu.core_type = #tpu.core_type<tc>, window_params = [{transform_indices = @transform_0, window_bounds = array<i64: 1, 4, 128, 32>}, {transform_indices = @transform_1, window_bounds = array<i64: 1, 4, 128, 32>}, {transform_indices = @transform_2, window_bounds = array<i64: 1, 4, 128, 32>}, {pipeline_mode = #tpu.pipeline_mode<synchronous>, transform_indices = @transform_3, window_bounds = array<i64: 4, 128, 128>}, {pipeline_mode = #tpu.pipeline_mode<synchronous>, transform_indices = @transform_4, window_bounds = array<i64: 128, 128>}, {pipeline_mode = #tpu.pipeline_mode<synchronous>, transform_indices = @transform_5, window_bounds = array<i64: 1, 128>}, {transform_indices = @transform_6, window_bounds = array<i64: 1, 128, 128>}]} {
    %c0 = arith.constant 0 : index
    %c0_0 = arith.constant 0 : index
    %0 = vector.load %arg6[%c0, %c0_0] : memref<1x128xf32, #tpu.memory_space<vmem>>, vector<1x128xf32>
    %c0_1 = arith.constant 0 : index
    %c0_2 = arith.constant 0 : index
    %c0_3 = arith.constant 0 : index
    %c0_4 = arith.constant 0 : index
    %1 = vector.load %arg1[%c0_1, %c0_2, %c0_3, %c0_4] : memref<1x4x128x32xbf16, #tpu.memory_space<vmem>>, vector<1x1x128x32xbf16>
    %2 = vector.shape_cast %1 : vector<1x1x128x32xbf16> to vector<128x32xbf16>
    %c0_5 = arith.constant 0 : index
    %c0_6 = arith.constant 0 : index
    %c0_7 = arith.constant 0 : index
    %c0_8 = arith.constant 0 : index
    %3 = vector.load %arg2[%c0_5, %c0_6, %c0_7, %c0_8] : memref<1x4x128x32xbf16, #tpu.memory_space<vmem>>, vector<1x1x128x32xbf16>
    %4 = vector.shape_cast %3 : vector<1x1x128x32xbf16> to vector<128x32xbf16>
    %c0_9 = arith.constant 0 : index
    %c0_10 = arith.constant 0 : index
    %c0_11 = arith.constant 0 : index
    %c0_12 = arith.constant 0 : index
    %5 = vector.load %arg3[%c0_9, %c0_10, %c0_11, %c0_12] : memref<1x4x128x32xbf16, #tpu.memory_space<vmem>>, vector<1x1x128x32xbf16>
    %6 = vector.shape_cast %5 : vector<1x1x128x32xbf16> to vector<128x32xbf16>
    %cst = arith.constant dense<0.000000e+00> : vector<128x128xf32>
    %7 = tpu.matmul %2, %4, %cst {dimension_numbers = #tpu.dot_dimension_numbers<[1], [1], [0], [0], [0, 0, 1, 0], [], []>} : vector<128x32xbf16>, vector<128x32xbf16>, vector<128x128xf32> -> vector<128x128xf32>
    %cst_13 = arith.constant 0.176776692 : f32
    %8 = vector.broadcast %cst_13 : f32 to vector<128x128xf32>
    %9 = arith.mulf %7, %8 : vector<128x128xf32>
    %c0_14 = arith.constant 0 : index
    %c0_15 = arith.constant 0 : index
    %c0_16 = arith.constant 0 : index
    %10 = vector.load %arg4[%c0_14, %c0_15, %c0_16] : memref<4x128x128xf32, #tpu.memory_space<vmem>>, vector<1x128x128xf32>
    %11 = vector.shape_cast %10 : vector<1x128x128xf32> to vector<128x128xf32>
    %12 = arith.addf %9, %11 : vector<128x128xf32>
    %cst_17 = arith.constant dense<0xFF800000> : vector<128xf32>
    %13 = vector.multi_reduction <maximumf>, %12, %cst_17 [1] : vector<128x128xf32> to vector<128xf32>
    %14 = vector.shape_cast %13 : vector<128xf32> to vector<128x1xf32>
    %15 = vector.broadcast %14 : vector<128x1xf32> to vector<128x128xf32>
    %16 = arith.subf %12, %15 : vector<128x128xf32>
    %17 = math.exp %16 : vector<128x128xf32>
    %cst_18 = arith.constant dense<0.000000e+00> : vector<128xf32>
    %18 = vector.multi_reduction <add>, %17, %cst_18 [1] : vector<128x128xf32> to vector<128xf32>
    %19 = vector.shape_cast %18 : vector<128xf32> to vector<128x1xf32>
    %20 = tpu.reciprocal %19 {approx = true} : vector<128x1xf32> -> vector<128x1xf32>
    %21 = vector.broadcast %20 : vector<128x1xf32> to vector<128x128xf32>
    %22 = arith.mulf %17, %21 : vector<128x128xf32>
    %23 = arith.truncf %22 : vector<128x128xf32> to vector<128x128xbf16>
    %cst_19 = arith.constant dense<0.000000e+00> : vector<128x32xf32>
    %24 = tpu.matmul %23, %6, %cst_19 {dimension_numbers = #tpu.dot_dimension_numbers<[1], [0], [0], [1], [0, 0, 1, 1], [], []>} : vector<128x128xbf16>, vector<128x32xbf16>, vector<128x32xf32> -> vector<128x32xf32>
    %25 = vector.extract_strided_slice %24 {offsets = [0, 0], sizes = [32, 32], strides = [1, 1]} : vector<128x32xf32> to vector<32x32xf32>
    %26 = arith.truncf %25 : vector<32x32xf32> to vector<32x32xbf16>
    %c0_20 = arith.constant 0 : index
    %c0_21 = arith.constant 0 : index
    %27 = vector.load %arg5[%c0_20, %c0_21] : memref<128x128xbf16, #tpu.memory_space<vmem>>, vector<32x128xbf16>
    %cst_22 = arith.constant dense<0.000000e+00> : vector<32x128xf32>
    %28 = tpu.matmul %26, %27, %cst_22 {dimension_numbers = #tpu.dot_dimension_numbers<[1], [0], [0], [1], [0, 0, 1, 1], [], []>} : vector<32x32xbf16>, vector<32x128xbf16>, vector<32x128xf32> -> vector<32x128xf32>
    %29 = vector.extract_strided_slice %24 {offsets = [32, 0], sizes = [32, 32], strides = [1, 1]} : vector<128x32xf32> to vector<32x32xf32>
    %30 = arith.truncf %29 : vector<32x32xf32> to vector<32x32xbf16>
    %c32 = arith.constant 32 : index
    %c0_23 = arith.constant 0 : index
    %31 = vector.load %arg5[%c32, %c0_23] : memref<128x128xbf16, #tpu.memory_space<vmem>>, vector<32x128xbf16>
    %cst_24 = arith.constant dense<0.000000e+00> : vector<32x128xf32>
    %32 = tpu.matmul %30, %31, %cst_24 {dimension_numbers = #tpu.dot_dimension_numbers<[1], [0], [0], [1], [0, 0, 1, 1], [], []>} : vector<32x32xbf16>, vector<32x128xbf16>, vector<32x128xf32> -> vector<32x128xf32>
    %33 = arith.addf %28, %32 : vector<32x128xf32>
    %34 = vector.extract_strided_slice %24 {offsets = [64, 0], sizes = [32, 32], strides = [1, 1]} : vector<128x32xf32> to vector<32x32xf32>
    %35 = arith.truncf %34 : vector<32x32xf32> to vector<32x32xbf16>
    %c64 = arith.constant 64 : index
    %c0_25 = arith.constant 0 : index
    %36 = vector.load %arg5[%c64, %c0_25] : memref<128x128xbf16, #tpu.memory_space<vmem>>, vector<32x128xbf16>
    %cst_26 = arith.constant dense<0.000000e+00> : vector<32x128xf32>
    %37 = tpu.matmul %35, %36, %cst_26 {dimension_numbers = #tpu.dot_dimension_numbers<[1], [0], [0], [1], [0, 0, 1, 1], [], []>} : vector<32x32xbf16>, vector<32x128xbf16>, vector<32x128xf32> -> vector<32x128xf32>
    %38 = arith.addf %33, %37 : vector<32x128xf32>
    %39 = vector.extract_strided_slice %24 {offsets = [96, 0], sizes = [32, 32], strides = [1, 1]} : vector<128x32xf32> to vector<32x32xf32>
    %40 = arith.truncf %39 : vector<32x32xf32> to vector<32x32xbf16>
    %c96 = arith.constant 96 : index
    %c0_27 = arith.constant 0 : index
    %41 = vector.load %arg5[%c96, %c0_27] : memref<128x128xbf16, #tpu.memory_space<vmem>>, vector<32x128xbf16>
    %cst_28 = arith.constant dense<0.000000e+00> : vector<32x128xf32>
    %42 = tpu.matmul %40, %41, %cst_28 {dimension_numbers = #tpu.dot_dimension_numbers<[1], [0], [0], [1], [0, 0, 1, 1], [], []>} : vector<32x32xbf16>, vector<32x128xbf16>, vector<32x128xf32> -> vector<32x128xf32>
    %43 = arith.addf %38, %42 : vector<32x128xf32>
    %44 = vector.broadcast %0 : vector<1x128xf32> to vector<32x128xf32>
    %45 = arith.addf %43, %44 : vector<32x128xf32>
    %c0_29 = arith.constant 0 : index
    %c0_30 = arith.constant 0 : index
    %c0_31 = arith.constant 0 : index
    %46 = vector.load %arg7[%c0_29, %c0_30, %c0_31] : memref<1x128x128xf32, #tpu.memory_space<vmem>>, vector<1x32x128xf32>
    %47 = vector.shape_cast %46 : vector<1x32x128xf32> to vector<32x128xf32>
    %48 = vector.shape_cast %45 : vector<32x128xf32> to vector<1x32x128xf32>
    tpu.vector_store %arg7[%c0_29, %c0_30, %c0_31], %48 {strides = array<i32>} : memref<1x128x128xf32, #tpu.memory_space<vmem>>, vector<1x32x128xf32>,
    %c0_32 = arith.constant 0 : index
    %c1 = arith.constant 1 : index
    %c0_33 = arith.constant 0 : index
    %c0_34 = arith.constant 0 : index
    %49 = vector.load %arg1[%c0_32, %c1, %c0_33, %c0_34] : memref<1x4x128x32xbf16, #tpu.memory_space<vmem>>, vector<1x1x128x32xbf16>
    %50 = vector.shape_cast %49 : vector<1x1x128x32xbf16> to vector<128x32xbf16>
    %c0_35 = arith.constant 0 : index
    %c1_36 = arith.constant 1 : index
    %c0_37 = arith.constant 0 : index
    %c0_38 = arith.constant 0 : index
    %51 = vector.load %arg2[%c0_35, %c1_36, %c0_37, %c0_38] : memref<1x4x128x32xbf16, #tpu.memory_space<vmem>>, vector<1x1x128x32xbf16>
    %52 = vector.shape_cast %51 : vector<1x1x128x32xbf16> to vector<128x32xbf16>
    %c0_39 = arith.constant 0 : index
    %c1_40 = arith.constant 1 : index
    %c0_41 = arith.constant 0 : index
    %c0_42 = arith.constant 0 : index
    %53 = vector.load %arg3[%c0_39, %c1_40, %c0_41, %c0_42] : memref<1x4x128x32xbf16, #tpu.memory_space<vmem>>, vector<1x1x128x32xbf16>
    %54 = vector.shape_cast %53 : vector<1x1x128x32xbf16> to vector<128x32xbf16>
    %cst_43 = arith.constant dense<0.000000e+00> : vector<128x128xf32>
    %55 = tpu.matmul %50, %52, %cst_43 {dimension_numbers = #tpu.dot_dimension_numbers<[1], [1], [0], [0], [0, 0, 1, 0], [], []>} : vector<128x32xbf16>, vector<128x32xbf16>, vector<128x128xf32> -> vector<128x128xf32>
    %cst_44 = arith.constant 0.176776692 : f32
    %56 = vector.broadcast %cst_44 : f32 to vector<128x128xf32>
    %57 = arith.mulf %55, %56 : vector<128x128xf32>
    %c1_45 = arith.constant 1 : index
    %c0_46 = arith.constant 0 : index
    %c0_47 = arith.constant 0 : index
    %58 = vector.load %arg4[%c1_45, %c0_46, %c0_47] : memref<4x128x128xf32, #tpu.memory_space<vmem>>, vector<1x128x128xf32>
    %59 = vector.shape_cast %58 : vector<1x128x128xf32> to vector<128x128xf32>
    %60 = arith.addf %57, %59 : vector<128x128xf32>
    %cst_48 = arith.constant dense<0xFF800000> : vector<128xf32>
    %61 = vector.multi_reduction <maximumf>, %60, %cst_48 [1] : vector<128x128xf32> to vector<128xf32>
    %62 = vector.shape_cast %61 : vector<128xf32> to vector<128x1xf32>
    %63 = vector.broadcast %62 : vector<128x1xf32> to vector<128x128xf32>
    %64 = arith.subf %60, %63 : vector<128x128xf32>
    %65 = math.exp %64 : vector<128x128xf32>
    %cst_49 = arith.constant dense<0.000000e+00> : vector<128xf32>
    %66 = vector.multi_reduction <add>, %65, %cst_49 [1] : vector<128x128xf32> to vector<128xf32>
    %67 = vector.shape_cast %66 : vector<128xf32> to vector<128x1xf32>
    %68 = tpu.reciprocal %67 {approx = true} : vector<128x1xf32> -> vector<128x1xf32>
    %69 = vector.broadcast %68 : vector<128x1xf32> to vector<128x128xf32>
    %70 = arith.mulf %65, %69 : vector<128x128xf32>
    %71 = arith.truncf %70 : vector<128x128xf32> to vector<128x128xbf16>
    %cst_50 = arith.constant dense<0.000000e+00> : vector<128x32xf32>
    %72 = tpu.matmul %71, %54, %cst_50 {dimension_numbers = #tpu.dot_dimension_numbers<[1], [0], [0], [1], [0, 0, 1, 1], [], []>} : vector<128x128xbf16>, vector<128x32xbf16>, vector<128x32xf32> -> vector<128x32xf32>
    %73 = vector.extract_strided_slice %72 {offsets = [0, 0], sizes = [32, 32], strides = [1, 1]} : vector<128x32xf32> to vector<32x32xf32>
    %74 = arith.truncf %73 : vector<32x32xf32> to vector<32x32xbf16>
    %c0_51 = arith.constant 0 : index
    %c0_52 = arith.constant 0 : index
    %75 = vector.load %arg5[%c0_51, %c0_52] : memref<128x128xbf16, #tpu.memory_space<vmem>>, vector<32x128xbf16>
    %cst_53 = arith.constant dense<0.000000e+00> : vector<32x128xf32>
    %76 = tpu.matmul %74, %75, %cst_53 {dimension_numbers = #tpu.dot_dimension_numbers<[1], [0], [0], [1], [0, 0, 1, 1], [], []>} : vector<32x32xbf16>, vector<32x128xbf16>, vector<32x128xf32> -> vector<32x128xf32>
    %77 = vector.extract_strided_slice %72 {offsets = [32, 0], sizes = [32, 32], strides = [1, 1]} : vector<128x32xf32> to vector<32x32xf32>
    %78 = arith.truncf %77 : vector<32x32xf32> to vector<32x32xbf16>
    %c32_54 = arith.constant 32 : index
    %c0_55 = arith.constant 0 : index
    %79 = vector.load %arg5[%c32_54, %c0_55] : memref<128x128xbf16, #tpu.memory_space<vmem>>, vector<32x128xbf16>
    %cst_56 = arith.constant dense<0.000000e+00> : vector<32x128xf32>
    %80 = tpu.matmul %78, %79, %cst_56 {dimension_numbers = #tpu.dot_dimension_numbers<[1], [0], [0], [1], [0, 0, 1, 1], [], []>} : vector<32x32xbf16>, vector<32x128xbf16>, vector<32x128xf32> -> vector<32x128xf32>
    %81 = arith.addf %76, %80 : vector<32x128xf32>
    %82 = vector.extract_strided_slice %72 {offsets = [64, 0], sizes = [32, 32], strides = [1, 1]} : vector<128x32xf32> to vector<32x32xf32>
    %83 = arith.truncf %82 : vector<32x32xf32> to vector<32x32xbf16>
    %c64_57 = arith.constant 64 : index
    %c0_58 = arith.constant 0 : index
    %84 = vector.load %arg5[%c64_57, %c0_58] : memref<128x128xbf16, #tpu.memory_space<vmem>>, vector<32x128xbf16>
    %cst_59 = arith.constant dense<0.000000e+00> : vector<32x128xf32>
    %85 = tpu.matmul %83, %84, %cst_59 {dimension_numbers = #tpu.dot_dimension_numbers<[1], [0], [0], [1], [0, 0, 1, 1], [], []>} : vector<32x32xbf16>, vector<32x128xbf16>, vector<32x128xf32> -> vector<32x128xf32>
    %86 = arith.addf %81, %85 : vector<32x128xf32>
    %87 = vector.extract_strided_slice %72 {offsets = [96, 0], sizes = [32, 32], strides = [1, 1]} : vector<128x32xf32> to vector<32x32xf32>
    %88 = arith.truncf %87 : vector<32x32xf32> to vector<32x32xbf16>
    %c96_60 = arith.constant 96 : index
    %c0_61 = arith.constant 0 : index
    %89 = vector.load %arg5[%c96_60, %c0_61] : memref<128x128xbf16, #tpu.memory_space<vmem>>, vector<32x128xbf16>
    %cst_62 = arith.constant dense<0.000000e+00> : vector<32x128xf32>
    %90 = tpu.matmul %88, %89, %cst_62 {dimension_numbers = #tpu.dot_dimension_numbers<[1], [0], [0], [1], [0, 0, 1, 1], [], []>} : vector<32x32xbf16>, vector<32x128xbf16>, vector<32x128xf32> -> vector<32x128xf32>
    %91 = arith.addf %86, %90 : vector<32x128xf32>
    %92 = vector.broadcast %0 : vector<1x128xf32> to vector<32x128xf32>
    %93 = arith.addf %91, %92 : vector<32x128xf32>
    %c0_63 = arith.constant 0 : index
    %c32_64 = arith.constant 32 : index
    %c0_65 = arith.constant 0 : index
    %94 = vector.load %arg7[%c0_63, %c32_64, %c0_65] : memref<1x128x128xf32, #tpu.memory_space<vmem>>, vector<1x32x128xf32>
    %95 = vector.shape_cast %94 : vector<1x32x128xf32> to vector<32x128xf32>
    %96 = vector.shape_cast %93 : vector<32x128xf32> to vector<1x32x128xf32>
    tpu.vector_store %arg7[%c0_63, %c32_64, %c0_65], %96 {strides = array<i32>} : memref<1x128x128xf32, #tpu.memory_space<vmem>>, vector<1x32x128xf32>,
    %c0_66 = arith.constant 0 : index
    %c2 = arith.constant 2 : index
    %c0_67 = arith.constant 0 : index
    %c0_68 = arith.constant 0 : index
    %97 = vector.load %arg1[%c0_66, %c2, %c0_67, %c0_68] : memref<1x4x128x32xbf16, #tpu.memory_space<vmem>>, vector<1x1x128x32xbf16>
    %98 = vector.shape_cast %97 : vector<1x1x128x32xbf16> to vector<128x32xbf16>
    %c0_69 = arith.constant 0 : index
    %c2_70 = arith.constant 2 : index
    %c0_71 = arith.constant 0 : index
    %c0_72 = arith.constant 0 : index
    %99 = vector.load %arg2[%c0_69, %c2_70, %c0_71, %c0_72] : memref<1x4x128x32xbf16, #tpu.memory_space<vmem>>, vector<1x1x128x32xbf16>
    %100 = vector.shape_cast %99 : vector<1x1x128x32xbf16> to vector<128x32xbf16>
    %c0_73 = arith.constant 0 : index
    %c2_74 = arith.constant 2 : index
    %c0_75 = arith.constant 0 : index
    %c0_76 = arith.constant 0 : index
    %101 = vector.load %arg3[%c0_73, %c2_74, %c0_75, %c0_76] : memref<1x4x128x32xbf16, #tpu.memory_space<vmem>>, vector<1x1x128x32xbf16>
    %102 = vector.shape_cast %101 : vector<1x1x128x32xbf16> to vector<128x32xbf16>
    %cst_77 = arith.constant dense<0.000000e+00> : vector<128x128xf32>
    %103 = tpu.matmul %98, %100, %cst_77 {dimension_numbers = #tpu.dot_dimension_numbers<[1], [1], [0], [0], [0, 0, 1, 0], [], []>} : vector<128x32xbf16>, vector<128x32xbf16>, vector<128x128xf32> -> vector<128x128xf32>
    %cst_78 = arith.constant 0.176776692 : f32
    %104 = vector.broadcast %cst_78 : f32 to vector<128x128xf32>
    %105 = arith.mulf %103, %104 : vector<128x128xf32>
    %c2_79 = arith.constant 2 : index
    %c0_80 = arith.constant 0 : index
    %c0_81 = arith.constant 0 : index
    %106 = vector.load %arg4[%c2_79, %c0_80, %c0_81] : memref<4x128x128xf32, #tpu.memory_space<vmem>>, vector<1x128x128xf32>
    %107 = vector.shape_cast %106 : vector<1x128x128xf32> to vector<128x128xf32>
    %108 = arith.addf %105, %107 : vector<128x128xf32>
    %cst_82 = arith.constant dense<0xFF800000> : vector<128xf32>
    %109 = vector.multi_reduction <maximumf>, %108, %cst_82 [1] : vector<128x128xf32> to vector<128xf32>
    %110 = vector.shape_cast %109 : vector<128xf32> to vector<128x1xf32>
    %111 = vector.broadcast %110 : vector<128x1xf32> to vector<128x128xf32>
    %112 = arith.subf %108, %111 : vector<128x128xf32>
    %113 = math.exp %112 : vector<128x128xf32>
    %cst_83 = arith.constant dense<0.000000e+00> : vector<128xf32>
    %114 = vector.multi_reduction <add>, %113, %cst_83 [1] : vector<128x128xf32> to vector<128xf32>
    %115 = vector.shape_cast %114 : vector<128xf32> to vector<128x1xf32>
    %116 = tpu.reciprocal %115 {approx = true} : vector<128x1xf32> -> vector<128x1xf32>
    %117 = vector.broadcast %116 : vector<128x1xf32> to vector<128x128xf32>
    %118 = arith.mulf %113, %117 : vector<128x128xf32>
    %119 = arith.truncf %118 : vector<128x128xf32> to vector<128x128xbf16>
    %cst_84 = arith.constant dense<0.000000e+00> : vector<128x32xf32>
    %120 = tpu.matmul %119, %102, %cst_84 {dimension_numbers = #tpu.dot_dimension_numbers<[1], [0], [0], [1], [0, 0, 1, 1], [], []>} : vector<128x128xbf16>, vector<128x32xbf16>, vector<128x32xf32> -> vector<128x32xf32>
    %121 = vector.extract_strided_slice %120 {offsets = [0, 0], sizes = [32, 32], strides = [1, 1]} : vector<128x32xf32> to vector<32x32xf32>
    %122 = arith.truncf %121 : vector<32x32xf32> to vector<32x32xbf16>
    %c0_85 = arith.constant 0 : index
    %c0_86 = arith.constant 0 : index
    %123 = vector.load %arg5[%c0_85, %c0_86] : memref<128x128xbf16, #tpu.memory_space<vmem>>, vector<32x128xbf16>
    %cst_87 = arith.constant dense<0.000000e+00> : vector<32x128xf32>
    %124 = tpu.matmul %122, %123, %cst_87 {dimension_numbers = #tpu.dot_dimension_numbers<[1], [0], [0], [1], [0, 0, 1, 1], [], []>} : vector<32x32xbf16>, vector<32x128xbf16>, vector<32x128xf32> -> vector<32x128xf32>
    %125 = vector.extract_strided_slice %120 {offsets = [32, 0], sizes = [32, 32], strides = [1, 1]} : vector<128x32xf32> to vector<32x32xf32>
    %126 = arith.truncf %125 : vector<32x32xf32> to vector<32x32xbf16>
    %c32_88 = arith.constant 32 : index
    %c0_89 = arith.constant 0 : index
    %127 = vector.load %arg5[%c32_88, %c0_89] : memref<128x128xbf16, #tpu.memory_space<vmem>>, vector<32x128xbf16>
    %cst_90 = arith.constant dense<0.000000e+00> : vector<32x128xf32>
    %128 = tpu.matmul %126, %127, %cst_90 {dimension_numbers = #tpu.dot_dimension_numbers<[1], [0], [0], [1], [0, 0, 1, 1], [], []>} : vector<32x32xbf16>, vector<32x128xbf16>, vector<32x128xf32> -> vector<32x128xf32>
    %129 = arith.addf %124, %128 : vector<32x128xf32>
    %130 = vector.extract_strided_slice %120 {offsets = [64, 0], sizes = [32, 32], strides = [1, 1]} : vector<128x32xf32> to vector<32x32xf32>
    %131 = arith.truncf %130 : vector<32x32xf32> to vector<32x32xbf16>
    %c64_91 = arith.constant 64 : index
    %c0_92 = arith.constant 0 : index
    %132 = vector.load %arg5[%c64_91, %c0_92] : memref<128x128xbf16, #tpu.memory_space<vmem>>, vector<32x128xbf16>
    %cst_93 = arith.constant dense<0.000000e+00> : vector<32x128xf32>
    %133 = tpu.matmul %131, %132, %cst_93 {dimension_numbers = #tpu.dot_dimension_numbers<[1], [0], [0], [1], [0, 0, 1, 1], [], []>} : vector<32x32xbf16>, vector<32x128xbf16>, vector<32x128xf32> -> vector<32x128xf32>
    %134 = arith.addf %129, %133 : vector<32x128xf32>
    %135 = vector.extract_strided_slice %120 {offsets = [96, 0], sizes = [32, 32], strides = [1, 1]} : vector<128x32xf32> to vector<32x32xf32>
    %136 = arith.truncf %135 : vector<32x32xf32> to vector<32x32xbf16>
    %c96_94 = arith.constant 96 : index
    %c0_95 = arith.constant 0 : index
    %137 = vector.load %arg5[%c96_94, %c0_95] : memref<128x128xbf16, #tpu.memory_space<vmem>>, vector<32x128xbf16>
    %cst_96 = arith.constant dense<0.000000e+00> : vector<32x128xf32>
    %138 = tpu.matmul %136, %137, %cst_96 {dimension_numbers = #tpu.dot_dimension_numbers<[1], [0], [0], [1], [0, 0, 1, 1], [], []>} : vector<32x32xbf16>, vector<32x128xbf16>, vector<32x128xf32> -> vector<32x128xf32>
    %139 = arith.addf %134, %138 : vector<32x128xf32>
    %140 = vector.broadcast %0 : vector<1x128xf32> to vector<32x128xf32>
    %141 = arith.addf %139, %140 : vector<32x128xf32>
    %c0_97 = arith.constant 0 : index
    %c64_98 = arith.constant 64 : index
    %c0_99 = arith.constant 0 : index
    %142 = vector.load %arg7[%c0_97, %c64_98, %c0_99] : memref<1x128x128xf32, #tpu.memory_space<vmem>>, vector<1x32x128xf32>
    %143 = vector.shape_cast %142 : vector<1x32x128xf32> to vector<32x128xf32>
    %144 = vector.shape_cast %141 : vector<32x128xf32> to vector<1x32x128xf32>
    tpu.vector_store %arg7[%c0_97, %c64_98, %c0_99], %144 {strides = array<i32>} : memref<1x128x128xf32, #tpu.memory_space<vmem>>, vector<1x32x128xf32>,
    %c0_100 = arith.constant 0 : index
    %c3 = arith.constant 3 : index
    %c0_101 = arith.constant 0 : index
    %c0_102 = arith.constant 0 : index
    %145 = vector.load %arg1[%c0_100, %c3, %c0_101, %c0_102] : memref<1x4x128x32xbf16, #tpu.memory_space<vmem>>, vector<1x1x128x32xbf16>
    %146 = vector.shape_cast %145 : vector<1x1x128x32xbf16> to vector<128x32xbf16>
    %c0_103 = arith.constant 0 : index
    %c3_104 = arith.constant 3 : index
    %c0_105 = arith.constant 0 : index
    %c0_106 = arith.constant 0 : index
    %147 = vector.load %arg2[%c0_103, %c3_104, %c0_105, %c0_106] : memref<1x4x128x32xbf16, #tpu.memory_space<vmem>>, vector<1x1x128x32xbf16>
    %148 = vector.shape_cast %147 : vector<1x1x128x32xbf16> to vector<128x32xbf16>
    %c0_107 = arith.constant 0 : index
    %c3_108 = arith.constant 3 : index
    %c0_109 = arith.constant 0 : index
    %c0_110 = arith.constant 0 : index
    %149 = vector.load %arg3[%c0_107, %c3_108, %c0_109, %c0_110] : memref<1x4x128x32xbf16, #tpu.memory_space<vmem>>, vector<1x1x128x32xbf16>
    %150 = vector.shape_cast %149 : vector<1x1x128x32xbf16> to vector<128x32xbf16>
    %cst_111 = arith.constant dense<0.000000e+00> : vector<128x128xf32>
    %151 = tpu.matmul %146, %148, %cst_111 {dimension_numbers = #tpu.dot_dimension_numbers<[1], [1], [0], [0], [0, 0, 1, 0], [], []>} : vector<128x32xbf16>, vector<128x32xbf16>, vector<128x128xf32> -> vector<128x128xf32>
    %cst_112 = arith.constant 0.176776692 : f32
    %152 = vector.broadcast %cst_112 : f32 to vector<128x128xf32>
    %153 = arith.mulf %151, %152 : vector<128x128xf32>
    %c3_113 = arith.constant 3 : index
    %c0_114 = arith.constant 0 : index
    %c0_115 = arith.constant 0 : index
    %154 = vector.load %arg4[%c3_113, %c0_114, %c0_115] : memref<4x128x128xf32, #tpu.memory_space<vmem>>, vector<1x128x128xf32>
    %155 = vector.shape_cast %154 : vector<1x128x128xf32> to vector<128x128xf32>
    %156 = arith.addf %153, %155 : vector<128x128xf32>
    %cst_116 = arith.constant dense<0xFF800000> : vector<128xf32>
    %157 = vector.multi_reduction <maximumf>, %156, %cst_116 [1] : vector<128x128xf32> to vector<128xf32>
    %158 = vector.shape_cast %157 : vector<128xf32> to vector<128x1xf32>
    %159 = vector.broadcast %158 : vector<128x1xf32> to vector<128x128xf32>
    %160 = arith.subf %156, %159 : vector<128x128xf32>
    %161 = math.exp %160 : vector<128x128xf32>
    %cst_117 = arith.constant dense<0.000000e+00> : vector<128xf32>
    %162 = vector.multi_reduction <add>, %161, %cst_117 [1] : vector<128x128xf32> to vector<128xf32>
    %163 = vector.shape_cast %162 : vector<128xf32> to vector<128x1xf32>
    %164 = tpu.reciprocal %163 {approx = true} : vector<128x1xf32> -> vector<128x1xf32>
    %165 = vector.broadcast %164 : vector<128x1xf32> to vector<128x128xf32>
    %166 = arith.mulf %161, %165 : vector<128x128xf32>
    %167 = arith.truncf %166 : vector<128x128xf32> to vector<128x128xbf16>
    %cst_118 = arith.constant dense<0.000000e+00> : vector<128x32xf32>
    %168 = tpu.matmul %167, %150, %cst_118 {dimension_numbers = #tpu.dot_dimension_numbers<[1], [0], [0], [1], [0, 0, 1, 1], [], []>} : vector<128x128xbf16>, vector<128x32xbf16>, vector<128x32xf32> -> vector<128x32xf32>
    %169 = vector.extract_strided_slice %168 {offsets = [0, 0], sizes = [32, 32], strides = [1, 1]} : vector<128x32xf32> to vector<32x32xf32>
    %170 = arith.truncf %169 : vector<32x32xf32> to vector<32x32xbf16>
    %c0_119 = arith.constant 0 : index
    %c0_120 = arith.constant 0 : index
    %171 = vector.load %arg5[%c0_119, %c0_120] : memref<128x128xbf16, #tpu.memory_space<vmem>>, vector<32x128xbf16>
    %cst_121 = arith.constant dense<0.000000e+00> : vector<32x128xf32>
    %172 = tpu.matmul %170, %171, %cst_121 {dimension_numbers = #tpu.dot_dimension_numbers<[1], [0], [0], [1], [0, 0, 1, 1], [], []>} : vector<32x32xbf16>, vector<32x128xbf16>, vector<32x128xf32> -> vector<32x128xf32>
    %173 = vector.extract_strided_slice %168 {offsets = [32, 0], sizes = [32, 32], strides = [1, 1]} : vector<128x32xf32> to vector<32x32xf32>
    %174 = arith.truncf %173 : vector<32x32xf32> to vector<32x32xbf16>
    %c32_122 = arith.constant 32 : index
    %c0_123 = arith.constant 0 : index
    %175 = vector.load %arg5[%c32_122, %c0_123] : memref<128x128xbf16, #tpu.memory_space<vmem>>, vector<32x128xbf16>
    %cst_124 = arith.constant dense<0.000000e+00> : vector<32x128xf32>
    %176 = tpu.matmul %174, %175, %cst_124 {dimension_numbers = #tpu.dot_dimension_numbers<[1], [0], [0], [1], [0, 0, 1, 1], [], []>} : vector<32x32xbf16>, vector<32x128xbf16>, vector<32x128xf32> -> vector<32x128xf32>
    %177 = arith.addf %172, %176 : vector<32x128xf32>
    %178 = vector.extract_strided_slice %168 {offsets = [64, 0], sizes = [32, 32], strides = [1, 1]} : vector<128x32xf32> to vector<32x32xf32>
    %179 = arith.truncf %178 : vector<32x32xf32> to vector<32x32xbf16>
    %c64_125 = arith.constant 64 : index
    %c0_126 = arith.constant 0 : index
    %180 = vector.load %arg5[%c64_125, %c0_126] : memref<128x128xbf16, #tpu.memory_space<vmem>>, vector<32x128xbf16>
    %cst_127 = arith.constant dense<0.000000e+00> : vector<32x128xf32>
    %181 = tpu.matmul %179, %180, %cst_127 {dimension_numbers = #tpu.dot_dimension_numbers<[1], [0], [0], [1], [0, 0, 1, 1], [], []>} : vector<32x32xbf16>, vector<32x128xbf16>, vector<32x128xf32> -> vector<32x128xf32>
    %182 = arith.addf %177, %181 : vector<32x128xf32>
    %183 = vector.extract_strided_slice %168 {offsets = [96, 0], sizes = [32, 32], strides = [1, 1]} : vector<128x32xf32> to vector<32x32xf32>
    %184 = arith.truncf %183 : vector<32x32xf32> to vector<32x32xbf16>
    %c96_128 = arith.constant 96 : index
    %c0_129 = arith.constant 0 : index
    %185 = vector.load %arg5[%c96_128, %c0_129] : memref<128x128xbf16, #tpu.memory_space<vmem>>, vector<32x128xbf16>
    %cst_130 = arith.constant dense<0.000000e+00> : vector<32x128xf32>
    %186 = tpu.matmul %184, %185, %cst_130 {dimension_numbers = #tpu.dot_dimension_numbers<[1], [0], [0], [1], [0, 0, 1, 1], [], []>} : vector<32x32xbf16>, vector<32x128xbf16>, vector<32x128xf32> -> vector<32x128xf32>
    %187 = arith.addf %182, %186 : vector<32x128xf32>
    %188 = vector.broadcast %0 : vector<1x128xf32> to vector<32x128xf32>
    %189 = arith.addf %187, %188 : vector<32x128xf32>
    %c0_131 = arith.constant 0 : index
    %c96_132 = arith.constant 96 : index
    %c0_133 = arith.constant 0 : index
    %190 = vector.load %arg7[%c0_131, %c96_132, %c0_133] : memref<1x128x128xf32, #tpu.memory_space<vmem>>, vector<1x32x128xf32>
    %191 = vector.shape_cast %190 : vector<1x32x128xf32> to vector<32x128xf32>
    %192 = vector.shape_cast %189 : vector<32x128xf32> to vector<1x32x128xf32>
    tpu.vector_store %arg7[%c0_131, %c96_132, %c0_133], %192 {strides = array<i32>} : memref<1x128x128xf32, #tpu.memory_space<vmem>>, vector<1x32x128xf32>,
    return
  }
  func.func @transform_0(%arg0: i32) -> (i32, i32, i32, i32) {
    %c0_i32 = arith.constant 0 : i32
    %c0_i32_0 = arith.constant 0 : i32
    %c0_i32_1 = arith.constant 0 : i32
    %c0_i32_2 = arith.constant 0 : i32
    return %arg0, %c0_i32, %c0_i32_0, %c0_i32_1 : i32, i32, i32, i32
  }
  func.func @transform_1(%arg0: i32) -> (i32, i32, i32, i32) {
    %c0_i32 = arith.constant 0 : i32
    %c0_i32_0 = arith.constant 0 : i32
    %c0_i32_1 = arith.constant 0 : i32
    %c0_i32_2 = arith.constant 0 : i32
    return %arg0, %c0_i32, %c0_i32_0, %c0_i32_1 : i32, i32, i32, i32
  }
  func.func @transform_2(%arg0: i32) -> (i32, i32, i32, i32) {
    %c0_i32 = arith.constant 0 : i32
    %c0_i32_0 = arith.constant 0 : i32
    %c0_i32_1 = arith.constant 0 : i32
    %c0_i32_2 = arith.constant 0 : i32
    return %arg0, %c0_i32, %c0_i32_0, %c0_i32_1 : i32, i32, i32, i32
  }
  func.func @transform_3(%arg0: i32) -> (i32, i32, i32) {
    %c0_i32 = arith.constant 0 : i32
    %c0_i32_0 = arith.constant 0 : i32
    %c0_i32_1 = arith.constant 0 : i32
    %c0_i32_2 = arith.constant 0 : i32
    return %c0_i32, %c0_i32_0, %c0_i32_1 : i32, i32, i32
  }
  func.func @transform_4(%arg0: i32) -> (i32, i32) {
    %c0_i32 = arith.constant 0 : i32
    %c0_i32_0 = arith.constant 0 : i32
    %c0_i32_1 = arith.constant 0 : i32
    return %c0_i32, %c0_i32_0 : i32, i32
  }
  func.func @transform_5(%arg0: i32) -> (i32, i32) {
    %c0_i32 = arith.constant 0 : i32
    %c0_i32_0 = arith.constant 0 : i32
    %c0_i32_1 = arith.constant 0 : i32
    return %c0_i32, %c0_i32_0 : i32, i32
  }
  func.func @transform_6(%arg0: i32) -> (i32, i32, i32) {
    %c0_i32 = arith.constant 0 : i32
    %c0_i32_0 = arith.constant 0 : i32
    %c0_i32_1 = arith.constant 0 : i32
    return %arg0, %c0_i32, %c0_i32_0 : i32, i32, i32
  }
}

</mosaic_0001>

<llo_original>
// kernel: hydra_na_forward.2
$region0: #{hydra_na_forward.2}
  #allocation0 [shape = 'u32[]', space=smem, size = 0x4, offset = 0x4, fixed_abs, tag = 'smem constant byte address 0x4 - core index']
  #allocation1 [shape = 'u32[72,128]{1,0:T(1,128)}', space=vmem, size = 0x9000, scoped, tag = 'internal scratch']
  %s0 = inlined_call_operand.vmem [shape: f32[256,128], index: 0, kind: input, shape index: {}]
  %s1 = inlined_call_operand.vmem [shape: bf16[128,384], index: 1, kind: input, shape index: {}]
  %s2 = inlined_call_operand.vmem [shape: f32[1,384], index: 2, kind: input, shape index: {}]
  %s3 = inlined_call_operand.vmem [shape: f32[256,384], index: 3, kind: output, shape index: {}]
  %s4 = sld [smem:[#allocation0]]
  $region22: #{hydra_na_forward.2} parent=0
    _
  %s6 = ssub.s32 1, %s4
  %s7 = scalar_select 0, %s6, %s4
  // Predicated region
  $region2: #{hydra_na_forward.2} parent=0 // pred_check
    _
  $region3: #{hydra_na_forward.2} parent=0 // pred_check_branch
    %9 = sbr.rel (0) target = $region5
  $region4: #{hydra_na_forward.2} parent=0 // pred_region
    _
  $region5: #{hydra_na_forward.2} parent=0 // pred_fallthru
    _
  // Predicated region
  $region6: #{hydra_na_forward.2} parent=0 // pred_check
    _
  $region7: #{hydra_na_forward.2} parent=0 // pred_check_branch
    %11 = sbr.rel (0) target = $region9
  $region8: #{hydra_na_forward.2} parent=0 // pred_region
    _
  $region9: #{hydra_na_forward.2} parent=0 // pred_fallthru
    _
  // Predicated region
  $region10: #{hydra_na_forward.2} parent=0 // pred_check
    _
  $region11: #{hydra_na_forward.2} parent=0 // pred_check_branch
    %13 = sbr.rel (0) target = $region13
  $region12: #{hydra_na_forward.2} parent=0 // pred_region
    _
  $region13: #{hydra_na_forward.2} parent=0 // pred_fallthru
    _
  %v14 = vld [vmem:[%s0] sm:$0xff]
  %v15 = vld [vmem:[%s0 + $0x8] sm:$0xff]
  %v16 = vld [vmem:[%s0 + $0x10] sm:$0xff]
  %v17 = vld [vmem:[%s0 + $0x18] sm:$0xff]
  %v18 = vld [vmem:[%s0 + $0x20] sm:$0xff]
  %v19 = vld [vmem:[%s0 + $0x28] sm:$0xff]
  %v20 = vld [vmem:[%s0 + $0x30] sm:$0xff]
  %v21 = vld [vmem:[%s0 + $0x38] sm:$0xff]
  %v22 = vld [vmem:[%s0 + $0x40] sm:$0xff]
  %v23 = vld [vmem:[%s0 + $0x48] sm:$0xff]
  %v24 = vld [vmem:[%s0 + $0x50] sm:$0xff]
  %v25 = vld [vmem:[%s0 + $0x58] sm:$0xff]
  %v26 = vld [vmem:[%s0 + $0x60] sm:$0xff]
  %v27 = vld [vmem:[%s0 + $0x68] sm:$0xff]
  %v28 = vld [vmem:[%s0 + $0x70] sm:$0xff]
  %v29 = vld [vmem:[%s0 + $0x78] sm:$0xff]
  %v30 = vld [vmem:[%s0 + $0x80] sm:$0xff]
  %v31 = vld [vmem:[%s0 + $0x88] sm:$0xff]
  %v32 = vld [vmem:[%s0 + $0x90] sm:$0xff]
  %v33 = vld [vmem:[%s0 + $0x98] sm:$0xff]
  %v34 = vld [vmem:[%s0 + $0xa0] sm:$0xff]
  %v35 = vld [vmem:[%s0 + $0xa8] sm:$0xff]
  %v36 = vld [vmem:[%s0 + $0xb0] sm:$0xff]
  %v37 = vld [vmem:[%s0 + $0xb8] sm:$0xff]
  %v38 = vld [vmem:[%s0 + $0xc0] sm:$0xff]
  %v39 = vld [vmem:[%s0 + $0xc8] sm:$0xff]
  %v40 = vld [vmem:[%s0 + $0xd0] sm:$0xff]
  %v41 = vld [vmem:[%s0 + $0xd8] sm:$0xff]
  %v42 = vld [vmem:[%s0 + $0xe0] sm:$0xff]
  %v43 = vld [vmem:[%s0 + $0xe8] sm:$0xff]
  %v44 = vld [vmem:[%s0 + $0xf0] sm:$0xff]
  %v45 = vld [vmem:[%s0 + $0xf8] sm:$0xff]
  %v46 = vpack.c.bf16 %v15, %v14
  %v47 = vpack.c.bf16 %v17, %v16
  %v48 = vpack.c.bf16 %v19, %v18
  %v49 = vpack.c.bf16 %v21, %v20
  %v50 = vpack.c.bf16 %v23, %v22
  %v51 = vpack.c.bf16 %v25, %v24
  %v52 = vpack.c.bf16 %v27, %v26
  %v53 = vpack.c.bf16 %v29, %v28
  %v54 = vpack.c.bf16 %v31, %v30
  %v55 = vpack.c.bf16 %v33, %v32
  %v56 = vpack.c.bf16 %v35, %v34
  %v57 = vpack.c.bf16 %v37, %v36
  %v58 = vpack.c.bf16 %v39, %v38
  %v59 = vpack.c.bf16 %v41, %v40
  %v60 = vpack.c.bf16 %v43, %v42
  %v61 = vpack.c.bf16 %v45, %v44
  %v62 = vld [vmem:[%s1] sm:$0xff]
  %v63 = vld [vmem:[%s1 + $0x8] sm:$0xf]
  %v64 = vld [vmem:[%s1 + $0xc] sm:$0xff]
  %v65 = vld [vmem:[%s1 + $0x14] sm:$0xf]
  %v66 = vld [vmem:[%s1 + $0x18] sm:$0xff]
  %v67 = vld [vmem:[%s1 + $0x20] sm:$0xf]
  %v68 = vld [vmem:[%s1 + $0x24] sm:$0xff]
  %v69 = vld [vmem:[%s1 + $0x2c] sm:$0xf]
  %v70 = vld [vmem:[%s1 + $0x30] sm:$0xff]
  %v71 = vld [vmem:[%s1 + $0x38] sm:$0xf]
  %v72 = vld [vmem:[%s1 + $0x3c] sm:$0xff]
  %v73 = vld [vmem:[%s1 + $0x44] sm:$0xf]
  %v74 = vld [vmem:[%s1 + $0x48] sm:$0xff]
  %v75 = vld [vmem:[%s1 + $0x50] sm:$0xf]
  %v76 = vld [vmem:[%s1 + $0x54] sm:$0xff]
  %v77 = vld [vmem:[%s1 + $0x5c] sm:$0xf]
  %v78 = vld [vmem:[%s1 + $0x60] sm:$0xff]
  %v79 = vld [vmem:[%s1 + $0x68] sm:$0xf]
  %v80 = vld [vmem:[%s1 + $0x6c] sm:$0xff]
  %v81 = vld [vmem:[%s1 + $0x74] sm:$0xf]
  %v82 = vld [vmem:[%s1 + $0x78] sm:$0xff]
  %v83 = vld [vmem:[%s1 + $0x80] sm:$0xf]
  %v84 = vld [vmem:[%s1 + $0x84] sm:$0xff]
  %v85 = vld [vmem:[%s1 + $0x8c] sm:$0xf]
  %v86 = vld [vmem:[%s1 + $0x90] sm:$0xff]
  %v87 = vld [vmem:[%s1 + $0x98] sm:$0xf]
  %v88 = vld [vmem:[%s1 + $0x9c] sm:$0xff]
  %v89 = vld [vmem:[%s1 + $0xa4] sm:$0xf]
  %v90 = vld [vmem:[%s1 + $0xa8] sm:$0xff]
  %v91 = vld [vmem:[%s1 + $0xb0] sm:$0xf]
  %v92 = vld [vmem:[%s1 + $0xb4] sm:$0xff]
  %v93 = vld [vmem:[%s1 + $0xbc] sm:$0xf]
  %v94 = vld [vmem:[%s2] sm:$0x7]
  %v96 = vperm.slane %v94, 0
  %v97 = vperm.slane %v94, 1
  %v98 = vperm.slane %v94, 2
  %v134 = vunpack.c.l.b16 %v62
  %v135 = vunpack.c.h.b16 %v62
  %v136 = vunpack.c.l.b16 %v63
  %v137 = vunpack.c.l.b16 %v64
  %v138 = vunpack.c.h.b16 %v64
  %v139 = vunpack.c.l.b16 %v65
  %v140 = vunpack.c.l.b16 %v66
  %v141 = vunpack.c.h.b16 %v66
  %v142 = vunpack.c.l.b16 %v67
  %v143 = vunpack.c.l.b16 %v68
  %v144 = vunpack.c.h.b16 %v68
  %v145 = vunpack.c.l.b16 %v69
  %v146 = vunpack.c.l.b16 %v70
  %v147 = vunpack.c.h.b16 %v70
  %v148 = vunpack.c.l.b16 %v71
  %v149 = vunpack.c.l.b16 %v72
  %v150 = vunpack.c.h.b16 %v72
  %v151 = vunpack.c.l.b16 %v73
  %v152 = vunpack.c.l.b16 %v74
  %v153 = vunpack.c.h.b16 %v74
  %v154 = vunpack.c.l.b16 %v75
  %v155 = vunpack.c.l.b16 %v76
  %v156 = vunpack.c.h.b16 %v76
  %v157 = vunpack.c.l.b16 %v77
  %v158 = vunpack.c.l.b16 %v78
  %v159 = vunpack.c.h.b16 %v78
  %v160 = vunpack.c.l.b16 %v79
  %v161 = vunpack.c.l.b16 %v80
  %v162 = vunpack.c.h.b16 %v80
  %v163 = vunpack.c.l.b16 %v81
  %v164 = vunpack.c.l.b16 %v82
  %v165 = vunpack.c.h.b16 %v82
  %v166 = vunpack.c.l.b16 %v83
  %v167 = vunpack.c.l.b16 %v84
  %v168 = vunpack.c.h.b16 %v84
  %v169 = vunpack.c.l.b16 %v85
  %v170 = vunpack.c.l.b16 %v86
  %v171 = vunpack.c.h.b16 %v86
  %v172 = vunpack.c.l.b16 %v87
  %v173 = vunpack.c.l.b16 %v88
  %v174 = vunpack.c.h.b16 %v88
  %v175 = vunpack.c.l.b16 %v89
  %v176 = vunpack.c.l.b16 %v90
  %v177 = vunpack.c.h.b16 %v90
  %v178 = vunpack.c.l.b16 %v91
  %v179 = vunpack.c.l.b16 %v92
  %v180 = vunpack.c.h.b16 %v92
  %v181 = vunpack.c.l.b16 %v93
  %v182 = vpack.c.b16 %v137, %v134
  %v183 = vpack.c.b16 %v138, %v135
  %v184 = vpack.c.b16 %v139, %v136
  %v185 = vpack.c.b16 %v143, %v140
  %v186 = vpack.c.b16 %v144, %v141
  %v187 = vpack.c.b16 %v145, %v142
  %v188 = vpack.c.b16 %v149, %v146
  %v189 = vpack.c.b16 %v150, %v147
  %v190 = vpack.c.b16 %v151, %v148
  %v191 = vpack.c.b16 %v155, %v152
  %v192 = vpack.c.b16 %v156, %v153
  %v193 = vpack.c.b16 %v157, %v154
  %v194 = vpack.c.b16 %v161, %v158
  %v195 = vpack.c.b16 %v162, %v159
  %v196 = vpack.c.b16 %v163, %v160
  %v197 = vpack.c.b16 %v167, %v164
  %v198 = vpack.c.b16 %v168, %v165
  %v199 = vpack.c.b16 %v169, %v166
  %v200 = vpack.c.b16 %v173, %v170
  %v201 = vpack.c.b16 %v174, %v171
  %v202 = vpack.c.b16 %v175, %v172
  %v203 = vpack.c.b16 %v179, %v176
  %v204 = vpack.c.b16 %v180, %v177
  %v205 = vpack.c.b16 %v181, %v178
  %230 = vmatpush.bf16.msra.mxu0 %v203
  %231 = vmatpush.bf16.msra.mxu0 %v200
  %232 = vmatpush.bf16.msra.mxu0 %v197
  %233 = vmatpush.bf16.msra.mxu0 %v194
  %234 = vmatpush.bf16.msra.mxu0 %v191
  %235 = vmatpush.bf16.msra.mxu0 %v188
  %236 = vmatpush.bf16.msra.mxu0 %v185
  %237 = vmatpush.bf16.msra.mxu0 %v182
  %238 = vmatmul.bf16.gmra.mxu0 %v46
  %v239 = vpop.f32.mrf.mxu0
  %v240 = vadd.f32 %v96, %v239
  %v241 = vpop.f32.mrf.mxu0
  %v242 = vadd.f32 %v96, %v241
  %243 = vmatmul.bf16.gmra.mxu0 %v47
  %v244 = vpop.f32.mrf.mxu0
  %v245 = vadd.f32 %v96, %v244
  %v246 = vpop.f32.mrf.mxu0
  %v247 = vadd.f32 %v96, %v246
  %248 = vmatmul.bf16.gmra.mxu0 %v48
  %v249 = vpop.f32.mrf.mxu0
  %v250 = vadd.f32 %v96, %v249
  %v251 = vpop.f32.mrf.mxu0
  %v252 = vadd.f32 %v96, %v251
  %253 = vmatmul.bf16.gmra.mxu0 %v49
  %v254 = vpop.f32.mrf.mxu0
  %v255 = vadd.f32 %v96, %v254
  %v256 = vpop.f32.mrf.mxu0
  %v257 = vadd.f32 %v96, %v256
  %258 = vmatmul.bf16.gmra.mxu0 %v50
  %v259 = vpop.f32.mrf.mxu0
  %v260 = vadd.f32 %v96, %v259
  %v261 = vpop.f32.mrf.mxu0
  %v262 = vadd.f32 %v96, %v261
  %263 = vmatmul.bf16.gmra.mxu0 %v51
  %v264 = vpop.f32.mrf.mxu0
  %v265 = vadd.f32 %v96, %v264
  %v266 = vpop.f32.mrf.mxu0
  %v267 = vadd.f32 %v96, %v266
  %268 = vmatmul.bf16.gmra.mxu0 %v52
  %v269 = vpop.f32.mrf.mxu0
  %v270 = vadd.f32 %v96, %v269
  %v271 = vpop.f32.mrf.mxu0
  %v272 = vadd.f32 %v96, %v271
  %273 = vmatmul.bf16.gmra.mxu0 %v53
  %v274 = vpop.f32.mrf.mxu0
  %v275 = vadd.f32 %v96, %v274
  %v276 = vpop.f32.mrf.mxu0
  %v277 = vadd.f32 %v96, %v276
  %278 = vmatmul.bf16.gmra.mxu0 %v54
  %v279 = vpop.f32.mrf.mxu0
  %v280 = vadd.f32 %v96, %v279
  %v281 = vpop.f32.mrf.mxu0
  %v282 = vadd.f32 %v96, %v281
  %283 = vmatmul.bf16.gmra.mxu0 %v55
  %v284 = vpop.f32.mrf.mxu0
  %v285 = vadd.f32 %v96, %v284
  %v286 = vpop.f32.mrf.mxu0
  %v287 = vadd.f32 %v96, %v286
  %288 = vmatmul.bf16.gmra.mxu0 %v56
  %v289 = vpop.f32.mrf.mxu0
  %v290 = vadd.f32 %v96, %v289
  %v291 = vpop.f32.mrf.mxu0
  %v292 = vadd.f32 %v96, %v291
  %293 = vmatmul.bf16.gmra.mxu0 %v57
  %v294 = vpop.f32.mrf.mxu0
  %v295 = vadd.f32 %v96, %v294
  %v296 = vpop.f32.mrf.mxu0
  %v297 = vadd.f32 %v96, %v296
  %298 = vmatmul.bf16.gmra.mxu0 %v58
  %v299 = vpop.f32.mrf.mxu0
  %v300 = vadd.f32 %v96, %v299
  %v301 = vpop.f32.mrf.mxu0
  %v302 = vadd.f32 %v96, %v301
  %303 = vmatmul.bf16.gmra.mxu0 %v59
  %v304 = vpop.f32.mrf.mxu0
  %v305 = vadd.f32 %v96, %v304
  %v306 = vpop.f32.mrf.mxu0
  %v307 = vadd.f32 %v96, %v306
  %308 = vmatmul.bf16.gmra.mxu0 %v60
  %v309 = vpop.f32.mrf.mxu0
  %v310 = vadd.f32 %v96, %v309
  %v311 = vpop.f32.mrf.mxu0
  %v312 = vadd.f32 %v96, %v311
  %313 = vmatmul.bf16.gmra.mxu0 %v61
  %v314 = vpop.f32.mrf.mxu0
  %v315 = vadd.f32 %v96, %v314
  %v316 = vpop.f32.mrf.mxu0
  %v317 = vadd.f32 %v96, %v316
  %318 = vdwg.mxu0
  %319 = vmatpush.bf16.msra.mxu0 %v204
  %320 = vmatpush.bf16.msra.mxu0 %v201
  %321 = vmatpush.bf16.msra.mxu0 %v198
  %322 = vmatpush.bf16.msra.mxu0 %v195
  %323 = vmatpush.bf16.msra.mxu0 %v192
  %324 = vmatpush.bf16.msra.mxu0 %v189
  %325 = vmatpush.bf16.msra.mxu0 %v186
  %326 = vmatpush.bf16.msra.mxu0 %v183
  %327 = vmatmul.bf16.gmra.mxu0 %v46
  %v328 = vpop.f32.mrf.mxu0
  %v329 = vadd.f32 %v97, %v328
  %v330 = vpop.f32.mrf.mxu0
  %v331 = vadd.f32 %v97, %v330
  %332 = vmatmul.bf16.gmra.mxu0 %v47
  %v333 = vpop.f32.mrf.mxu0
  %v334 = vadd.f32 %v97, %v333
  %v335 = vpop.f32.mrf.mxu0
  %v336 = vadd.f32 %v97, %v335
  %337 = vmatmul.bf16.gmra.mxu0 %v48
  %v338 = vpop.f32.mrf.mxu0
  %v339 = vadd.f32 %v97, %v338
  %v340 = vpop.f32.mrf.mxu0
  %v341 = vadd.f32 %v97, %v340
  %342 = vmatmul.bf16.gmra.mxu0 %v49
  %v343 = vpop.f32.mrf.mxu0
  %v344 = vadd.f32 %v97, %v343
  %v345 = vpop.f32.mrf.mxu0
  %v346 = vadd.f32 %v97, %v345
  %347 = vmatmul.bf16.gmra.mxu0 %v50
  %v348 = vpop.f32.mrf.mxu0
  %v349 = vadd.f32 %v97, %v348
  %v350 = vpop.f32.mrf.mxu0
  %v351 = vadd.f32 %v97, %v350
  %352 = vmatmul.bf16.gmra.mxu0 %v51
  %v353 = vpop.f32.mrf.mxu0
  %v354 = vadd.f32 %v97, %v353
  %v355 = vpop.f32.mrf.mxu0
  %v356 = vadd.f32 %v97, %v355
  %357 = vmatmul.bf16.gmra.mxu0 %v52
  %v358 = vpop.f32.mrf.mxu0
  %v359 = vadd.f32 %v97, %v358
  %v360 = vpop.f32.mrf.mxu0
  %v361 = vadd.f32 %v97, %v360
  %362 = vmatmul.bf16.gmra.mxu0 %v53
  %v363 = vpop.f32.mrf.mxu0
  %v364 = vadd.f32 %v97, %v363
  %v365 = vpop.f32.mrf.mxu0
  %v366 = vadd.f32 %v97, %v365
  %367 = vmatmul.bf16.gmra.mxu0 %v54
  %v368 = vpop.f32.mrf.mxu0
  %v369 = vadd.f32 %v97, %v368
  %v370 = vpop.f32.mrf.mxu0
  %v371 = vadd.f32 %v97, %v370
  %372 = vmatmul.bf16.gmra.mxu0 %v55
  %v373 = vpop.f32.mrf.mxu0
  %v374 = vadd.f32 %v97, %v373
  %v375 = vpop.f32.mrf.mxu0
  %v376 = vadd.f32 %v97, %v375
  %377 = vmatmul.bf16.gmra.mxu0 %v56
  %v378 = vpop.f32.mrf.mxu0
  %v379 = vadd.f32 %v97, %v378
  %v380 = vpop.f32.mrf.mxu0
  %v381 = vadd.f32 %v97, %v380
  %382 = vmatmul.bf16.gmra.mxu0 %v57
  %v383 = vpop.f32.mrf.mxu0
  %v384 = vadd.f32 %v97, %v383
  %v385 = vpop.f32.mrf.mxu0
  %v386 = vadd.f32 %v97, %v385
  %387 = vmatmul.bf16.gmra.mxu0 %v58
  %v388 = vpop.f32.mrf.mxu0
  %v389 = vadd.f32 %v97, %v388
  %v390 = vpop.f32.mrf.mxu0
  %v391 = vadd.f32 %v97, %v390
  %392 = vmatmul.bf16.gmra.mxu0 %v59
  %v393 = vpop.f32.mrf.mxu0
  %v394 = vadd.f32 %v97, %v393
  %v395 = vpop.f32.mrf.mxu0
  %v396 = vadd.f32 %v97, %v395
  %397 = vmatmul.bf16.gmra.mxu0 %v60
  %v398 = vpop.f32.mrf.mxu0
  %v399 = vadd.f32 %v97, %v398
  %v400 = vpop.f32.mrf.mxu0
  %v401 = vadd.f32 %v97, %v400
  %402 = vmatmul.bf16.gmra.mxu0 %v61
  %v403 = vpop.f32.mrf.mxu0
  %v404 = vadd.f32 %v97, %v403
  %v405 = vpop.f32.mrf.mxu0
  %v406 = vadd.f32 %v97, %v405
  %407 = vdwg.mxu0
  %408 = vmatpush.bf16.msra.mxu0 %v205
  %409 = vmatpush.bf16.msra.mxu0 %v202
  %410 = vmatpush.bf16.msra.mxu0 %v199
  %411 = vmatpush.bf16.msra.mxu0 %v196
  %412 = vmatpush.bf16.msra.mxu0 %v193
  %413 = vmatpush.bf16.msra.mxu0 %v190
  %414 = vmatpush.bf16.msra.mxu0 %v187
  %415 = vmatpush.bf16.msra.mxu0 %v184
  %416 = vmatmul.bf16.gmra.mxu0 %v46
  %v417 = vpop.f32.mrf.mxu0
  %v418 = vadd.f32 %v98, %v417
  %v419 = vpop.f32.mrf.mxu0
  %v420 = vadd.f32 %v98, %v419
  %421 = vmatmul.bf16.gmra.mxu0 %v47
  %v422 = vpop.f32.mrf.mxu0
  %v423 = vadd.f32 %v98, %v422
  %v424 = vpop.f32.mrf.mxu0
  %v425 = vadd.f32 %v98, %v424
  %426 = vmatmul.bf16.gmra.mxu0 %v48
  %v427 = vpop.f32.mrf.mxu0
  %v428 = vadd.f32 %v98, %v427
  %v429 = vpop.f32.mrf.mxu0
  %v430 = vadd.f32 %v98, %v429
  %431 = vmatmul.bf16.gmra.mxu0 %v49
  %v432 = vpop.f32.mrf.mxu0
  %v433 = vadd.f32 %v98, %v432
  %v434 = vpop.f32.mrf.mxu0
  %v435 = vadd.f32 %v98, %v434
  %436 = vmatmul.bf16.gmra.mxu0 %v50
  %v437 = vpop.f32.mrf.mxu0
  %v438 = vadd.f32 %v98, %v437
  %v439 = vpop.f32.mrf.mxu0
  %v440 = vadd.f32 %v98, %v439
  %441 = vmatmul.bf16.gmra.mxu0 %v51
  %v442 = vpop.f32.mrf.mxu0
  %v443 = vadd.f32 %v98, %v442
  %v444 = vpop.f32.mrf.mxu0
  %v445 = vadd.f32 %v98, %v444
  %446 = vmatmul.bf16.gmra.mxu0 %v52
  %v447 = vpop.f32.mrf.mxu0
  %v448 = vadd.f32 %v98, %v447
  %v449 = vpop.f32.mrf.mxu0
  %v450 = vadd.f32 %v98, %v449
  %451 = vmatmul.bf16.gmra.mxu0 %v53
  %v452 = vpop.f32.mrf.mxu0
  %v453 = vadd.f32 %v98, %v452
  %v454 = vpop.f32.mrf.mxu0
  %v455 = vadd.f32 %v98, %v454
  %456 = vmatmul.bf16.gmra.mxu0 %v54
  %v457 = vpop.f32.mrf.mxu0
  %v458 = vadd.f32 %v98, %v457
  %v459 = vpop.f32.mrf.mxu0
  %v460 = vadd.f32 %v98, %v459
  %461 = vmatmul.bf16.gmra.mxu0 %v55
  %v462 = vpop.f32.mrf.mxu0
  %v463 = vadd.f32 %v98, %v462
  %v464 = vpop.f32.mrf.mxu0
  %v465 = vadd.f32 %v98, %v464
  %466 = vmatmul.bf16.gmra.mxu0 %v56
  %v467 = vpop.f32.mrf.mxu0
  %v468 = vadd.f32 %v98, %v467
  %v469 = vpop.f32.mrf.mxu0
  %v470 = vadd.f32 %v98, %v469
  %471 = vmatmul.bf16.gmra.mxu0 %v57
  %v472 = vpop.f32.mrf.mxu0
  %v473 = vadd.f32 %v98, %v472
  %v474 = vpop.f32.mrf.mxu0
  %v475 = vadd.f32 %v98, %v474
  %476 = vmatmul.bf16.gmra.mxu0 %v58
  %v477 = vpop.f32.mrf.mxu0
  %v478 = vadd.f32 %v98, %v477
  %v479 = vpop.f32.mrf.mxu0
  %v480 = vadd.f32 %v98, %v479
  %481 = vmatmul.bf16.gmra.mxu0 %v59
  %v482 = vpop.f32.mrf.mxu0
  %v483 = vadd.f32 %v98, %v482
  %v484 = vpop.f32.mrf.mxu0
  %v485 = vadd.f32 %v98, %v484
  %486 = vmatmul.bf16.gmra.mxu0 %v60
  %v487 = vpop.f32.mrf.mxu0
  %v488 = vadd.f32 %v98, %v487
  %v489 = vpop.f32.mrf.mxu0
  %v490 = vadd.f32 %v98, %v489
  %491 = vmatmul.bf16.gmra.mxu0 %v61
  %v492 = vpop.f32.mrf.mxu0
  %v493 = vadd.f32 %v98, %v492
  %v494 = vpop.f32.mrf.mxu0
  %v495 = vadd.f32 %v98, %v494
  %496 = vdwg.mxu0
  %497 = vst [vmem:[%s3] sm:$0xff] %v240
  %498 = vst [vmem:[%s3 + $0x8] sm:$0xff] %v329
  %499 = vst [vmem:[%s3 + $0x10] sm:$0xff] %v418
  %500 = vst [vmem:[%s3 + $0x18] sm:$0xff] %v242
  %501 = vst [vmem:[%s3 + $0x20] sm:$0xff] %v331
  %502 = vst [vmem:[%s3 + $0x28] sm:$0xff] %v420
  %503 = vst [vmem:[%s3 + $0x30] sm:$0xff] %v245
  %504 = vst [vmem:[%s3 + $0x38] sm:$0xff] %v334
  %505 = vst [vmem:[%s3 + $0x40] sm:$0xff] %v423
  %506 = vst [vmem:[%s3 + $0x48] sm:$0xff] %v247
  %507 = vst [vmem:[%s3 + $0x50] sm:$0xff] %v336
  %508 = vst [vmem:[%s3 + $0x58] sm:$0xff] %v425
  %509 = vst [vmem:[%s3 + $0x60] sm:$0xff] %v250
  %510 = vst [vmem:[%s3 + $0x68] sm:$0xff] %v339
  %511 = vst [vmem:[%s3 + $0x70] sm:$0xff] %v428
  %512 = vst [vmem:[%s3 + $0x78] sm:$0xff] %v252
  %513 = vst [vmem:[%s3 + $0x80] sm:$0xff] %v341
  %514 = vst [vmem:[%s3 + $0x88] sm:$0xff] %v430
  %515 = vst [vmem:[%s3 + $0x90] sm:$0xff] %v255
  %516 = vst [vmem:[%s3 + $0x98] sm:$0xff] %v344
  %517 = vst [vmem:[%s3 + $0xa0] sm:$0xff] %v433
  %518 = vst [vmem:[%s3 + $0xa8] sm:$0xff] %v257
  %519 = vst [vmem:[%s3 + $0xb0] sm:$0xff] %v346
  %520 = vst [vmem:[%s3 + $0xb8] sm:$0xff] %v435
  %521 = vst [vmem:[%s3 + $0xc0] sm:$0xff] %v260
  %522 = vst [vmem:[%s3 + $0xc8] sm:$0xff] %v349
  %523 = vst [vmem:[%s3 + $0xd0] sm:$0xff] %v438
  %524 = vst [vmem:[%s3 + $0xd8] sm:$0xff] %v262
  %525 = vst [vmem:[%s3 + $0xe0] sm:$0xff] %v351
  %526 = vst [vmem:[%s3 + $0xe8] sm:$0xff] %v440
  %527 = vst [vmem:[%s3 + $0xf0] sm:$0xff] %v265
  %528 = vst [vmem:[%s3 + $0xf8] sm:$0xff] %v354
  %529 = vst [vmem:[%s3 + $0x100] sm:$0xff] %v443
  %530 = vst [vmem:[%s3 + $0x108] sm:$0xff] %v267
  %531 = vst [vmem:[%s3 + $0x110] sm:$0xff] %v356
  %532 = vst [vmem:[%s3 + $0x118] sm:$0xff] %v445
  %533 = vst [vmem:[%s3 + $0x120] sm:$0xff] %v270
  %534 = vst [vmem:[%s3 + $0x128] sm:$0xff] %v359
  %535 = vst [vmem:[%s3 + $0x130] sm:$0xff] %v448
  %536 = vst [vmem:[%s3 + $0x138] sm:$0xff] %v272
  %537 = vst [vmem:[%s3 + $0x140] sm:$0xff] %v361
  %538 = vst [vmem:[%s3 + $0x148] sm:$0xff] %v450
  %539 = vst [vmem:[%s3 + $0x150] sm:$0xff] %v275
  %540 = vst [vmem:[%s3 + $0x158] sm:$0xff] %v364
  %541 = vst [vmem:[%s3 + $0x160] sm:$0xff] %v453
  %542 = vst [vmem:[%s3 + $0x168] sm:$0xff] %v277
  %543 = vst [vmem:[%s3 + $0x170] sm:$0xff] %v366
  %544 = vst [vmem:[%s3 + $0x178] sm:$0xff] %v455
  %545 = vst [vmem:[%s3 + $0x180] sm:$0xff] %v280
  %546 = vst [vmem:[%s3 + $0x188] sm:$0xff] %v369
  %547 = vst [vmem:[%s3 + $0x190] sm:$0xff] %v458
  %548 = vst [vmem:[%s3 + $0x198] sm:$0xff] %v282
  %549 = vst [vmem:[%s3 + $0x1a0] sm:$0xff] %v371
  %550 = vst [vmem:[%s3 + $0x1a8] sm:$0xff] %v460
  %551 = vst [vmem:[%s3 + $0x1b0] sm:$0xff] %v285
  %552 = vst [vmem:[%s3 + $0x1b8] sm:$0xff] %v374
  %553 = vst [vmem:[%s3 + $0x1c0] sm:$0xff] %v463
  %554 = vst [vmem:[%s3 + $0x1c8] sm:$0xff] %v287
  %555 = vst [vmem:[%s3 + $0x1d0] sm:$0xff] %v376
  %556 = vst [vmem:[%s3 + $0x1d8] sm:$0xff] %v465
  %557 = vst [vmem:[%s3 + $0x1e0] sm:$0xff] %v290
  %558 = vst [vmem:[%s3 + $0x1e8] sm:$0xff] %v379
  %559 = vst [vmem:[%s3 + $0x1f0] sm:$0xff] %v468
  %560 = vst [vmem:[%s3 + $0x1f8] sm:$0xff] %v292
  %561 = vst [vmem:[%s3 + $0x200] sm:$0xff] %v381
  %562 = vst [vmem:[%s3 + $0x208] sm:$0xff] %v470
  %563 = vst [vmem:[%s3 + $0x210] sm:$0xff] %v295
  %564 = vst [vmem:[%s3 + $0x218] sm:$0xff] %v384
  %565 = vst [vmem:[%s3 + $0x220] sm:$0xff] %v473
  %566 = vst [vmem:[%s3 + $0x228] sm:$0xff] %v297
  %567 = vst [vmem:[%s3 + $0x230] sm:$0xff] %v386
  %568 = vst [vmem:[%s3 + $0x238] sm:$0xff] %v475
  %569 = vst [vmem:[%s3 + $0x240] sm:$0xff] %v300
  %570 = vst [vmem:[%s3 + $0x248] sm:$0xff] %v389
  %571 = vst [vmem:[%s3 + $0x250] sm:$0xff] %v478
  %572 = vst [vmem:[%s3 + $0x258] sm:$0xff] %v302
  %573 = vst [vmem:[%s3 + $0x260] sm:$0xff] %v391
  %574 = vst [vmem:[%s3 + $0x268] sm:$0xff] %v480
  %575 = vst [vmem:[%s3 + $0x270] sm:$0xff] %v305
  %576 = vst [vmem:[%s3 + $0x278] sm:$0xff] %v394
  %577 = vst [vmem:[%s3 + $0x280] sm:$0xff] %v483
  %578 = vst [vmem:[%s3 + $0x288] sm:$0xff] %v307
  %579 = vst [vmem:[%s3 + $0x290] sm:$0xff] %v396
  %580 = vst [vmem:[%s3 + $0x298] sm:$0xff] %v485
  %581 = vst [vmem:[%s3 + $0x2a0] sm:$0xff] %v310
  %582 = vst [vmem:[%s3 + $0x2a8] sm:$0xff] %v399
  %583 = vst [vmem:[%s3 + $0x2b0] sm:$0xff] %v488
  %584 = vst [vmem:[%s3 + $0x2b8] sm:$0xff] %v312
  %585 = vst [vmem:[%s3 + $0x2c0] sm:$0xff] %v401
  %586 = vst [vmem:[%s3 + $0x2c8] sm:$0xff] %v490
  %587 = vst [vmem:[%s3 + $0x2d0] sm:$0xff] %v315
  %588 = vst [vmem:[%s3 + $0x2d8] sm:$0xff] %v404
  %589 = vst [vmem:[%s3 + $0x2e0] sm:$0xff] %v493
  %590 = vst [vmem:[%s3 + $0x2e8] sm:$0xff] %v317
  %591 = vst [vmem:[%s3 + $0x2f0] sm:$0xff] %v406
  %592 = vst [vmem:[%s3 + $0x2f8] sm:$0xff] %v495
  // Predicated region
  $region14: #{hydra_na_forward.2} parent=0 // pred_check
    _
  $region15: #{hydra_na_forward.2} parent=0 // pred_check_branch
    %594 = sbr.rel (0) target = $region17
  $region16: #{hydra_na_forward.2} parent=0 // pred_region
    _
  $region17: #{hydra_na_forward.2} parent=0 // pred_fallthru
    _
  // Predicated region
  $region18: #{hydra_na_forward.2} parent=0 // pred_check
    _
  $region19: #{hydra_na_forward.2} parent=0 // pred_check_branch
    %596 = sbr.rel (0) target = $region21
  $region20: #{hydra_na_forward.2} parent=0 // pred_region
    _
  $region21: #{hydra_na_forward.2} parent=0 // pred_fallthru
    _

// kernel: hydra_na_forward.3
$region0: #{hydra_na_forward.3}
  #allocation0 [shape = 'u32[]', space=smem, size = 0x4, offset = 0x4, fixed_abs, tag = 'smem constant byte address 0x4 - core index']
  #allocation1 [shape = 'u32[72,128]{1,0:T(1,128)}', space=vmem, size = 0x9000, scoped, tag = 'internal scratch']
  %s0 = inlined_call_operand.vmem [shape: bf16[2,4,128,32], index: 0, kind: input, shape index: {}]
  %s1 = inlined_call_operand.vmem [shape: bf16[2,4,128,32], index: 1, kind: input, shape index: {}]
  %s2 = inlined_call_operand.vmem [shape: bf16[2,4,128,32], index: 2, kind: input, shape index: {}]
  %s3 = inlined_call_operand.vmem [shape: f32[4,128,128], index: 3, kind: input, shape index: {}]
  %s4 = inlined_call_operand.vmem [shape: bf16[128,128], index: 4, kind: input, shape index: {}]
  %s5 = inlined_call_operand.vmem [shape: f32[1,128], index: 5, kind: input, shape index: {}]
  %s6 = inlined_call_operand.hbm [shape: f32[2,128,128], index: 6, kind: output, shape index: {}]
  %s7 = sld [smem:[#allocation0]]
  $region57: #{hydra_na_forward.3} parent=0
    _
  %s9 = ssub.s32 1, %s7
  %s10 = scalar_select 0, %s9, %s7
  $region1: #{hydra_na_forward.3} parent=0
    #allocation2 [shape = 'u8[131072]{0}', space=vmem, size = 0x20000, scoped, tag = 'output window, operand 0']
    #allocation3 [shape = 's32[2]{0}', space=sflag, size = 0x8, scoped, tag = 'scoped memory for hydra_na_forward.3']
    %11 = vsyncpa [#allocation3], 0
    %s12 = scalar_lea.sflag [#allocation3], 1
    %13 = vsyncpa %s12, 0
    loop: start=0, step=1, limit=4
    $region2: #{hydra_na_forward.3} parent=1 // loop_pre_header
      _
    $region3: #{hydra_na_forward.3} parent=1 // loop_header
      %s15 = sphi 0, %s19
      %p16 = scmp.ge.s32.totalorder %s15, 4
      %s25 = sphi 0, %s27
      %s28 = sphi 0, %s25
      %s29 = sphi 0, %s28
      %s45 = sphi 0, %s29
      %s51 = sphi 0, %s53
      %s54 = sphi 0, %s51
      %s55 = sphi 0, %s54
      %s71 = sphi 0, %s55
      %s77 = sphi 0, %s79
      %s80 = sphi 0, %s77
      %s81 = sphi 0, %s80
      %s97 = sphi 0, %s81
      %s101 = sphi 0, %s101
      %s103 = sphi 0, %s101
      %s104 = sphi 0, %s103
      %s118 = sphi 0, %s104
      %s122 = sphi 0, %s122
      %s124 = sphi 0, %s122
      %s125 = sphi 0, %s124
      %s139 = sphi 0, %s125
      %s143 = sphi 0, %s143
      %s145 = sphi 0, %s143
      %s146 = sphi 0, %s145
      %s160 = sphi 0, %s146
      %s166 = sphi 0, %s168
      %s169 = sphi 0, %s166
      %s170 = sphi 0, %s169
      %s186 = sphi 0, %s170
    $region4: #{hydra_na_forward.3} parent=1 // loop_header_branch
      %18 = sbr.rel (%p16) target = $region8
    $region5: #{hydra_na_forward.3} parent=1 // loop_body
      %s20 = ssub.s32 %s15, 1
      %s21 = ssub.s32 %s15, 2
      %s22 = sadd.s32 %s15, 1
      %s23 = ssub.s32 %s15, %s22
      %p24 = scmp.eq.s32.totalorder %s23, 0
      %s26 = sadd.s32 %s25, 1
      %s27 = scalar_select %p24, %s25, %s26
      %p30 = pneg %p24
      %p31 = scmp.eq.s32.totalorder %s15, 1
      %p32 = por %p30, %p31
      %p33 = scmp.ne.s32.totalorder %s25, %s28
      %p34 = scmp.eq.s32.totalorder %s15, 0
      %p35 = por %p33, %p34
      %p36 = scmp.ne.s32.totalorder %s25, %s28
      %p37 = scmp.eq.s32.totalorder %s20, 1
      %p38 = por %p36, %p37
      %p39 = scmp.ne.s32.totalorder %s28, %s29
      %p40 = scmp.eq.s32.totalorder %s20, 0
      %p41 = por %p39, %p40
      %p42 = scmp.ne.s32.totalorder %s28, %s29
      %p43 = scmp.eq.s32.totalorder %s21, 1
      %p44 = por %p42, %p43
      %p46 = scmp.ne.s32.totalorder %s29, %s45
      %p47 = scmp.eq.s32.totalorder %s21, 0
      %p48 = por %p46, %p47
      %s49 = ssub.s32 %s15, %s22
      %p50 = scmp.eq.s32.totalorder %s49, 0
      %s52 = sadd.s32 %s51, 1
      %s53 = scalar_select %p50, %s51, %s52
      %p56 = pneg %p50
      %p57 = scmp.eq.s32.totalorder %s15, 1
      %p58 = por %p56, %p57
      %p59 = scmp.ne.s32.totalorder %s51, %s54
      %p60 = scmp.eq.s32.totalorder %s15, 0
      %p61 = por %p59, %p60
      %p62 = scmp.ne.s32.totalorder %s51, %s54
      %p63 = scmp.eq.s32.totalorder %s20, 1
      %p64 = por %p62, %p63
      %p65 = scmp.ne.s32.totalorder %s54, %s55
      %p66 = scmp.eq.s32.totalorder %s20, 0
      %p67 = por %p65, %p66
      %p68 = scmp.ne.s32.totalorder %s54, %s55
      %p69 = scmp.eq.s32.totalorder %s21, 1
      %p70 = por %p68, %p69
      %p72 = scmp.ne.s32.totalorder %s55, %s71
      %p73 = scmp.eq.s32.totalorder %s21, 0
      %p74 = por %p72, %p73
      %s75 = ssub.s32 %s15, %s22
      %p76 = scmp.eq.s32.totalorder %s75, 0
      %s78 = sadd.s32 %s77, 1
      %s79 = scalar_select %p76, %s77, %s78
      %p82 = pneg %p76
      %p83 = scmp.eq.s32.totalorder %s15, 1
      %p84 = por %p82, %p83
      %p85 = scmp.ne.s32.totalorder %s77, %s80
      %p86 = scmp.eq.s32.totalorder %s15, 0
      %p87 = por %p85, %p86
      %p88 = scmp.ne.s32.totalorder %s77, %s80
      %p89 = scmp.eq.s32.totalorder %s20, 1
      %p90 = por %p88, %p89
      %p91 = scmp.ne.s32.totalorder %s80, %s81
      %p92 = scmp.eq.s32.totalorder %s20, 0
      %p93 = por %p91, %p92
      %p94 = scmp.ne.s32.totalorder %s80, %s81
      %p95 = scmp.eq.s32.totalorder %s21, 1
      %p96 = por %p94, %p95
      %p98 = scmp.ne.s32.totalorder %s81, %s97
      %p99 = scmp.eq.s32.totalorder %s21, 0
      %p100 = por %p98, %p99
      %s102 = sadd.s32 %s101, 1
      %p105 = scmp.eq.s32.totalorder %s15, 1
      %p106 = scmp.ne.s32.totalorder %s101, %s103
      %p107 = scmp.eq.s32.totalorder %s15, 0
      %p108 = por %p106, %p107
      %p109 = scmp.ne.s32.totalorder %s101, %s103
      %p110 = scmp.eq.s32.totalorder %s20, 1
      %p111 = por %p109, %p110
      %p112 = scmp.ne.s32.totalorder %s103, %s104
      %p113 = scmp.eq.s32.totalorder %s20, 0
      %p114 = por %p112, %p113
      %p115 = scmp.ne.s32.totalorder %s103, %s104
      %p116 = scmp.eq.s32.totalorder %s21, 1
      %p117 = por %p115, %p116
      %p119 = scmp.ne.s32.totalorder %s104, %s118
      %p120 = scmp.eq.s32.totalorder %s21, 0
      %p121 = por %p119, %p120
      %s123 = sadd.s32 %s122, 1
      %p126 = scmp.eq.s32.totalorder %s15, 1
      %p127 = scmp.ne.s32.totalorder %s122, %s124
      %p128 = scmp.eq.s32.totalorder %s15, 0
      %p129 = por %p127, %p128
      %p130 = scmp.ne.s32.totalorder %s122, %s124
      %p131 = scmp.eq.s32.totalorder %s20, 1
      %p132 = por %p130, %p131
      %p133 = scmp.ne.s32.totalorder %s124, %s125
      %p134 = scmp.eq.s32.totalorder %s20, 0
      %p135 = por %p133, %p134
      %p136 = scmp.ne.s32.totalorder %s124, %s125
      %p137 = scmp.eq.s32.totalorder %s21, 1
      %p138 = por %p136, %p137
      %p140 = scmp.ne.s32.totalorder %s125, %s139
      %p141 = scmp.eq.s32.totalorder %s21, 0
      %p142 = por %p140, %p141
      %s144 = sadd.s32 %s143, 1
      %p147 = scmp.eq.s32.totalorder %s15, 1
      %p148 = scmp.ne.s32.totalorder %s143, %s145
      %p149 = scmp.eq.s32.totalorder %s15, 0
      %p150 = por %p148, %p149
      %p151 = scmp.ne.s32.totalorder %s143, %s145
      %p152 = scmp.eq.s32.totalorder %s20, 1
      %p153 = por %p151, %p152
      %p154 = scmp.ne.s32.totalorder %s145, %s146
      %p155 = scmp.eq.s32.totalorder %s20, 0
      %p156 = por %p154, %p155
      %p157 = scmp.ne.s32.totalorder %s145, %s146
      %p158 = scmp.eq.s32.totalorder %s21, 1
      %p159 = por %p157, %p158
      %p161 = scmp.ne.s32.totalorder %s146, %s160
      %p162 = scmp.eq.s32.totalorder %s21, 0
      %p163 = por %p161, %p162
      %s164 = ssub.s32 %s15, %s22
      %p165 = scmp.eq.s32.totalorder %s164, 0
      %s167 = sadd.s32 %s166, 1
      %s168 = scalar_select %p165, %s166, %s167
      %p171 = pneg %p165
      %p172 = scmp.eq.s32.totalorder %s15, 1
      %p173 = por %p171, %p172
      %p174 = scmp.ne.s32.totalorder %s166, %s169
      %p175 = scmp.eq.s32.totalorder %s15, 0
      %p176 = por %p174, %p175
      %p177 = scmp.ne.s32.totalorder %s166, %s169
      %p178 = scmp.eq.s32.totalorder %s20, 1
      %p179 = por %p177, %p178
      %p180 = scmp.ne.s32.totalorder %s169, %s170
      %p181 = scmp.eq.s32.totalorder %s20, 0
      %p182 = por %p180, %p181
      %p183 = scmp.ne.s32.totalorder %s169, %s170
      %p184 = scmp.eq.s32.totalorder %s21, 1
      %p185 = por %p183, %p184
      %p187 = scmp.ne.s32.totalorder %s170, %s186
      %p188 = scmp.eq.s32.totalorder %s21, 0
      %p189 = por %p187, %p188
      %p190 = scmp.le.s32.totalorder 1, %s15
      %p191 = scmp.lt.s32.totalorder %s15, 3
      %p192 = pnand %p190, %p191
      %p193 = pneg %p192
      // Predicated region
      $region9: #{hydra_na_forward.3} parent=5 // pred_check
        _
      $region10: #{hydra_na_forward.3} parent=5 // pred_check_branch
        %195 = sbr.rel (%p192) target = $region12
      $region11: #{hydra_na_forward.3} parent=5 // pred_region
        %s196 = ssub.s32 %s15, 1
        // Predicated region
        $region13: #{hydra_na_forward.3} parent=11 // pred_check
          %p197 = pneg %p114
        $region14: #{hydra_na_forward.3} parent=11 // pred_check_branch
          %199 = sbr.rel (%p197) target = $region16
        $region15: #{hydra_na_forward.3} parent=11 // pred_region
          _
        $region16: #{hydra_na_forward.3} parent=11 // pred_fallthru
          _
        // Predicated region
        $region17: #{hydra_na_forward.3} parent=11 // pred_check
          %p200 = pneg %p135
        $region18: #{hydra_na_forward.3} parent=11 // pred_check_branch
          %202 = sbr.rel (%p200) target = $region20
        $region19: #{hydra_na_forward.3} parent=11 // pred_region
          _
        $region20: #{hydra_na_forward.3} parent=11 // pred_fallthru
          _
        // Predicated region
        $region21: #{hydra_na_forward.3} parent=11 // pred_check
          %p203 = pneg %p156
        $region22: #{hydra_na_forward.3} parent=11 // pred_check_branch
          %205 = sbr.rel (%p203) target = $region24
        $region23: #{hydra_na_forward.3} parent=11 // pred_region
          _
        $region24: #{hydra_na_forward.3} parent=11 // pred_fallthru
          _
      $region12: #{hydra_na_forward.3} parent=5 // pred_fallthru
        _
      %p206 = scmp.lt.s32.totalorder %s15, 2
      // Predicated region
      $region25: #{hydra_na_forward.3} parent=5 // pred_check
        %p207 = pneg %p206
      $region26: #{hydra_na_forward.3} parent=5 // pred_check_branch
        %209 = sbr.rel (%p207) target = $region28
      $region27: #{hydra_na_forward.3} parent=5 // pred_region
        // Predicated region
        $region29: #{hydra_na_forward.3} parent=27 // pred_check
          %p210 = pneg %p35
        $region30: #{hydra_na_forward.3} parent=27 // pred_check_branch
          %212 = sbr.rel (%p210) target = $region32
        $region31: #{hydra_na_forward.3} parent=27 // pred_region
          %p213 = scmp.lt.s32.totalorder %s15, 1
          %s214 = scalar_select %p213, %s15, 1
          %s215 = smul.addr %s214, 64
          %s216 = smul.addr %s215, 4
          %s217 = scalar_lea.vmem %s0, %s216
        $region32: #{hydra_na_forward.3} parent=27 // pred_fallthru
          _
        // Predicated region
        $region33: #{hydra_na_forward.3} parent=27 // pred_check
          %p218 = pneg %p61
        $region34: #{hydra_na_forward.3} parent=27 // pred_check_branch
          %220 = sbr.rel (%p218) target = $region36
        $region35: #{hydra_na_forward.3} parent=27 // pred_region
          %p221 = scmp.lt.s32.totalorder %s15, 1
          %s222 = scalar_select %p221, %s15, 1
          %s223 = smul.addr %s222, 64
          %s224 = smul.addr %s223, 4
          %s225 = scalar_lea.vmem %s1, %s224
        $region36: #{hydra_na_forward.3} parent=27 // pred_fallthru
          _
        // Predicated region
        $region37: #{hydra_na_forward.3} parent=27 // pred_check
          %p226 = pneg %p87
        $region38: #{hydra_na_forward.3} parent=27 // pred_check_branch
          %228 = sbr.rel (%p226) target = $region40
        $region39: #{hydra_na_forward.3} parent=27 // pred_region
          %p229 = scmp.lt.s32.totalorder %s15, 1
          %s230 = scalar_select %p229, %s15, 1
          %s231 = smul.addr %s230, 64
          %s232 = smul.addr %s231, 4
          %s233 = scalar_lea.vmem %s2, %s232
        $region40: #{hydra_na_forward.3} parent=27 // pred_fallthru
          _
      $region28: #{hydra_na_forward.3} parent=5 // pred_fallthru
        _
      %p234 = scmp.le.s32.totalorder 1, %s15
      %p235 = scmp.lt.s32.totalorder %s15, 3
      %p236 = pnand %p234, %p235
      %p237 = pneg %p236
      // Predicated region
      $region41: #{hydra_na_forward.3} parent=5 // pred_check
        _
      $region42: #{hydra_na_forward.3} parent=5 // pred_check_branch
        %239 = sbr.rel (%p236) target = $region44
      $region43: #{hydra_na_forward.3} parent=5 // pred_region
        %s240 = ssub.s32 %s15, 1
        %p241 = scmp.lt.s32.totalorder %s20, 1
        %s242 = scalar_select %p241, %s20, 1
        %s243 = smul.addr %s242, 64
        %s244 = smul.addr %s243, 4
        %s245 = scalar_lea.vmem %s0, %s244
        %p246 = pneg %p41
        %p247 = pneg %p38
        %p248 = scmp.lt.s32.totalorder %s20, 1
        %s249 = scalar_select %p248, %s20, 1
        %s250 = smul.addr %s249, 64
        %s251 = smul.addr %s250, 4
        %s252 = scalar_lea.vmem %s1, %s251
        %p253 = pneg %p67
        %p254 = pneg %p64
        %p255 = scmp.lt.s32.totalorder %s20, 1
        %s256 = scalar_select %p255, %s20, 1
        %s257 = smul.addr %s256, 64
        %s258 = smul.addr %s257, 4
        %s259 = scalar_lea.vmem %s2, %s258
        %p260 = pneg %p93
        %p261 = pneg %p90
        %p262 = pneg %p114
        %p263 = pneg %p111
        %p264 = pneg %p135
        %p265 = pneg %p132
        %p266 = pneg %p156
        %p267 = pneg %p153
        %p268 = pneg %p182
        %p269 = pneg %p179
        %s270 = sand.u32 %s169, 1
        %s271 = scalar_lea.sflag [#allocation3], %s270
        %s272 = sand.u32 %s169, 1
        %s273 = smul.addr %s272, 128
        %s274 = scalar_lea.vmem [#allocation2], %s273
        %p275 = scmp.lt.s32.totalorder %s20, 1
        %s276 = scalar_select %p275, %s20, 1
        %s277 = smul.addr %s276, 64
        %s278 = smul.addr %s277, 4
        %s279 = scalar_lea.vmem %s0, %s278
        %p280 = scmp.lt.s32.totalorder %s20, 1
        %s281 = scalar_select %p280, %s20, 1
        %s282 = smul.addr %s281, 64
        %s283 = smul.addr %s282, 4
        %s284 = scalar_lea.vmem %s1, %s283
        %p285 = scmp.lt.s32.totalorder %s20, 1
        %s286 = scalar_select %p285, %s20, 1
        %s287 = smul.addr %s286, 64
        %s288 = smul.addr %s287, 4
        %s289 = scalar_lea.vmem %s2, %s288
        %v291 = vld [vmem:[%s5] sm:$0x1]
        %v292 = vld [vmem:[%s279] sm:$0xf]
        %v293 = vld [vmem:[%s279 + $0x4] sm:$0xf]
        %v294 = vld [vmem:[%s279 + $0x8] sm:$0xf]
        %v295 = vld [vmem:[%s279 + $0xc] sm:$0xf]
        %v296 = vld [vmem:[%s279 + $0x10] sm:$0xf]
        %v297 = vld [vmem:[%s279 + $0x14] sm:$0xf]
        %v298 = vld [vmem:[%s279 + $0x18] sm:$0xf]
        %v299 = vld [vmem:[%s279 + $0x1c] sm:$0xf]
        %v300 = vld [vmem:[%s279 + $0x20] sm:$0xf]
        %v301 = vld [vmem:[%s279 + $0x24] sm:$0xf]
        %v302 = vld [vmem:[%s279 + $0x28] sm:$0xf]
        %v303 = vld [vmem:[%s279 + $0x2c] sm:$0xf]
        %v304 = vld [vmem:[%s279 + $0x30] sm:$0xf]
        %v305 = vld [vmem:[%s279 + $0x34] sm:$0xf]
        %v306 = vld [vmem:[%s279 + $0x38] sm:$0xf]
        %v307 = vld [vmem:[%s279 + $0x3c] sm:$0xf]
        %v308 = vld [vmem:[%s284] sm:$0xf]
        %v309 = vld [vmem:[%s284 + $0x4] sm:$0xf]
        %v310 = vld [vmem:[%s284 + $0x8] sm:$0xf]
        %v311 = vld [vmem:[%s284 + $0xc] sm:$0xf]
        %v312 = vld [vmem:[%s284 + $0x10] sm:$0xf]
        %v313 = vld [vmem:[%s284 + $0x14] sm:$0xf]
        %v314 = vld [vmem:[%s284 + $0x18] sm:$0xf]
        %v315 = vld [vmem:[%s284 + $0x1c] sm:$0xf]
        %v316 = vld [vmem:[%s284 + $0x20] sm:$0xf]
        %v317 = vld [vmem:[%s284 + $0x24] sm:$0xf]
        %v318 = vld [vmem:[%s284 + $0x28] sm:$0xf]
        %v319 = vld [vmem:[%s284 + $0x2c] sm:$0xf]
        %v320 = vld [vmem:[%s284 + $0x30] sm:$0xf]
        %v321 = vld [vmem:[%s284 + $0x34] sm:$0xf]
        %v322 = vld [vmem:[%s284 + $0x38] sm:$0xf]
        %v323 = vld [vmem:[%s284 + $0x3c] sm:$0xf]
        %v324 = vld [vmem:[%s289] sm:$0xf]
        %v325 = vld [vmem:[%s289 + $0x4] sm:$0xf]
        %v326 = vld [vmem:[%s289 + $0x8] sm:$0xf]
        %v327 = vld [vmem:[%s289 + $0xc] sm:$0xf]
        %v328 = vld [vmem:[%s289 + $0x10] sm:$0xf]
        %v329 = vld [vmem:[%s289 + $0x14] sm:$0xf]
        %v330 = vld [vmem:[%s289 + $0x18] sm:$0xf]
        %v331 = vld [vmem:[%s289 + $0x1c] sm:$0xf]
        %v332 = vld [vmem:[%s289 + $0x20] sm:$0xf]
        %v333 = vld [vmem:[%s289 + $0x24] sm:$0xf]
        %v334 = vld [vmem:[%s289 + $0x28] sm:$0xf]
        %v335 = vld [vmem:[%s289 + $0x2c] sm:$0xf]
        %v336 = vld [vmem:[%s289 + $0x30] sm:$0xf]
        %v337 = vld [vmem:[%s289 + $0x34] sm:$0xf]
        %v338 = vld [vmem:[%s289 + $0x38] sm:$0xf]
        %v339 = vld [vmem:[%s289 + $0x3c] sm:$0xf]
        %v356 = vunpack.c.l.b16 %v292
        %v357 = vunpack.c.l.b16 %v293
        %v358 = vunpack.c.l.b16 %v294
        %v359 = vunpack.c.l.b16 %v295
        %v360 = vunpack.c.l.b16 %v296
        %v361 = vunpack.c.l.b16 %v297
        %v362 = vunpack.c.l.b16 %v298
        %v363 = vunpack.c.l.b16 %v299
        %v364 = vunpack.c.l.b16 %v300
        %v365 = vunpack.c.l.b16 %v301
        %v366 = vunpack.c.l.b16 %v302
        %v367 = vunpack.c.l.b16 %v303
        %v368 = vunpack.c.l.b16 %v304
        %v369 = vunpack.c.l.b16 %v305
        %v370 = vunpack.c.l.b16 %v306
        %v371 = vunpack.c.l.b16 %v307
        %v372 = vpack.c.b16 %v357, %v356
        %v373 = vpack.c.b16 %v359, %v358
        %v374 = vpack.c.b16 %v361, %v360
        %v375 = vpack.c.b16 %v363, %v362
        %v376 = vpack.c.b16 %v365, %v364
        %v377 = vpack.c.b16 %v367, %v366
        %v378 = vpack.c.b16 %v369, %v368
        %v379 = vpack.c.b16 %v371, %v370
        %v396 = vunpack.c.l.b16 %v308
        %v397 = vunpack.c.l.b16 %v309
        %v398 = vunpack.c.l.b16 %v310
        %v399 = vunpack.c.l.b16 %v311
        %v400 = vunpack.c.l.b16 %v312
        %v401 = vunpack.c.l.b16 %v313
        %v402 = vunpack.c.l.b16 %v314
        %v403 = vunpack.c.l.b16 %v315
        %v404 = vunpack.c.l.b16 %v316
        %v405 = vunpack.c.l.b16 %v317
        %v406 = vunpack.c.l.b16 %v318
        %v407 = vunpack.c.l.b16 %v319
        %v408 = vunpack.c.l.b16 %v320
        %v409 = vunpack.c.l.b16 %v321
        %v410 = vunpack.c.l.b16 %v322
        %v411 = vunpack.c.l.b16 %v323
        %v412 = vpack.c.b16 %v397, %v396
        %v413 = vpack.c.b16 %v399, %v398
        %v414 = vpack.c.b16 %v401, %v400
        %v415 = vpack.c.b16 %v403, %v402
        %v416 = vpack.c.b16 %v405, %v404
        %v417 = vpack.c.b16 %v407, %v406
        %v418 = vpack.c.b16 %v409, %v408
        %v419 = vpack.c.b16 %v411, %v410
        %vm420 = vcmask 261120
        %v422 = vsel %vm420, %v372, 0
        %v425 = vsel %vm420, %v373, 0
        %v428 = vsel %vm420, %v374, 0
        %v431 = vsel %vm420, %v375, 0
        %v434 = vsel %vm420, %v376, 0
        %v437 = vsel %vm420, %v377, 0
        %v440 = vsel %vm420, %v378, 0
        %v443 = vsel %vm420, %v379, 0
        %v446 = vsel %vm420, %v412, 0
        %v449 = vsel %vm420, %v413, 0
        %v452 = vsel %vm420, %v414, 0
        %v455 = vsel %vm420, %v415, 0
        %v458 = vsel %vm420, %v416, 0
        %v461 = vsel %vm420, %v417, 0
        %v464 = vsel %vm420, %v418, 0
        %v467 = vsel %vm420, %v419, 0
        %469 = vmatpush.bf16.xpose.msra.mxu0 %v467
        %470 = vmatpush.bf16.xpose.msra.mxu0 %v464
        %471 = vmatpush.bf16.xpose.msra.mxu0 %v461
        %472 = vmatpush.bf16.xpose.msra.mxu0 %v458
        %473 = vmatpush.bf16.xpose.msra.mxu0 %v455
        %474 = vmatpush.bf16.xpose.msra.mxu0 %v452
        %475 = vmatpush.bf16.xpose.msra.mxu0 %v449
        %476 = vmatpush.bf16.xpose.msra.mxu0 %v446
        %477 = vmatmul.bf16.gmra.mxu0 %v422
        %v478 = vpop.f32.mrf.mxu0
        %v479 = vadd.f32 0.0, %v478
        %v480 = vpop.f32.mrf.mxu0
        %v481 = vadd.f32 0.0, %v480
        %482 = vmatmul.bf16.gmra.mxu0 %v425
        %v483 = vpop.f32.mrf.mxu0
        %v484 = vadd.f32 0.0, %v483
        %v485 = vpop.f32.mrf.mxu0
        %v486 = vadd.f32 0.0, %v485
        %487 = vmatmul.bf16.gmra.mxu0 %v428
        %v488 = vpop.f32.mrf.mxu0
        %v489 = vadd.f32 0.0, %v488
        %v490 = vpop.f32.mrf.mxu0
        %v491 = vadd.f32 0.0, %v490
        %492 = vmatmul.bf16.gmra.mxu0 %v431
        %v493 = vpop.f32.mrf.mxu0
        %v494 = vadd.f32 0.0, %v493
        %v495 = vpop.f32.mrf.mxu0
        %v496 = vadd.f32 0.0, %v495
        %497 = vmatmul.bf16.gmra.mxu0 %v434
        %v498 = vpop.f32.mrf.mxu0
        %v499 = vadd.f32 0.0, %v498
        %v500 = vpop.f32.mrf.mxu0
        %v501 = vadd.f32 0.0, %v500
        %502 = vmatmul.bf16.gmra.mxu0 %v437
        %v503 = vpop.f32.mrf.mxu0
        %v504 = vadd.f32 0.0, %v503
        %v505 = vpop.f32.mrf.mxu0
        %v506 = vadd.f32 0.0, %v505
        %507 = vmatmul.bf16.gmra.mxu0 %v440
        %v508 = vpop.f32.mrf.mxu0
        %v509 = vadd.f32 0.0, %v508
        %v510 = vpop.f32.mrf.mxu0
        %v511 = vadd.f32 0.0, %v510
        %512 = vmatmul.bf16.gmra.mxu0 %v443
        %v513 = vpop.f32.mrf.mxu0
        %v514 = vadd.f32 0.0, %v513
        %v515 = vpop.f32.mrf.mxu0
        %v516 = vadd.f32 0.0, %v515
        %517 = vdwg.mxu0
        %v518 = vmul.f32 %v479, 0.17677669
        %v519 = vmul.f32 %v481, 0.17677669
        %v520 = vmul.f32 %v484, 0.17677669
        %v521 = vmul.f32 %v486, 0.17677669
        %v522 = vmul.f32 %v489, 0.17677669
        %v523 = vmul.f32 %v491, 0.17677669
        %v524 = vmul.f32 %v494, 0.17677669
        %v525 = vmul.f32 %v496, 0.17677669
        %v526 = vmul.f32 %v499, 0.17677669
        %v527 = vmul.f32 %v501, 0.17677669
        %v528 = vmul.f32 %v504, 0.17677669
        %v529 = vmul.f32 %v506, 0.17677669
        %v530 = vmul.f32 %v509, 0.17677669
        %v531 = vmul.f32 %v511, 0.17677669
        %v532 = vmul.f32 %v514, 0.17677669
        %v533 = vmul.f32 %v516, 0.17677669
        %v534 = vld [vmem:[%s3] sm:$0xff]
        %v535 = vld [vmem:[%s3 + $0x8] sm:$0xff]
        %v536 = vld [vmem:[%s3 + $0x10] sm:$0xff]
        %v537 = vld [vmem:[%s3 + $0x18] sm:$0xff]
        %v538 = vld [vmem:[%s3 + $0x20] sm:$0xff]
        %v539 = vld [vmem:[%s3 + $0x28] sm:$0xff]
        %v540 = vld [vmem:[%s3 + $0x30] sm:$0xff]
        %v541 = vld [vmem:[%s3 + $0x38] sm:$0xff]
        %v542 = vld [vmem:[%s3 + $0x40] sm:$0xff]
        %v543 = vld [vmem:[%s3 + $0x48] sm:$0xff]
        %v544 = vld [vmem:[%s3 + $0x50] sm:$0xff]
        %v545 = vld [vmem:[%s3 + $0x58] sm:$0xff]
        %v546 = vld [vmem:[%s3 + $0x60] sm:$0xff]
        %v547 = vld [vmem:[%s3 + $0x68] sm:$0xff]
        %v548 = vld [vmem:[%s3 + $0x70] sm:$0xff]
        %v549 = vld [vmem:[%s3 + $0x78] sm:$0xff]
        %v550 = vadd.f32 %v518, %v534
        %v551 = vadd.f32 %v519, %v535
        %v552 = vadd.f32 %v520, %v536
        %v553 = vadd.f32 %v521, %v537
        %v554 = vadd.f32 %v522, %v538
        %v555 = vadd.f32 %v523, %v539
        %v556 = vadd.f32 %v524, %v540
        %v557 = vadd.f32 %v525, %v541
        %v558 = vadd.f32 %v526, %v542
        %v559 = vadd.f32 %v527, %v543
        %v560 = vadd.f32 %v528, %v544
        %v561 = vadd.f32 %v529, %v545
        %v562 = vadd.f32 %v530, %v546
        %v563 = vadd.f32 %v531, %v547
        %v564 = vadd.f32 %v532, %v548
        %v565 = vadd.f32 %v533, %v549
        %566 = vmax.xlane.f32.xlu0 %v550
        %v567 = vpop.xlane.xlu0 %566
        %568 = vmax.xlane.f32.xlu0 %v551
        %v569 = vpop.xlane.xlu0 %568
        %570 = vmax.xlane.f32.xlu0 %v552
        %v571 = vpop.xlane.xlu0 %570
        %572 = vmax.xlane.f32.xlu0 %v553
        %v573 = vpop.xlane.xlu0 %572
        %574 = vmax.xlane.f32.xlu0 %v554
        %v575 = vpop.xlane.xlu0 %574
        %576 = vmax.xlane.f32.xlu0 %v555
        %v577 = vpop.xlane.xlu0 %576
        %578 = vmax.xlane.f32.xlu0 %v556
        %v579 = vpop.xlane.xlu0 %578
        %580 = vmax.xlane.f32.xlu0 %v557
        %v581 = vpop.xlane.xlu0 %580
        %582 = vmax.xlane.f32.xlu0 %v558
        %v583 = vpop.xlane.xlu0 %582
        %584 = vmax.xlane.f32.xlu0 %v559
        %v585 = vpop.xlane.xlu0 %584
        %586 = vmax.xlane.f32.xlu0 %v560
        %v587 = vpop.xlane.xlu0 %586
        %588 = vmax.xlane.f32.xlu0 %v561
        %v589 = vpop.xlane.xlu0 %588
        %590 = vmax.xlane.f32.xlu0 %v562
        %v591 = vpop.xlane.xlu0 %590
        %592 = vmax.xlane.f32.xlu0 %v563
        %v593 = vpop.xlane.xlu0 %592
        %594 = vmax.xlane.f32.xlu0 %v564
        %v595 = vpop.xlane.xlu0 %594
        %596 = vmax.xlane.f32.xlu0 %v565
        %v597 = vpop.xlane.xlu0 %596
        %v598 = vsub.f32 %v550, %v567
        %v599 = vsub.f32 %v551, %v569
        %v600 = vsub.f32 %v552, %v571
        %v601 = vsub.f32 %v553, %v573
        %v602 = vsub.f32 %v554, %v575
        %v603 = vsub.f32 %v555, %v577
        %v604 = vsub.f32 %v556, %v579
        %v605 = vsub.f32 %v557, %v581
        %v606 = vsub.f32 %v558, %v583
        %v607 = vsub.f32 %v559, %v585
        %v608 = vsub.f32 %v560, %v587
        %v609 = vsub.f32 %v561, %v589
        %v610 = vsub.f32 %v562, %v591
        %v611 = vsub.f32 %v563, %v593
        %v612 = vsub.f32 %v564, %v595
        %v613 = vsub.f32 %v565, %v597
        %v614 = vmul.f32 %v598, 1.442695
        %v615 = vpow.pop %v614
        %v616 = vmul.f32 %v599, 1.442695
        %v617 = vpow.pop %v616
        %v618 = vmul.f32 %v600, 1.442695
        %v619 = vpow.pop %v618
        %v620 = vmul.f32 %v601, 1.442695
        %v621 = vpow.pop %v620
        %v622 = vmul.f32 %v602, 1.442695
        %v623 = vpow.pop %v622
        %v624 = vmul.f32 %v603, 1.442695
        %v625 = vpow.pop %v624
        %v626 = vmul.f32 %v604, 1.442695
        %v627 = vpow.pop %v626
        %v628 = vmul.f32 %v605, 1.442695
        %v629 = vpow.pop %v628
        %v630 = vmul.f32 %v606, 1.442695
        %v631 = vpow.pop %v630
        %v632 = vmul.f32 %v607, 1.442695
        %v633 = vpow.pop %v632
        %v634 = vmul.f32 %v608, 1.442695
        %v635 = vpow.pop %v634
        %v636 = vmul.f32 %v609, 1.442695
        %v637 = vpow.pop %v636
        %v638 = vmul.f32 %v610, 1.442695
        %v639 = vpow.pop %v638
        %v640 = vmul.f32 %v611, 1.442695
        %v641 = vpow.pop %v640
        %v642 = vmul.f32 %v612, 1.442695
        %v643 = vpow.pop %v642
        %v644 = vmul.f32 %v613, 1.442695
        %v645 = vpow.pop %v644
        %646 = vadd.xlane.f32.xlu0 %v615
        %v647 = vpop.xlane.xlu0 %646
        %648 = vadd.xlane.f32.xlu0 %v617
        %v649 = vpop.xlane.xlu0 %648
        %650 = vadd.xlane.f32.xlu0 %v619
        %v651 = vpop.xlane.xlu0 %650
        %652 = vadd.xlane.f32.xlu0 %v621
        %v653 = vpop.xlane.xlu0 %652
        %654 = vadd.xlane.f32.xlu0 %v623
        %v655 = vpop.xlane.xlu0 %654
        %656 = vadd.xlane.f32.xlu0 %v625
        %v657 = vpop.xlane.xlu0 %656
        %658 = vadd.xlane.f32.xlu0 %v627
        %v659 = vpop.xlane.xlu0 %658
        %660 = vadd.xlane.f32.xlu0 %v629
        %v661 = vpop.xlane.xlu0 %660
        %662 = vadd.xlane.f32.xlu0 %v631
        %v663 = vpop.xlane.xlu0 %662
        %664 = vadd.xlane.f32.xlu0 %v633
        %v665 = vpop.xlane.xlu0 %664
        %666 = vadd.xlane.f32.xlu0 %v635
        %v667 = vpop.xlane.xlu0 %666
        %668 = vadd.xlane.f32.xlu0 %v637
        %v669 = vpop.xlane.xlu0 %668
        %670 = vadd.xlane.f32.xlu0 %v639
        %v671 = vpop.xlane.xlu0 %670
        %672 = vadd.xlane.f32.xlu0 %v641
        %v673 = vpop.xlane.xlu0 %672
        %674 = vadd.xlane.f32.xlu0 %v643
        %v675 = vpop.xlane.xlu0 %674
        %676 = vadd.xlane.f32.xlu0 %v645
        %v677 = vpop.xlane.xlu0 %676
        %v678 = vrcp.pop %v647
        %v679 = vrcp.pop %v649
        %v680 = vrcp.pop %v651
        %v681 = vrcp.pop %v653
        %v682 = vrcp.pop %v655
        %v683 = vrcp.pop %v657
        %v684 = vrcp.pop %v659
        %v685 = vrcp.pop %v661
        %v686 = vrcp.pop %v663
        %v687 = vrcp.pop %v665
        %v688 = vrcp.pop %v667
        %v689 = vrcp.pop %v669
        %v690 = vrcp.pop %v671
        %v691 = vrcp.pop %v673
        %v692 = vrcp.pop %v675
        %v693 = vrcp.pop %v677
        %v694 = vmul.f32 %v615, %v678
        %v695 = vmul.f32 %v617, %v679
        %v696 = vmul.f32 %v619, %v680
        %v697 = vmul.f32 %v621, %v681
        %v698 = vmul.f32 %v623, %v682
        %v699 = vmul.f32 %v625, %v683
        %v700 = vmul.f32 %v627, %v684
        %v701 = vmul.f32 %v629, %v685
        %v702 = vmul.f32 %v631, %v686
        %v703 = vmul.f32 %v633, %v687
        %v704 = vmul.f32 %v635, %v688
        %v705 = vmul.f32 %v637, %v689
        %v706 = vmul.f32 %v639, %v690
        %v707 = vmul.f32 %v641, %v691
        %v708 = vmul.f32 %v643, %v692
        %v709 = vmul.f32 %v645, %v693
        %v710 = vpack.c.bf16 %v695, %v694
        %v711 = vpack.c.bf16 %v697, %v696
        %v712 = vpack.c.bf16 %v699, %v698
        %v713 = vpack.c.bf16 %v701, %v700
        %v714 = vpack.c.bf16 %v703, %v702
        %v715 = vpack.c.bf16 %v705, %v704
        %v716 = vpack.c.bf16 %v707, %v706
        %v717 = vpack.c.bf16 %v709, %v708
        %v734 = vunpack.c.l.b16 %v324
        %v735 = vunpack.c.l.b16 %v325
        %v736 = vunpack.c.l.b16 %v326
        %v737 = vunpack.c.l.b16 %v327
        %v738 = vunpack.c.l.b16 %v328
        %v739 = vunpack.c.l.b16 %v329
        %v740 = vunpack.c.l.b16 %v330
        %v741 = vunpack.c.l.b16 %v331
        %v742 = vunpack.c.l.b16 %v332
        %v743 = vunpack.c.l.b16 %v333
        %v744 = vunpack.c.l.b16 %v334
        %v745 = vunpack.c.l.b16 %v335
        %v746 = vunpack.c.l.b16 %v336
        %v747 = vunpack.c.l.b16 %v337
        %v748 = vunpack.c.l.b16 %v338
        %v749 = vunpack.c.l.b16 %v339
        %v750 = vpack.c.b16 %v735, %v734
        %v751 = vpack.c.b16 %v737, %v736
        %v752 = vpack.c.b16 %v739, %v738
        %v753 = vpack.c.b16 %v741, %v740
        %v754 = vpack.c.b16 %v743, %v742
        %v755 = vpack.c.b16 %v745, %v744
        %v756 = vpack.c.b16 %v747, %v746
        %v757 = vpack.c.b16 %v749, %v748
        %766 = vmatpush.bf16.msra.mxu0 %v757
        %767 = vmatpush.bf16.msra.mxu0 %v756
        %768 = vmatpush.bf16.msra.mxu0 %v755
        %769 = vmatpush.bf16.msra.mxu0 %v754
        %770 = vmatpush.bf16.msra.mxu0 %v753
        %771 = vmatpush.bf16.msra.mxu0 %v752
        %772 = vmatpush.bf16.msra.mxu0 %v751
        %773 = vmatpush.bf16.msra.mxu0 %v750
        %774 = vmatmul.bf16.gmra.mxu0 %v710
        %v775 = vpop.f32.mrf.mxu0
        %v776 = vadd.f32 0.0, %v775
        %v777 = vpop.f32.mrf.mxu0
        %v778 = vadd.f32 0.0, %v777
        %779 = vmatmul.bf16.gmra.mxu0 %v711
        %v780 = vpop.f32.mrf.mxu0
        %v781 = vadd.f32 0.0, %v780
        %v782 = vpop.f32.mrf.mxu0
        %v783 = vadd.f32 0.0, %v782
        %784 = vmatmul.bf16.gmra.mxu0 %v712
        %v785 = vpop.f32.mrf.mxu0
        %v786 = vadd.f32 0.0, %v785
        %v787 = vpop.f32.mrf.mxu0
        %v788 = vadd.f32 0.0, %v787
        %789 = vmatmul.bf16.gmra.mxu0 %v713
        %v790 = vpop.f32.mrf.mxu0
        %v791 = vadd.f32 0.0, %v790
        %v792 = vpop.f32.mrf.mxu0
        %v793 = vadd.f32 0.0, %v792
        %794 = vmatmul.bf16.gmra.mxu0 %v714
        %v795 = vpop.f32.mrf.mxu0
        %v796 = vadd.f32 0.0, %v795
        %v797 = vpop.f32.mrf.mxu0
        %v798 = vadd.f32 0.0, %v797
        %799 = vmatmul.bf16.gmra.mxu0 %v715
        %v800 = vpop.f32.mrf.mxu0
        %v801 = vadd.f32 0.0, %v800
        %v802 = vpop.f32.mrf.mxu0
        %v803 = vadd.f32 0.0, %v802
        %804 = vmatmul.bf16.gmra.mxu0 %v716
        %v805 = vpop.f32.mrf.mxu0
        %v806 = vadd.f32 0.0, %v805
        %v807 = vpop.f32.mrf.mxu0
        %v808 = vadd.f32 0.0, %v807
        %809 = vmatmul.bf16.gmra.mxu0 %v717
        %v810 = vpop.f32.mrf.mxu0
        %v811 = vadd.f32 0.0, %v810
        %v812 = vpop.f32.mrf.mxu0
        %v813 = vadd.f32 0.0, %v812
        %814 = vdwg.mxu0
        %v815 = vpack.c.bf16 %v778, %v776
        %v816 = vpack.c.bf16 %v783, %v781
        %v817 = vld [vmem:[%s4] sm:$0xf]
        %v818 = vld [vmem:[%s4 + $0x4] sm:$0xf]
        %v819 = vld [vmem:[%s4 + $0x8] sm:$0xf]
        %v820 = vld [vmem:[%s4 + $0xc] sm:$0xf]
        %v821 = vpack.c.bf16 %v788, %v786
        %v822 = vpack.c.bf16 %v793, %v791
        %v823 = vld [vmem:[%s4 + $0x10] sm:$0xf]
        %v824 = vld [vmem:[%s4 + $0x14] sm:$0xf]
        %v825 = vld [vmem:[%s4 + $0x18] sm:$0xf]
        %v826 = vld [vmem:[%s4 + $0x1c] sm:$0xf]
        %v831 = vunpack.c.l.b16 %v823
        %v832 = vunpack.c.l.b16 %v824
        %v833 = vunpack.c.l.b16 %v825
        %v834 = vunpack.c.l.b16 %v826
        %v835 = vpack.c.b16 %v832, %v831
        %v836 = vpack.c.b16 %v834, %v833
        %v840 = vsel %vm420, %v821, 0
        %v843 = vsel %vm420, %v822, 0
        %845 = vmatpush.bf16.msra.mxu0 0
        %846 = vmatpush.bf16.msra.mxu0 0
        %847 = vmatpush.bf16.msra.mxu0 0
        %848 = vmatpush.bf16.msra.mxu0 0
        %849 = vmatpush.bf16.msra.mxu0 0
        %850 = vmatpush.bf16.msra.mxu0 0
        %851 = vmatpush.bf16.msra.mxu0 %v836
        %852 = vmatpush.bf16.msra.mxu0 %v835
        %853 = vmatmul.bf16.gmra.mxu0 %v840
        %v854 = vpop.f32.mrf.mxu0
        %v855 = vadd.f32 0.0, %v854
        %v856 = vpop.f32.mrf.mxu0
        %v857 = vadd.f32 0.0, %v856
        %858 = vmatmul.bf16.gmra.mxu0 %v843
        %v859 = vpop.f32.mrf.mxu0
        %v860 = vadd.f32 0.0, %v859
        %v861 = vpop.f32.mrf.mxu0
        %v862 = vadd.f32 0.0, %v861
        %863 = vdwg.mxu0
        %v868 = vunpack.c.l.b16 %v817
        %v869 = vunpack.c.l.b16 %v818
        %v870 = vunpack.c.l.b16 %v819
        %v871 = vunpack.c.l.b16 %v820
        %v872 = vpack.c.b16 %v869, %v868
        %v873 = vpack.c.b16 %v871, %v870
        %v877 = vsel %vm420, %v815, 0
        %v880 = vsel %vm420, %v816, 0
        %882 = vmatpush.bf16.msra.mxu0 0
        %883 = vmatpush.bf16.msra.mxu0 0
        %884 = vmatpush.bf16.msra.mxu0 0
        %885 = vmatpush.bf16.msra.mxu0 0
        %886 = vmatpush.bf16.msra.mxu0 0
        %887 = vmatpush.bf16.msra.mxu0 0
        %888 = vmatpush.bf16.msra.mxu0 %v873
        %889 = vmatpush.bf16.msra.mxu0 %v872
        %890 = vmatmul.bf16.gmra.mxu0 %v877
        %v891 = vpop.f32.mrf.mxu0
        %v892 = vadd.f32 %v855, %v891
        %v893 = vpop.f32.mrf.mxu0
        %v894 = vadd.f32 %v857, %v893
        %895 = vmatmul.bf16.gmra.mxu0 %v880
        %v896 = vpop.f32.mrf.mxu0
        %v897 = vadd.f32 %v860, %v896
        %v898 = vpop.f32.mrf.mxu0
        %v899 = vadd.f32 %v862, %v898
        %900 = vdwg.mxu0
        %v901 = vpack.c.bf16 %v798, %v796
        %v902 = vpack.c.bf16 %v803, %v801
        %v903 = vld [vmem:[%s4 + $0x20] sm:$0xf]
        %v904 = vld [vmem:[%s4 + $0x24] sm:$0xf]
        %v905 = vld [vmem:[%s4 + $0x28] sm:$0xf]
        %v906 = vld [vmem:[%s4 + $0x2c] sm:$0xf]
        %v911 = vunpack.c.l.b16 %v903
        %v912 = vunpack.c.l.b16 %v904
        %v913 = vunpack.c.l.b16 %v905
        %v914 = vunpack.c.l.b16 %v906
        %v915 = vpack.c.b16 %v912, %v911
        %v916 = vpack.c.b16 %v914, %v913
        %v920 = vsel %vm420, %v901, 0
        %v923 = vsel %vm420, %v902, 0
        %925 = vmatpush.bf16.msra.mxu0 0
        %926 = vmatpush.bf16.msra.mxu0 0
        %927 = vmatpush.bf16.msra.mxu0 0
        %928 = vmatpush.bf16.msra.mxu0 0
        %929 = vmatpush.bf16.msra.mxu0 0
        %930 = vmatpush.bf16.msra.mxu0 0
        %931 = vmatpush.bf16.msra.mxu0 %v916
        %932 = vmatpush.bf16.msra.mxu0 %v915
        %933 = vmatmul.bf16.gmra.mxu0 %v920
        %v934 = vpop.f32.mrf.mxu0
        %v935 = vadd.f32 0.0, %v934
        %v936 = vpop.f32.mrf.mxu0
        %v937 = vadd.f32 0.0, %v936
        %938 = vmatmul.bf16.gmra.mxu0 %v923
        %v939 = vpop.f32.mrf.mxu0
        %v940 = vadd.f32 0.0, %v939
        %v941 = vpop.f32.mrf.mxu0
        %v942 = vadd.f32 0.0, %v941
        %943 = vdwg.mxu0
        %v944 = vadd.f32 %v892, %v935
        %v945 = vadd.f32 %v894, %v937
        %v946 = vadd.f32 %v897, %v940
        %v947 = vadd.f32 %v899, %v942
        %v948 = vpack.c.bf16 %v808, %v806
        %v949 = vpack.c.bf16 %v813, %v811
        %v950 = vld [vmem:[%s4 + $0x30] sm:$0xf]
        %v951 = vld [vmem:[%s4 + $0x34] sm:$0xf]
        %v952 = vld [vmem:[%s4 + $0x38] sm:$0xf]
        %v953 = vld [vmem:[%s4 + $0x3c] sm:$0xf]
        %v958 = vunpack.c.l.b16 %v950
        %v959 = vunpack.c.l.b16 %v951
        %v960 = vunpack.c.l.b16 %v952
        %v961 = vunpack.c.l.b16 %v953
        %v962 = vpack.c.b16 %v959, %v958
        %v963 = vpack.c.b16 %v961, %v960
        %v967 = vsel %vm420, %v948, 0
        %v970 = vsel %vm420, %v949, 0
        %972 = vmatpush.bf16.msra.mxu0 0
        %973 = vmatpush.bf16.msra.mxu0 0
        %974 = vmatpush.bf16.msra.mxu0 0
        %975 = vmatpush.bf16.msra.mxu0 0
        %976 = vmatpush.bf16.msra.mxu0 0
        %977 = vmatpush.bf16.msra.mxu0 0
        %978 = vmatpush.bf16.msra.mxu0 %v963
        %979 = vmatpush.bf16.msra.mxu0 %v962
        %980 = vmatmul.bf16.gmra.mxu0 %v967
        %v981 = vpop.f32.mrf.mxu0
        %v982 = vadd.f32 0.0, %v981
        %v983 = vpop.f32.mrf.mxu0
        %v984 = vadd.f32 0.0, %v983
        %985 = vmatmul.bf16.gmra.mxu0 %v970
        %v986 = vpop.f32.mrf.mxu0
        %v987 = vadd.f32 0.0, %v986
        %v988 = vpop.f32.mrf.mxu0
        %v989 = vadd.f32 0.0, %v988
        %990 = vdwg.mxu0
        %v991 = vadd.f32 %v944, %v982
        %v992 = vadd.f32 %v945, %v984
        %v993 = vadd.f32 %v946, %v987
        %v994 = vadd.f32 %v947, %v989
        %v996 = vperm.slane %v291, 0
        %v998 = vadd.f32 %v991, %v996
        %v999 = vadd.f32 %v992, %v996
        %v1000 = vadd.f32 %v993, %v996
        %v1001 = vadd.f32 %v994, %v996
        %1002 = vst [vmem:[%s274] sm:$0xff] %v998
        %1003 = vst [vmem:[%s274 + $0x8] sm:$0xff] %v999
        %1004 = vst [vmem:[%s274 + $0x10] sm:$0xff] %v1000
        %1005 = vst [vmem:[%s274 + $0x18] sm:$0xff] %v1001
        %s1006 = scalar_lea.vmem %s279, 64
        %v1007 = vld [vmem:[%s1006] sm:$0xf]
        %v1008 = vld [vmem:[%s1006 + $0x4] sm:$0xf]
        %v1009 = vld [vmem:[%s1006 + $0x8] sm:$0xf]
        %v1010 = vld [vmem:[%s1006 + $0xc] sm:$0xf]
        %v1011 = vld [vmem:[%s1006 + $0x10] sm:$0xf]
        %v1012 = vld [vmem:[%s1006 + $0x14] sm:$0xf]
        %v1013 = vld [vmem:[%s1006 + $0x18] sm:$0xf]
        %v1014 = vld [vmem:[%s1006 + $0x1c] sm:$0xf]
        %v1015 = vld [vmem:[%s1006 + $0x20] sm:$0xf]
        %v1016 = vld [vmem:[%s1006 + $0x24] sm:$0xf]
        %v1017 = vld [vmem:[%s1006 + $0x28] sm:$0xf]
        %v1018 = vld [vmem:[%s1006 + $0x2c] sm:$0xf]
        %v1019 = vld [vmem:[%s1006 + $0x30] sm:$0xf]
        %v1020 = vld [vmem:[%s1006 + $0x34] sm:$0xf]
        %v1021 = vld [vmem:[%s1006 + $0x38] sm:$0xf]
        %v1022 = vld [vmem:[%s1006 + $0x3c] sm:$0xf]
        %s1023 = scalar_lea.vmem %s284, 64
        %v1024 = vld [vmem:[%s1023] sm:$0xf]
        %v1025 = vld [vmem:[%s1023 + $0x4] sm:$0xf]
        %v1026 = vld [vmem:[%s1023 + $0x8] sm:$0xf]
        %v1027 = vld [vmem:[%s1023 + $0xc] sm:$0xf]
        %v1028 = vld [vmem:[%s1023 + $0x10] sm:$0xf]
        %v1029 = vld [vmem:[%s1023 + $0x14] sm:$0xf]
        %v1030 = vld [vmem:[%s1023 + $0x18] sm:$0xf]
        %v1031 = vld [vmem:[%s1023 + $0x1c] sm:$0xf]
        %v1032 = vld [vmem:[%s1023 + $0x20] sm:$0xf]
        %v1033 = vld [vmem:[%s1023 + $0x24] sm:$0xf]
        %v1034 = vld [vmem:[%s1023 + $0x28] sm:$0xf]
        %v1035 = vld [vmem:[%s1023 + $0x2c] sm:$0xf]
        %v1036 = vld [vmem:[%s1023 + $0x30] sm:$0xf]
        %v1037 = vld [vmem:[%s1023 + $0x34] sm:$0xf]
        %v1038 = vld [vmem:[%s1023 + $0x38] sm:$0xf]
        %v1039 = vld [vmem:[%s1023 + $0x3c] sm:$0xf]
        %s1040 = scalar_lea.vmem %s289, 64
        %v1041 = vld [vmem:[%s1040] sm:$0xf]
        %v1042 = vld [vmem:[%s1040 + $0x4] sm:$0xf]
        %v1043 = vld [vmem:[%s1040 + $0x8] sm:$0xf]
        %v1044 = vld [vmem:[%s1040 + $0xc] sm:$0xf]
        %v1045 = vld [vmem:[%s1040 + $0x10] sm:$0xf]
        %v1046 = vld [vmem:[%s1040 + $0x14] sm:$0xf]
        %v1047 = vld [vmem:[%s1040 + $0x18] sm:$0xf]
        %v1048 = vld [vmem:[%s1040 + $0x1c] sm:$0xf]
        %v1049 = vld [vmem:[%s1040 + $0x20] sm:$0xf]
        %v1050 = vld [vmem:[%s1040 + $0x24] sm:$0xf]
        %v1051 = vld [vmem:[%s1040 + $0x28] sm:$0xf]
        %v1052 = vld [vmem:[%s1040 + $0x2c] sm:$0xf]
        %v1053 = vld [vmem:[%s1040 + $0x30] sm:$0xf]
        %v1054 = vld [vmem:[%s1040 + $0x34] sm:$0xf]
        %v1055 = vld [vmem:[%s1040 + $0x38] sm:$0xf]
        %v1056 = vld [vmem:[%s1040 + $0x3c] sm:$0xf]
        %v1073 = vunpack.c.l.b16 %v1007
        %v1074 = vunpack.c.l.b16 %v1008
        %v1075 = vunpack.c.l.b16 %v1009
        %v1076 = vunpack.c.l.b16 %v1010
        %v1077 = vunpack.c.l.b16 %v1011
        %v1078 = vunpack.c.l.b16 %v1012
        %v1079 = vunpack.c.l.b16 %v1013
        %v1080 = vunpack.c.l.b16 %v1014
        %v1081 = vunpack.c.l.b16 %v1015
        %v1082 = vunpack.c.l.b16 %v1016
        %v1083 = vunpack.c.l.b16 %v1017
        %v1084 = vunpack.c.l.b16 %v1018
        %v1085 = vunpack.c.l.b16 %v1019
        %v1086 = vunpack.c.l.b16 %v1020
        %v1087 = vunpack.c.l.b16 %v1021
        %v1088 = vunpack.c.l.b16 %v1022
        %v1089 = vpack.c.b16 %v1074, %v1073
        %v1090 = vpack.c.b16 %v1076, %v1075
        %v1091 = vpack.c.b16 %v1078, %v1077
        %v1092 = vpack.c.b16 %v1080, %v1079
        %v1093 = vpack.c.b16 %v1082, %v1081
        %v1094 = vpack.c.b16 %v1084, %v1083
        %v1095 = vpack.c.b16 %v1086, %v1085
        %v1096 = vpack.c.b16 %v1088, %v1087
        %v1113 = vunpack.c.l.b16 %v1024
        %v1114 = vunpack.c.l.b16 %v1025
        %v1115 = vunpack.c.l.b16 %v1026
        %v1116 = vunpack.c.l.b16 %v1027
        %v1117 = vunpack.c.l.b16 %v1028
        %v1118 = vunpack.c.l.b16 %v1029
        %v1119 = vunpack.c.l.b16 %v1030
        %v1120 = vunpack.c.l.b16 %v1031
        %v1121 = vunpack.c.l.b16 %v1032
        %v1122 = vunpack.c.l.b16 %v1033
        %v1123 = vunpack.c.l.b16 %v1034
        %v1124 = vunpack.c.l.b16 %v1035
        %v1125 = vunpack.c.l.b16 %v1036
        %v1126 = vunpack.c.l.b16 %v1037
        %v1127 = vunpack.c.l.b16 %v1038
        %v1128 = vunpack.c.l.b16 %v1039
        %v1129 = vpack.c.b16 %v1114, %v1113
        %v1130 = vpack.c.b16 %v1116, %v1115
        %v1131 = vpack.c.b16 %v1118, %v1117
        %v1132 = vpack.c.b16 %v1120, %v1119
        %v1133 = vpack.c.b16 %v1122, %v1121
        %v1134 = vpack.c.b16 %v1124, %v1123
        %v1135 = vpack.c.b16 %v1126, %v1125
        %v1136 = vpack.c.b16 %v1128, %v1127
        %v1138 = vsel %vm420, %v1089, 0
        %v1141 = vsel %vm420, %v1090, 0
        %v1144 = vsel %vm420, %v1091, 0
        %v1147 = vsel %vm420, %v1092, 0
        %v1150 = vsel %vm420, %v1093, 0
        %v1153 = vsel %vm420, %v1094, 0
        %v1156 = vsel %vm420, %v1095, 0
        %v1159 = vsel %vm420, %v1096, 0
        %v1162 = vsel %vm420, %v1129, 0
        %v1165 = vsel %vm420, %v1130, 0
        %v1168 = vsel %vm420, %v1131, 0
        %v1171 = vsel %vm420, %v1132, 0
        %v1174 = vsel %vm420, %v1133, 0
        %v1177 = vsel %vm420, %v1134, 0
        %v1180 = vsel %vm420, %v1135, 0
        %v1183 = vsel %vm420, %v1136, 0
        %1185 = vmatpush.bf16.xpose.msra.mxu0 %v1183
        %1186 = vmatpush.bf16.xpose.msra.mxu0 %v1180
        %1187 = vmatpush.bf16.xpose.msra.mxu0 %v1177
        %1188 = vmatpush.bf16.xpose.msra.mxu0 %v1174
        %1189 = vmatpush.bf16.xpose.msra.mxu0 %v1171
        %1190 = vmatpush.bf16.xpose.msra.mxu0 %v1168
        %1191 = vmatpush.bf16.xpose.msra.mxu0 %v1165
        %1192 = vmatpush.bf16.xpose.msra.mxu0 %v1162
        %1193 = vmatmul.bf16.gmra.mxu0 %v1138
        %v1194 = vpop.f32.mrf.mxu0
        %v1195 = vadd.f32 0.0, %v1194
        %v1196 = vpop.f32.mrf.mxu0
        %v1197 = vadd.f32 0.0, %v1196
        %1198 = vmatmul.bf16.gmra.mxu0 %v1141
        %v1199 = vpop.f32.mrf.mxu0
        %v1200 = vadd.f32 0.0, %v1199
        %v1201 = vpop.f32.mrf.mxu0
        %v1202 = vadd.f32 0.0, %v1201
        %1203 = vmatmul.bf16.gmra.mxu0 %v1144
        %v1204 = vpop.f32.mrf.mxu0
        %v1205 = vadd.f32 0.0, %v1204
        %v1206 = vpop.f32.mrf.mxu0
        %v1207 = vadd.f32 0.0, %v1206
        %1208 = vmatmul.bf16.gmra.mxu0 %v1147
        %v1209 = vpop.f32.mrf.mxu0
        %v1210 = vadd.f32 0.0, %v1209
        %v1211 = vpop.f32.mrf.mxu0
        %v1212 = vadd.f32 0.0, %v1211
        %1213 = vmatmul.bf16.gmra.mxu0 %v1150
        %v1214 = vpop.f32.mrf.mxu0
        %v1215 = vadd.f32 0.0, %v1214
        %v1216 = vpop.f32.mrf.mxu0
        %v1217 = vadd.f32 0.0, %v1216
        %1218 = vmatmul.bf16.gmra.mxu0 %v1153
        %v1219 = vpop.f32.mrf.mxu0
        %v1220 = vadd.f32 0.0, %v1219
        %v1221 = vpop.f32.mrf.mxu0
        %v1222 = vadd.f32 0.0, %v1221
        %1223 = vmatmul.bf16.gmra.mxu0 %v1156
        %v1224 = vpop.f32.mrf.mxu0
        %v1225 = vadd.f32 0.0, %v1224
        %v1226 = vpop.f32.mrf.mxu0
        %v1227 = vadd.f32 0.0, %v1226
        %1228 = vmatmul.bf16.gmra.mxu0 %v1159
        %v1229 = vpop.f32.mrf.mxu0
        %v1230 = vadd.f32 0.0, %v1229
        %v1231 = vpop.f32.mrf.mxu0
        %v1232 = vadd.f32 0.0, %v1231
        %1233 = vdwg.mxu0
        %v1234 = vmul.f32 %v1195, 0.17677669
        %v1235 = vmul.f32 %v1197, 0.17677669
        %v1236 = vmul.f32 %v1200, 0.17677669
        %v1237 = vmul.f32 %v1202, 0.17677669
        %v1238 = vmul.f32 %v1205, 0.17677669
        %v1239 = vmul.f32 %v1207, 0.17677669
        %v1240 = vmul.f32 %v1210, 0.17677669
        %v1241 = vmul.f32 %v1212, 0.17677669
        %v1242 = vmul.f32 %v1215, 0.17677669
        %v1243 = vmul.f32 %v1217, 0.17677669
        %v1244 = vmul.f32 %v1220, 0.17677669
        %v1245 = vmul.f32 %v1222, 0.17677669
        %v1246 = vmul.f32 %v1225, 0.17677669
        %v1247 = vmul.f32 %v1227, 0.17677669
        %v1248 = vmul.f32 %v1230, 0.17677669
        %v1249 = vmul.f32 %v1232, 0.17677669
        %s1250 = scalar_lea.vmem %s3, 128
        %v1251 = vld [vmem:[%s1250] sm:$0xff]
        %v1252 = vld [vmem:[%s1250 + $0x8] sm:$0xff]
        %v1253 = vld [vmem:[%s1250 + $0x10] sm:$0xff]
        %v1254 = vld [vmem:[%s1250 + $0x18] sm:$0xff]
        %v1255 = vld [vmem:[%s1250 + $0x20] sm:$0xff]
        %v1256 = vld [vmem:[%s1250 + $0x28] sm:$0xff]
        %v1257 = vld [vmem:[%s1250 + $0x30] sm:$0xff]
        %v1258 = vld [vmem:[%s1250 + $0x38] sm:$0xff]
        %v1259 = vld [vmem:[%s1250 + $0x40] sm:$0xff]
        %v1260 = vld [vmem:[%s1250 + $0x48] sm:$0xff]
        %v1261 = vld [vmem:[%s1250 + $0x50] sm:$0xff]
        %v1262 = vld [vmem:[%s1250 + $0x58] sm:$0xff]
        %v1263 = vld [vmem:[%s1250 + $0x60] sm:$0xff]
        %v1264 = vld [vmem:[%s1250 + $0x68] sm:$0xff]
        %v1265 = vld [vmem:[%s1250 + $0x70] sm:$0xff]
        %v1266 = vld [vmem:[%s1250 + $0x78] sm:$0xff]
        %v1267 = vadd.f32 %v1234, %v1251
        %v1268 = vadd.f32 %v1235, %v1252
        %v1269 = vadd.f32 %v1236, %v1253
        %v1270 = vadd.f32 %v1237, %v1254
        %v1271 = vadd.f32 %v1238, %v1255
        %v1272 = vadd.f32 %v1239, %v1256
        %v1273 = vadd.f32 %v1240, %v1257
        %v1274 = vadd.f32 %v1241, %v1258
        %v1275 = vadd.f32 %v1242, %v1259
        %v1276 = vadd.f32 %v1243, %v1260
        %v1277 = vadd.f32 %v1244, %v1261
        %v1278 = vadd.f32 %v1245, %v1262
        %v1279 = vadd.f32 %v1246, %v1263
        %v1280 = vadd.f32 %v1247, %v1264
        %v1281 = vadd.f32 %v1248, %v1265
        %v1282 = vadd.f32 %v1249, %v1266
        %1283 = vmax.xlane.f32.xlu0 %v1267
        %v1284 = vpop.xlane.xlu0 %1283
        %1285 = vmax.xlane.f32.xlu0 %v1268
        %v1286 = vpop.xlane.xlu0 %1285
        %1287 = vmax.xlane.f32.xlu0 %v1269
        %v1288 = vpop.xlane.xlu0 %1287
        %1289 = vmax.xlane.f32.xlu0 %v1270
        %v1290 = vpop.xlane.xlu0 %1289
        %1291 = vmax.xlane.f32.xlu0 %v1271
        %v1292 = vpop.xlane.xlu0 %1291
        %1293 = vmax.xlane.f32.xlu0 %v1272
        %v1294 = vpop.xlane.xlu0 %1293
        %1295 = vmax.xlane.f32.xlu0 %v1273
        %v1296 = vpop.xlane.xlu0 %1295
        %1297 = vmax.xlane.f32.xlu0 %v1274
        %v1298 = vpop.xlane.xlu0 %1297
        %1299 = vmax.xlane.f32.xlu0 %v1275
        %v1300 = vpop.xlane.xlu0 %1299
        %1301 = vmax.xlane.f32.xlu0 %v1276
        %v1302 = vpop.xlane.xlu0 %1301
        %1303 = vmax.xlane.f32.xlu0 %v1277
        %v1304 = vpop.xlane.xlu0 %1303
        %1305 = vmax.xlane.f32.xlu0 %v1278
        %v1306 = vpop.xlane.xlu0 %1305
        %1307 = vmax.xlane.f32.xlu0 %v1279
        %v1308 = vpop.xlane.xlu0 %1307
        %1309 = vmax.xlane.f32.xlu0 %v1280
        %v1310 = vpop.xlane.xlu0 %1309
        %1311 = vmax.xlane.f32.xlu0 %v1281
        %v1312 = vpop.xlane.xlu0 %1311
        %1313 = vmax.xlane.f32.xlu0 %v1282
        %v1314 = vpop.xlane.xlu0 %1313
        %v1315 = vsub.f32 %v1267, %v1284
        %v1316 = vsub.f32 %v1268, %v1286
        %v1317 = vsub.f32 %v1269, %v1288
        %v1318 = vsub.f32 %v1270, %v1290
        %v1319 = vsub.f32 %v1271, %v1292
        %v1320 = vsub.f32 %v1272, %v1294
        %v1321 = vsub.f32 %v1273, %v1296
        %v1322 = vsub.f32 %v1274, %v1298
        %v1323 = vsub.f32 %v1275, %v1300
        %v1324 = vsub.f32 %v1276, %v1302
        %v1325 = vsub.f32 %v1277, %v1304
        %v1326 = vsub.f32 %v1278, %v1306
        %v1327 = vsub.f32 %v1279, %v1308
        %v1328 = vsub.f32 %v1280, %v1310
        %v1329 = vsub.f32 %v1281, %v1312
        %v1330 = vsub.f32 %v1282, %v1314
        %v1331 = vmul.f32 %v1315, 1.442695
        %v1332 = vpow.pop %v1331
        %v1333 = vmul.f32 %v1316, 1.442695
        %v1334 = vpow.pop %v1333
        %v1335 = vmul.f32 %v1317, 1.442695
        %v1336 = vpow.pop %v1335
        %v1337 = vmul.f32 %v1318, 1.442695
        %v1338 = vpow.pop %v1337
        %v1339 = vmul.f32 %v1319, 1.442695
        %v1340 = vpow.pop %v1339
        %v1341 = vmul.f32 %v1320, 1.442695
        %v1342 = vpow.pop %v1341
        %v1343 = vmul.f32 %v1321, 1.442695
        %v1344 = vpow.pop %v1343
        %v1345 = vmul.f32 %v1322, 1.442695
        %v1346 = vpow.pop %v1345
        %v1347 = vmul.f32 %v1323, 1.442695
        %v1348 = vpow.pop %v1347
        %v1349 = vmul.f32 %v1324, 1.442695
        %v1350 = vpow.pop %v1349
        %v1351 = vmul.f32 %v1325, 1.442695
        %v1352 = vpow.pop %v1351
        %v1353 = vmul.f32 %v1326, 1.442695
        %v1354 = vpow.pop %v1353
        %v1355 = vmul.f32 %v1327, 1.442695
        %v1356 = vpow.pop %v1355
        %v1357 = vmul.f32 %v1328, 1.442695
        %v1358 = vpow.pop %v1357
        %v1359 = vmul.f32 %v1329, 1.442695
        %v1360 = vpow.pop %v1359
        %v1361 = vmul.f32 %v1330, 1.442695
        %v1362 = vpow.pop %v1361
        %1363 = vadd.xlane.f32.xlu0 %v1332
        %v1364 = vpop.xlane.xlu0 %1363
        %1365 = vadd.xlane.f32.xlu0 %v1334
        %v1366 = vpop.xlane.xlu0 %1365
        %1367 = vadd.xlane.f32.xlu0 %v1336
        %v1368 = vpop.xlane.xlu0 %1367
        %1369 = vadd.xlane.f32.xlu0 %v1338
        %v1370 = vpop.xlane.xlu0 %1369
        %1371 = vadd.xlane.f32.xlu0 %v1340
        %v1372 = vpop.xlane.xlu0 %1371
        %1373 = vadd.xlane.f32.xlu0 %v1342
        %v1374 = vpop.xlane.xlu0 %1373
        %1375 = vadd.xlane.f32.xlu0 %v1344
        %v1376 = vpop.xlane.xlu0 %1375
        %1377 = vadd.xlane.f32.xlu0 %v1346
        %v1378 = vpop.xlane.xlu0 %1377
        %1379 = vadd.xlane.f32.xlu0 %v1348
        %v1380 = vpop.xlane.xlu0 %1379
        %1381 = vadd.xlane.f32.xlu0 %v1350
        %v1382 = vpop.xlane.xlu0 %1381
        %1383 = vadd.xlane.f32.xlu0 %v1352
        %v1384 = vpop.xlane.xlu0 %1383
        %1385 = vadd.xlane.f32.xlu0 %v1354
        %v1386 = vpop.xlane.xlu0 %1385
        %1387 = vadd.xlane.f32.xlu0 %v1356
        %v1388 = vpop.xlane.xlu0 %1387
        %1389 = vadd.xlane.f32.xlu0 %v1358
        %v1390 = vpop.xlane.xlu0 %1389
        %1391 = vadd.xlane.f32.xlu0 %v1360
        %v1392 = vpop.xlane.xlu0 %1391
        %1393 = vadd.xlane.f32.xlu0 %v1362
        %v1394 = vpop.xlane.xlu0 %1393
        %v1395 = vrcp.pop %v1364
        %v1396 = vrcp.pop %v1366
        %v1397 = vrcp.pop %v1368
        %v1398 = vrcp.pop %v1370
        %v1399 = vrcp.pop %v1372
        %v1400 = vrcp.pop %v1374
        %v1401 = vrcp.pop %v1376
        %v1402 = vrcp.pop %v1378
        %v1403 = vrcp.pop %v1380
        %v1404 = vrcp.pop %v1382
        %v1405 = vrcp.pop %v1384
        %v1406 = vrcp.pop %v1386
        %v1407 = vrcp.pop %v1388
        %v1408 = vrcp.pop %v1390
        %v1409 = vrcp.pop %v1392
        %v1410 = vrcp.pop %v1394
        %v1411 = vmul.f32 %v1332, %v1395
        %v1412 = vmul.f32 %v1334, %v1396
        %v1413 = vmul.f32 %v1336, %v1397
        %v1414 = vmul.f32 %v1338, %v1398
        %v1415 = vmul.f32 %v1340, %v1399
        %v1416 = vmul.f32 %v1342, %v1400
        %v1417 = vmul.f32 %v1344, %v1401
        %v1418 = vmul.f32 %v1346, %v1402
        %v1419 = vmul.f32 %v1348, %v1403
        %v1420 = vmul.f32 %v1350, %v1404
        %v1421 = vmul.f32 %v1352, %v1405
        %v1422 = vmul.f32 %v1354, %v1406
        %v1423 = vmul.f32 %v1356, %v1407
        %v1424 = vmul.f32 %v1358, %v1408
        %v1425 = vmul.f32 %v1360, %v1409
        %v1426 = vmul.f32 %v1362, %v1410
        %v1427 = vpack.c.bf16 %v1412, %v1411
        %v1428 = vpack.c.bf16 %v1414, %v1413
        %v1429 = vpack.c.bf16 %v1416, %v1415
        %v1430 = vpack.c.bf16 %v1418, %v1417
        %v1431 = vpack.c.bf16 %v1420, %v1419
        %v1432 = vpack.c.bf16 %v1422, %v1421
        %v1433 = vpack.c.bf16 %v1424, %v1423
        %v1434 = vpack.c.bf16 %v1426, %v1425
        %v1451 = vunpack.c.l.b16 %v1041
        %v1452 = vunpack.c.l.b16 %v1042
        %v1453 = vunpack.c.l.b16 %v1043
        %v1454 = vunpack.c.l.b16 %v1044
        %v1455 = vunpack.c.l.b16 %v1045
        %v1456 = vunpack.c.l.b16 %v1046
        %v1457 = vunpack.c.l.b16 %v1047
        %v1458 = vunpack.c.l.b16 %v1048
        %v1459 = vunpack.c.l.b16 %v1049
        %v1460 = vunpack.c.l.b16 %v1050
        %v1461 = vunpack.c.l.b16 %v1051
        %v1462 = vunpack.c.l.b16 %v1052
        %v1463 = vunpack.c.l.b16 %v1053
        %v1464 = vunpack.c.l.b16 %v1054
        %v1465 = vunpack.c.l.b16 %v1055
        %v1466 = vunpack.c.l.b16 %v1056
        %v1467 = vpack.c.b16 %v1452, %v1451
        %v1468 = vpack.c.b16 %v1454, %v1453
        %v1469 = vpack.c.b16 %v1456, %v1455
        %v1470 = vpack.c.b16 %v1458, %v1457
        %v1471 = vpack.c.b16 %v1460, %v1459
        %v1472 = vpack.c.b16 %v1462, %v1461
        %v1473 = vpack.c.b16 %v1464, %v1463
        %v1474 = vpack.c.b16 %v1466, %v1465
        %1483 = vmatpush.bf16.msra.mxu0 %v1474
        %1484 = vmatpush.bf16.msra.mxu0 %v1473
        %1485 = vmatpush.bf16.msra.mxu0 %v1472
        %1486 = vmatpush.bf16.msra.mxu0 %v1471
        %1487 = vmatpush.bf16.msra.mxu0 %v1470
        %1488 = vmatpush.bf16.msra.mxu0 %v1469
        %1489 = vmatpush.bf16.msra.mxu0 %v1468
        %1490 = vmatpush.bf16.msra.mxu0 %v1467
        %1491 = vmatmul.bf16.gmra.mxu0 %v1427
        %v1492 = vpop.f32.mrf.mxu0
        %v1493 = vadd.f32 0.0, %v1492
        %v1494 = vpop.f32.mrf.mxu0
        %v1495 = vadd.f32 0.0, %v1494
        %1496 = vmatmul.bf16.gmra.mxu0 %v1428
        %v1497 = vpop.f32.mrf.mxu0
        %v1498 = vadd.f32 0.0, %v1497
        %v1499 = vpop.f32.mrf.mxu0
        %v1500 = vadd.f32 0.0, %v1499
        %1501 = vmatmul.bf16.gmra.mxu0 %v1429
        %v1502 = vpop.f32.mrf.mxu0
        %v1503 = vadd.f32 0.0, %v1502
        %v1504 = vpop.f32.mrf.mxu0
        %v1505 = vadd.f32 0.0, %v1504
        %1506 = vmatmul.bf16.gmra.mxu0 %v1430
        %v1507 = vpop.f32.mrf.mxu0
        %v1508 = vadd.f32 0.0, %v1507
        %v1509 = vpop.f32.mrf.mxu0
        %v1510 = vadd.f32 0.0, %v1509
        %1511 = vmatmul.bf16.gmra.mxu0 %v1431
        %v1512 = vpop.f32.mrf.mxu0
        %v1513 = vadd.f32 0.0, %v1512
        %v1514 = vpop.f32.mrf.mxu0
        %v1515 = vadd.f32 0.0, %v1514
        %1516 = vmatmul.bf16.gmra.mxu0 %v1432
        %v1517 = vpop.f32.mrf.mxu0
        %v1518 = vadd.f32 0.0, %v1517
        %v1519 = vpop.f32.mrf.mxu0
        %v1520 = vadd.f32 0.0, %v1519
        %1521 = vmatmul.bf16.gmra.mxu0 %v1433
        %v1522 = vpop.f32.mrf.mxu0
        %v1523 = vadd.f32 0.0, %v1522
        %v1524 = vpop.f32.mrf.mxu0
        %v1525 = vadd.f32 0.0, %v1524
        %1526 = vmatmul.bf16.gmra.mxu0 %v1434
        %v1527 = vpop.f32.mrf.mxu0
        %v1528 = vadd.f32 0.0, %v1527
        %v1529 = vpop.f32.mrf.mxu0
        %v1530 = vadd.f32 0.0, %v1529
        %1531 = vdwg.mxu0
        %v1532 = vpack.c.bf16 %v1495, %v1493
        %v1533 = vpack.c.bf16 %v1500, %v1498
        %v1534 = vld [vmem:[%s4] sm:$0xf]
        %v1535 = vld [vmem:[%s4 + $0x4] sm:$0xf]
        %v1536 = vld [vmem:[%s4 + $0x8] sm:$0xf]
        %v1537 = vld [vmem:[%s4 + $0xc] sm:$0xf]
        %v1538 = vpack.c.bf16 %v1505, %v1503
        %v1539 = vpack.c.bf16 %v1510, %v1508
        %v1540 = vld [vmem:[%s4 + $0x10] sm:$0xf]
        %v1541 = vld [vmem:[%s4 + $0x14] sm:$0xf]
        %v1542 = vld [vmem:[%s4 + $0x18] sm:$0xf]
        %v1543 = vld [vmem:[%s4 + $0x1c] sm:$0xf]
        %v1548 = vunpack.c.l.b16 %v1540
        %v1549 = vunpack.c.l.b16 %v1541
        %v1550 = vunpack.c.l.b16 %v1542
        %v1551 = vunpack.c.l.b16 %v1543
        %v1552 = vpack.c.b16 %v1549, %v1548
        %v1553 = vpack.c.b16 %v1551, %v1550
        %v1557 = vsel %vm420, %v1538, 0
        %v1560 = vsel %vm420, %v1539, 0
        %1562 = vmatpush.bf16.msra.mxu0 0
        %1563 = vmatpush.bf16.msra.mxu0 0
        %1564 = vmatpush.bf16.msra.mxu0 0
        %1565 = vmatpush.bf16.msra.mxu0 0
        %1566 = vmatpush.bf16.msra.mxu0 0
        %1567 = vmatpush.bf16.msra.mxu0 0
        %1568 = vmatpush.bf16.msra.mxu0 %v1553
        %1569 = vmatpush.bf16.msra.mxu0 %v1552
        %1570 = vmatmul.bf16.gmra.mxu0 %v1557
        %v1571 = vpop.f32.mrf.mxu0
        %v1572 = vadd.f32 0.0, %v1571
        %v1573 = vpop.f32.mrf.mxu0
        %v1574 = vadd.f32 0.0, %v1573
        %1575 = vmatmul.bf16.gmra.mxu0 %v1560
        %v1576 = vpop.f32.mrf.mxu0
        %v1577 = vadd.f32 0.0, %v1576
        %v1578 = vpop.f32.mrf.mxu0
        %v1579 = vadd.f32 0.0, %v1578
        %1580 = vdwg.mxu0
        %v1585 = vunpack.c.l.b16 %v1534
        %v1586 = vunpack.c.l.b16 %v1535
        %v1587 = vunpack.c.l.b16 %v1536
        %v1588 = vunpack.c.l.b16 %v1537
        %v1589 = vpack.c.b16 %v1586, %v1585
        %v1590 = vpack.c.b16 %v1588, %v1587
        %v1594 = vsel %vm420, %v1532, 0
        %v1597 = vsel %vm420, %v1533, 0
        %1599 = vmatpush.bf16.msra.mxu0 0
        %1600 = vmatpush.bf16.msra.mxu0 0
        %1601 = vmatpush.bf16.msra.mxu0 0
        %1602 = vmatpush.bf16.msra.mxu0 0
        %1603 = vmatpush.bf16.msra.mxu0 0
        %1604 = vmatpush.bf16.msra.mxu0 0
        %1605 = vmatpush.bf16.msra.mxu0 %v1590
        %1606 = vmatpush.bf16.msra.mxu0 %v1589
        %1607 = vmatmul.bf16.gmra.mxu0 %v1594
        %v1608 = vpop.f32.mrf.mxu0
        %v1609 = vadd.f32 %v1572, %v1608
        %v1610 = vpop.f32.mrf.mxu0
        %v1611 = vadd.f32 %v1574, %v1610
        %1612 = vmatmul.bf16.gmra.mxu0 %v1597
        %v1613 = vpop.f32.mrf.mxu0
        %v1614 = vadd.f32 %v1577, %v1613
        %v1615 = vpop.f32.mrf.mxu0
        %v1616 = vadd.f32 %v1579, %v1615
        %1617 = vdwg.mxu0
        %v1618 = vpack.c.bf16 %v1515, %v1513
        %v1619 = vpack.c.bf16 %v1520, %v1518
        %v1620 = vld [vmem:[%s4 + $0x20] sm:$0xf]
        %v1621 = vld [vmem:[%s4 + $0x24] sm:$0xf]
        %v1622 = vld [vmem:[%s4 + $0x28] sm:$0xf]
        %v1623 = vld [vmem:[%s4 + $0x2c] sm:$0xf]
        %v1628 = vunpack.c.l.b16 %v1620
        %v1629 = vunpack.c.l.b16 %v1621
        %v1630 = vunpack.c.l.b16 %v1622
        %v1631 = vunpack.c.l.b16 %v1623
        %v1632 = vpack.c.b16 %v1629, %v1628
        %v1633 = vpack.c.b16 %v1631, %v1630
        %v1637 = vsel %vm420, %v1618, 0
        %v1640 = vsel %vm420, %v1619, 0
        %1642 = vmatpush.bf16.msra.mxu0 0
        %1643 = vmatpush.bf16.msra.mxu0 0
        %1644 = vmatpush.bf16.msra.mxu0 0
        %1645 = vmatpush.bf16.msra.mxu0 0
        %1646 = vmatpush.bf16.msra.mxu0 0
        %1647 = vmatpush.bf16.msra.mxu0 0
        %1648 = vmatpush.bf16.msra.mxu0 %v1633
        %1649 = vmatpush.bf16.msra.mxu0 %v1632
        %1650 = vmatmul.bf16.gmra.mxu0 %v1637
        %v1651 = vpop.f32.mrf.mxu0
        %v1652 = vadd.f32 0.0, %v1651
        %v1653 = vpop.f32.mrf.mxu0
        %v1654 = vadd.f32 0.0, %v1653
        %1655 = vmatmul.bf16.gmra.mxu0 %v1640
        %v1656 = vpop.f32.mrf.mxu0
        %v1657 = vadd.f32 0.0, %v1656
        %v1658 = vpop.f32.mrf.mxu0
        %v1659 = vadd.f32 0.0, %v1658
        %1660 = vdwg.mxu0
        %v1661 = vadd.f32 %v1609, %v1652
        %v1662 = vadd.f32 %v1611, %v1654
        %v1663 = vadd.f32 %v1614, %v1657
        %v1664 = vadd.f32 %v1616, %v1659
        %v1665 = vpack.c.bf16 %v1525, %v1523
        %v1666 = vpack.c.bf16 %v1530, %v1528
        %v1667 = vld [vmem:[%s4 + $0x30] sm:$0xf]
        %v1668 = vld [vmem:[%s4 + $0x34] sm:$0xf]
        %v1669 = vld [vmem:[%s4 + $0x38] sm:$0xf]
        %v1670 = vld [vmem:[%s4 + $0x3c] sm:$0xf]
        %v1675 = vunpack.c.l.b16 %v1667
        %v1676 = vunpack.c.l.b16 %v1668
        %v1677 = vunpack.c.l.b16 %v1669
        %v1678 = vunpack.c.l.b16 %v1670
        %v1679 = vpack.c.b16 %v1676, %v1675
        %v1680 = vpack.c.b16 %v1678, %v1677
        %v1684 = vsel %vm420, %v1665, 0
        %v1687 = vsel %vm420, %v1666, 0
        %1689 = vmatpush.bf16.msra.mxu0 0
        %1690 = vmatpush.bf16.msra.mxu0 0
        %1691 = vmatpush.bf16.msra.mxu0 0
        %1692 = vmatpush.bf16.msra.mxu0 0
        %1693 = vmatpush.bf16.msra.mxu0 0
        %1694 = vmatpush.bf16.msra.mxu0 0
        %1695 = vmatpush.bf16.msra.mxu0 %v1680
        %1696 = vmatpush.bf16.msra.mxu0 %v1679
        %1697 = vmatmul.bf16.gmra.mxu0 %v1684
        %v1698 = vpop.f32.mrf.mxu0
        %v1699 = vadd.f32 0.0, %v1698
        %v1700 = vpop.f32.mrf.mxu0
        %v1701 = vadd.f32 0.0, %v1700
        %1702 = vmatmul.bf16.gmra.mxu0 %v1687
        %v1703 = vpop.f32.mrf.mxu0
        %v1704 = vadd.f32 0.0, %v1703
        %v1705 = vpop.f32.mrf.mxu0
        %v1706 = vadd.f32 0.0, %v1705
        %1707 = vdwg.mxu0
        %v1708 = vadd.f32 %v1661, %v1699
        %v1709 = vadd.f32 %v1662, %v1701
        %v1710 = vadd.f32 %v1663, %v1704
        %v1711 = vadd.f32 %v1664, %v1706
        %v1712 = vadd.f32 %v1708, %v996
        %v1713 = vadd.f32 %v1709, %v996
        %v1714 = vadd.f32 %v1710, %v996
        %v1715 = vadd.f32 %v1711, %v996
        %1716 = vst [vmem:[%s274 + $0x20] sm:$0xff] %v1712
        %1717 = vst [vmem:[%s274 + $0x28] sm:$0xff] %v1713
        %1718 = vst [vmem:[%s274 + $0x30] sm:$0xff] %v1714
        %1719 = vst [vmem:[%s274 + $0x38] sm:$0xff] %v1715
        %s1720 = scalar_lea.vmem %s279, 128
        %v1721 = vld [vmem:[%s1720] sm:$0xf]
        %v1722 = vld [vmem:[%s1720 + $0x4] sm:$0xf]
        %v1723 = vld [vmem:[%s1720 + $0x8] sm:$0xf]
        %v1724 = vld [vmem:[%s1720 + $0xc] sm:$0xf]
        %v1725 = vld [vmem:[%s1720 + $0x10] sm:$0xf]
        %v1726 = vld [vmem:[%s1720 + $0x14] sm:$0xf]
        %v1727 = vld [vmem:[%s1720 + $0x18] sm:$0xf]
        %v1728 = vld [vmem:[%s1720 + $0x1c] sm:$0xf]
        %v1729 = vld [vmem:[%s1720 + $0x20] sm:$0xf]
        %v1730 = vld [vmem:[%s1720 + $0x24] sm:$0xf]
        %v1731 = vld [vmem:[%s1720 + $0x28] sm:$0xf]
        %v1732 = vld [vmem:[%s1720 + $0x2c] sm:$0xf]
        %v1733 = vld [vmem:[%s1720 + $0x30] sm:$0xf]
        %v1734 = vld [vmem:[%s1720 + $0x34] sm:$0xf]
        %v1735 = vld [vmem:[%s1720 + $0x38] sm:$0xf]
        %v1736 = vld [vmem:[%s1720 + $0x3c] sm:$0xf]
        %s1737 = scalar_lea.vmem %s284, 128
        %v1738 = vld [vmem:[%s1737] sm:$0xf]
        %v1739 = vld [vmem:[%s1737 + $0x4] sm:$0xf]
        %v1740 = vld [vmem:[%s1737 + $0x8] sm:$0xf]
        %v1741 = vld [vmem:[%s1737 + $0xc] sm:$0xf]
        %v1742 = vld [vmem:[%s1737 + $0x10] sm:$0xf]
        %v1743 = vld [vmem:[%s1737 + $0x14] sm:$0xf]
        %v1744 = vld [vmem:[%s1737 + $0x18] sm:$0xf]
        %v1745 = vld [vmem:[%s1737 + $0x1c] sm:$0xf]
        %v1746 = vld [vmem:[%s1737 + $0x20] sm:$0xf]
        %v1747 = vld [vmem:[%s1737 + $0x24] sm:$0xf]
        %v1748 = vld [vmem:[%s1737 + $0x28] sm:$0xf]
        %v1749 = vld [vmem:[%s1737 + $0x2c] sm:$0xf]
        %v1750 = vld [vmem:[%s1737 + $0x30] sm:$0xf]
        %v1751 = vld [vmem:[%s1737 + $0x34] sm:$0xf]
        %v1752 = vld [vmem:[%s1737 + $0x38] sm:$0xf]
        %v1753 = vld [vmem:[%s1737 + $0x3c] sm:$0xf]
        %s1754 = scalar_lea.vmem %s289, 128
        %v1755 = vld [vmem:[%s1754] sm:$0xf]
        %v1756 = vld [vmem:[%s1754 + $0x4] sm:$0xf]
        %v1757 = vld [vmem:[%s1754 + $0x8] sm:$0xf]
        %v1758 = vld [vmem:[%s1754 + $0xc] sm:$0xf]
        %v1759 = vld [vmem:[%s1754 + $0x10] sm:$0xf]
        %v1760 = vld [vmem:[%s1754 + $0x14] sm:$0xf]
        %v1761 = vld [vmem:[%s1754 + $0x18] sm:$0xf]
        %v1762 = vld [vmem:[%s1754 + $0x1c] sm:$0xf]
        %v1763 = vld [vmem:[%s1754 + $0x20] sm:$0xf]
        %v1764 = vld [vmem:[%s1754 + $0x24] sm:$0xf]
        %v1765 = vld [vmem:[%s1754 + $0x28] sm:$0xf]
        %v1766 = vld [vmem:[%s1754 + $0x2c] sm:$0xf]
        %v1767 = vld [vmem:[%s1754 + $0x30] sm:$0xf]
        %v1768 = vld [vmem:[%s1754 + $0x34] sm:$0xf]
        %v1769 = vld [vmem:[%s1754 + $0x38] sm:$0xf]
        %v1770 = vld [vmem:[%s1754 + $0x3c] sm:$0xf]
        %v1787 = vunpack.c.l.b16 %v1721
        %v1788 = vunpack.c.l.b16 %v1722
        %v1789 = vunpack.c.l.b16 %v1723
        %v1790 = vunpack.c.l.b16 %v1724
        %v1791 = vunpack.c.l.b16 %v1725
        %v1792 = vunpack.c.l.b16 %v1726
        %v1793 = vunpack.c.l.b16 %v1727
        %v1794 = vunpack.c.l.b16 %v1728
        %v1795 = vunpack.c.l.b16 %v1729
        %v1796 = vunpack.c.l.b16 %v1730
        %v1797 = vunpack.c.l.b16 %v1731
        %v1798 = vunpack.c.l.b16 %v1732
        %v1799 = vunpack.c.l.b16 %v1733
        %v1800 = vunpack.c.l.b16 %v1734
        %v1801 = vunpack.c.l.b16 %v1735
        %v1802 = vunpack.c.l.b16 %v1736
        %v1803 = vpack.c.b16 %v1788, %v1787
        %v1804 = vpack.c.b16 %v1790, %v1789
        %v1805 = vpack.c.b16 %v1792, %v1791
        %v1806 = vpack.c.b16 %v1794, %v1793
        %v1807 = vpack.c.b16 %v1796, %v1795
        %v1808 = vpack.c.b16 %v1798, %v1797
        %v1809 = vpack.c.b16 %v1800, %v1799
        %v1810 = vpack.c.b16 %v1802, %v1801
        %v1827 = vunpack.c.l.b16 %v1738
        %v1828 = vunpack.c.l.b16 %v1739
        %v1829 = vunpack.c.l.b16 %v1740
        %v1830 = vunpack.c.l.b16 %v1741
        %v1831 = vunpack.c.l.b16 %v1742
        %v1832 = vunpack.c.l.b16 %v1743
        %v1833 = vunpack.c.l.b16 %v1744
        %v1834 = vunpack.c.l.b16 %v1745
        %v1835 = vunpack.c.l.b16 %v1746
        %v1836 = vunpack.c.l.b16 %v1747
        %v1837 = vunpack.c.l.b16 %v1748
        %v1838 = vunpack.c.l.b16 %v1749
        %v1839 = vunpack.c.l.b16 %v1750
        %v1840 = vunpack.c.l.b16 %v1751
        %v1841 = vunpack.c.l.b16 %v1752
        %v1842 = vunpack.c.l.b16 %v1753
        %v1843 = vpack.c.b16 %v1828, %v1827
        %v1844 = vpack.c.b16 %v1830, %v1829
        %v1845 = vpack.c.b16 %v1832, %v1831
        %v1846 = vpack.c.b16 %v1834, %v1833
        %v1847 = vpack.c.b16 %v1836, %v1835
        %v1848 = vpack.c.b16 %v1838, %v1837
        %v1849 = vpack.c.b16 %v1840, %v1839
        %v1850 = vpack.c.b16 %v1842, %v1841
        %v1852 = vsel %vm420, %v1803, 0
        %v1855 = vsel %vm420, %v1804, 0
        %v1858 = vsel %vm420, %v1805, 0
        %v1861 = vsel %vm420, %v1806, 0
        %v1864 = vsel %vm420, %v1807, 0
        %v1867 = vsel %vm420, %v1808, 0
        %v1870 = vsel %vm420, %v1809, 0
        %v1873 = vsel %vm420, %v1810, 0
        %v1876 = vsel %vm420, %v1843, 0
        %v1879 = vsel %vm420, %v1844, 0
        %v1882 = vsel %vm420, %v1845, 0
        %v1885 = vsel %vm420, %v1846, 0
        %v1888 = vsel %vm420, %v1847, 0
        %v1891 = vsel %vm420, %v1848, 0
        %v1894 = vsel %vm420, %v1849, 0
        %v1897 = vsel %vm420, %v1850, 0
        %1899 = vmatpush.bf16.xpose.msra.mxu0 %v1897
        %1900 = vmatpush.bf16.xpose.msra.mxu0 %v1894
        %1901 = vmatpush.bf16.xpose.msra.mxu0 %v1891
        %1902 = vmatpush.bf16.xpose.msra.mxu0 %v1888
        %1903 = vmatpush.bf16.xpose.msra.mxu0 %v1885
        %1904 = vmatpush.bf16.xpose.msra.mxu0 %v1882
        %1905 = vmatpush.bf16.xpose.msra.mxu0 %v1879
        %1906 = vmatpush.bf16.xpose.msra.mxu0 %v1876
        %1907 = vmatmul.bf16.gmra.mxu0 %v1852
        %v1908 = vpop.f32.mrf.mxu0
        %v1909 = vadd.f32 0.0, %v1908
        %v1910 = vpop.f32.mrf.mxu0
        %v1911 = vadd.f32 0.0, %v1910
        %1912 = vmatmul.bf16.gmra.mxu0 %v1855
        %v1913 = vpop.f32.mrf.mxu0
        %v1914 = vadd.f32 0.0, %v1913
        %v1915 = vpop.f32.mrf.mxu0
        %v1916 = vadd.f32 0.0, %v1915
        %1917 = vmatmul.bf16.gmra.mxu0 %v1858
        %v1918 = vpop.f32.mrf.mxu0
        %v1919 = vadd.f32 0.0, %v1918
        %v1920 = vpop.f32.mrf.mxu0
        %v1921 = vadd.f32 0.0, %v1920
        %1922 = vmatmul.bf16.gmra.mxu0 %v1861
        %v1923 = vpop.f32.mrf.mxu0
        %v1924 = vadd.f32 0.0, %v1923
        %v1925 = vpop.f32.mrf.mxu0
        %v1926 = vadd.f32 0.0, %v1925
        %1927 = vmatmul.bf16.gmra.mxu0 %v1864
        %v1928 = vpop.f32.mrf.mxu0
        %v1929 = vadd.f32 0.0, %v1928
        %v1930 = vpop.f32.mrf.mxu0
        %v1931 = vadd.f32 0.0, %v1930
        %1932 = vmatmul.bf16.gmra.mxu0 %v1867
        %v1933 = vpop.f32.mrf.mxu0
        %v1934 = vadd.f32 0.0, %v1933
        %v1935 = vpop.f32.mrf.mxu0
        %v1936 = vadd.f32 0.0, %v1935
        %1937 = vmatmul.bf16.gmra.mxu0 %v1870
        %v1938 = vpop.f32.mrf.mxu0
        %v1939 = vadd.f32 0.0, %v1938
        %v1940 = vpop.f32.mrf.mxu0
        %v1941 = vadd.f32 0.0, %v1940
        %1942 = vmatmul.bf16.gmra.mxu0 %v1873
        %v1943 = vpop.f32.mrf.mxu0
        %v1944 = vadd.f32 0.0, %v1943
        %v1945 = vpop.f32.mrf.mxu0
        %v1946 = vadd.f32 0.0, %v1945
        %1947 = vdwg.mxu0
        %v1948 = vmul.f32 %v1909, 0.17677669
        %v1949 = vmul.f32 %v1911, 0.17677669
        %v1950 = vmul.f32 %v1914, 0.17677669
        %v1951 = vmul.f32 %v1916, 0.17677669
        %v1952 = vmul.f32 %v1919, 0.17677669
        %v1953 = vmul.f32 %v1921, 0.17677669
        %v1954 = vmul.f32 %v1924, 0.17677669
        %v1955 = vmul.f32 %v1926, 0.17677669
        %v1956 = vmul.f32 %v1929, 0.17677669
        %v1957 = vmul.f32 %v1931, 0.17677669
        %v1958 = vmul.f32 %v1934, 0.17677669
        %v1959 = vmul.f32 %v1936, 0.17677669
        %v1960 = vmul.f32 %v1939, 0.17677669
        %v1961 = vmul.f32 %v1941, 0.17677669
        %v1962 = vmul.f32 %v1944, 0.17677669
        %v1963 = vmul.f32 %v1946, 0.17677669
        %s1964 = scalar_lea.vmem %s3, 256
        %v1965 = vld [vmem:[%s1964] sm:$0xff]
        %v1966 = vld [vmem:[%s1964 + $0x8] sm:$0xff]
        %v1967 = vld [vmem:[%s1964 + $0x10] sm:$0xff]
        %v1968 = vld [vmem:[%s1964 + $0x18] sm:$0xff]
        %v1969 = vld [vmem:[%s1964 + $0x20] sm:$0xff]
        %v1970 = vld [vmem:[%s1964 + $0x28] sm:$0xff]
        %v1971 = vld [vmem:[%s1964 + $0x30] sm:$0xff]
        %v1972 = vld [vmem:[%s1964 + $0x38] sm:$0xff]
        %v1973 = vld [vmem:[%s1964 + $0x40] sm:$0xff]
        %v1974 = vld [vmem:[%s1964 + $0x48] sm:$0xff]
        %v1975 = vld [vmem:[%s1964 + $0x50] sm:$0xff]
        %v1976 = vld [vmem:[%s1964 + $0x58] sm:$0xff]
        %v1977 = vld [vmem:[%s1964 + $0x60] sm:$0xff]
        %v1978 = vld [vmem:[%s1964 + $0x68] sm:$0xff]
        %v1979 = vld [vmem:[%s1964 + $0x70] sm:$0xff]
        %v1980 = vld [vmem:[%s1964 + $0x78] sm:$0xff]
        %v1981 = vadd.f32 %v1948, %v1965
        %v1982 = vadd.f32 %v1949, %v1966
        %v1983 = vadd.f32 %v1950, %v1967
        %v1984 = vadd.f32 %v1951, %v1968
        %v1985 = vadd.f32 %v1952, %v1969
        %v1986 = vadd.f32 %v1953, %v1970
        %v1987 = vadd.f32 %v1954, %v1971
        %v1988 = vadd.f32 %v1955, %v1972
        %v1989 = vadd.f32 %v1956, %v1973
        %v1990 = vadd.f32 %v1957, %v1974
        %v1991 = vadd.f32 %v1958, %v1975
        %v1992 = vadd.f32 %v1959, %v1976
        %v1993 = vadd.f32 %v1960, %v1977
        %v1994 = vadd.f32 %v1961, %v1978
        %v1995 = vadd.f32 %v1962, %v1979
        %v1996 = vadd.f32 %v1963, %v1980
        %1997 = vmax.xlane.f32.xlu0 %v1981
        %v1998 = vpop.xlane.xlu0 %1997
        %1999 = vmax.xlane.f32.xlu0 %v1982
        %v2000 = vpop.xlane.xlu0 %1999
        %2001 = vmax.xlane.f32.xlu0 %v1983
        %v2002 = vpop.xlane.xlu0 %2001
        %2003 = vmax.xlane.f32.xlu0 %v1984
        %v2004 = vpop.xlane.xlu0 %2003
        %2005 = vmax.xlane.f32.xlu0 %v1985
        %v2006 = vpop.xlane.xlu0 %2005
        %2007 = vmax.xlane.f32.xlu0 %v1986
        %v2008 = vpop.xlane.xlu0 %2007
        %2009 = vmax.xlane.f32.xlu0 %v1987
        %v2010 = vpop.xlane.xlu0 %2009
        %2011 = vmax.xlane.f32.xlu0 %v1988
        %v2012 = vpop.xlane.xlu0 %2011
        %2013 = vmax.xlane.f32.xlu0 %v1989
        %v2014 = vpop.xlane.xlu0 %2013
        %2015 = vmax.xlane.f32.xlu0 %v1990
        %v2016 = vpop.xlane.xlu0 %2015
        %2017 = vmax.xlane.f32.xlu0 %v1991
        %v2018 = vpop.xlane.xlu0 %2017
        %2019 = vmax.xlane.f32.xlu0 %v1992
        %v2020 = vpop.xlane.xlu0 %2019
        %2021 = vmax.xlane.f32.xlu0 %v1993
        %v2022 = vpop.xlane.xlu0 %2021
        %2023 = vmax.xlane.f32.xlu0 %v1994
        %v2024 = vpop.xlane.xlu0 %2023
        %2025 = vmax.xlane.f32.xlu0 %v1995
        %v2026 = vpop.xlane.xlu0 %2025
        %2027 = vmax.xlane.f32.xlu0 %v1996
        %v2028 = vpop.xlane.xlu0 %2027
        %v2029 = vsub.f32 %v1981, %v1998
        %v2030 = vsub.f32 %v1982, %v2000
        %v2031 = vsub.f32 %v1983, %v2002
        %v2032 = vsub.f32 %v1984, %v2004
        %v2033 = vsub.f32 %v1985, %v2006
        %v2034 = vsub.f32 %v1986, %v2008
        %v2035 = vsub.f32 %v1987, %v2010
        %v2036 = vsub.f32 %v1988, %v2012
        %v2037 = vsub.f32 %v1989, %v2014
        %v2038 = vsub.f32 %v1990, %v2016
        %v2039 = vsub.f32 %v1991, %v2018
        %v2040 = vsub.f32 %v1992, %v2020
        %v2041 = vsub.f32 %v1993, %v2022
        %v2042 = vsub.f32 %v1994, %v2024
        %v2043 = vsub.f32 %v1995, %v2026
        %v2044 = vsub.f32 %v1996, %v2028
        %v2045 = vmul.f32 %v2029, 1.442695
        %v2046 = vpow.pop %v2045
        %v2047 = vmul.f32 %v2030, 1.442695
        %v2048 = vpow.pop %v2047
        %v2049 = vmul.f32 %v2031, 1.442695
        %v2050 = vpow.pop %v2049
        %v2051 = vmul.f32 %v2032, 1.442695
        %v2052 = vpow.pop %v2051
        %v2053 = vmul.f32 %v2033, 1.442695
        %v2054 = vpow.pop %v2053
        %v2055 = vmul.f32 %v2034, 1.442695
        %v2056 = vpow.pop %v2055
        %v2057 = vmul.f32 %v2035, 1.442695
        %v2058 = vpow.pop %v2057
        %v2059 = vmul.f32 %v2036, 1.442695
        %v2060 = vpow.pop %v2059
        %v2061 = vmul.f32 %v2037, 1.442695
        %v2062 = vpow.pop %v2061
        %v2063 = vmul.f32 %v2038, 1.442695
        %v2064 = vpow.pop %v2063
        %v2065 = vmul.f32 %v2039, 1.442695
        %v2066 = vpow.pop %v2065
        %v2067 = vmul.f32 %v2040, 1.442695
        %v2068 = vpow.pop %v2067
        %v2069 = vmul.f32 %v2041, 1.442695
        %v2070 = vpow.pop %v2069
        %v2071 = vmul.f32 %v2042, 1.442695
        %v2072 = vpow.pop %v2071
        %v2073 = vmul.f32 %v2043, 1.442695
        %v2074 = vpow.pop %v2073
        %v2075 = vmul.f32 %v2044, 1.442695
        %v2076 = vpow.pop %v2075
        %2077 = vadd.xlane.f32.xlu0 %v2046
        %v2078 = vpop.xlane.xlu0 %2077
        %2079 = vadd.xlane.f32.xlu0 %v2048
        %v2080 = vpop.xlane.xlu0 %2079
        %2081 = vadd.xlane.f32.xlu0 %v2050
        %v2082 = vpop.xlane.xlu0 %2081
        %2083 = vadd.xlane.f32.xlu0 %v2052
        %v2084 = vpop.xlane.xlu0 %2083
        %2085 = vadd.xlane.f32.xlu0 %v2054
        %v2086 = vpop.xlane.xlu0 %2085
        %2087 = vadd.xlane.f32.xlu0 %v2056
        %v2088 = vpop.xlane.xlu0 %2087
        %2089 = vadd.xlane.f32.xlu0 %v2058
        %v2090 = vpop.xlane.xlu0 %2089
        %2091 = vadd.xlane.f32.xlu0 %v2060
        %v2092 = vpop.xlane.xlu0 %2091
        %2093 = vadd.xlane.f32.xlu0 %v2062
        %v2094 = vpop.xlane.xlu0 %2093
        %2095 = vadd.xlane.f32.xlu0 %v2064
        %v2096 = vpop.xlane.xlu0 %2095
        %2097 = vadd.xlane.f32.xlu0 %v2066
        %v2098 = vpop.xlane.xlu0 %2097
        %2099 = vadd.xlane.f32.xlu0 %v2068
        %v2100 = vpop.xlane.xlu0 %2099
        %2101 = vadd.xlane.f32.xlu0 %v2070
        %v2102 = vpop.xlane.xlu0 %2101
        %2103 = vadd.xlane.f32.xlu0 %v2072
        %v2104 = vpop.xlane.xlu0 %2103
        %2105 = vadd.xlane.f32.xlu0 %v2074
        %v2106 = vpop.xlane.xlu0 %2105
        %2107 = vadd.xlane.f32.xlu0 %v2076
        %v2108 = vpop.xlane.xlu0 %2107
        %v2109 = vrcp.pop %v2078
        %v2110 = vrcp.pop %v2080
        %v2111 = vrcp.pop %v2082
        %v2112 = vrcp.pop %v2084
        %v2113 = vrcp.pop %v2086
        %v2114 = vrcp.pop %v2088
        %v2115 = vrcp.pop %v2090
        %v2116 = vrcp.pop %v2092
        %v2117 = vrcp.pop %v2094
        %v2118 = vrcp.pop %v2096
        %v2119 = vrcp.pop %v2098
        %v2120 = vrcp.pop %v2100
        %v2121 = vrcp.pop %v2102
        %v2122 = vrcp.pop %v2104
        %v2123 = vrcp.pop %v2106
        %v2124 = vrcp.pop %v2108
        %v2125 = vmul.f32 %v2046, %v2109
        %v2126 = vmul.f32 %v2048, %v2110
        %v2127 = vmul.f32 %v2050, %v2111
        %v2128 = vmul.f32 %v2052, %v2112
        %v2129 = vmul.f32 %v2054, %v2113
        %v2130 = vmul.f32 %v2056, %v2114
        %v2131 = vmul.f32 %v2058, %v2115
        %v2132 = vmul.f32 %v2060, %v2116
        %v2133 = vmul.f32 %v2062, %v2117
        %v2134 = vmul.f32 %v2064, %v2118
        %v2135 = vmul.f32 %v2066, %v2119
        %v2136 = vmul.f32 %v2068, %v2120
        %v2137 = vmul.f32 %v2070, %v2121
        %v2138 = vmul.f32 %v2072, %v2122
        %v2139 = vmul.f32 %v2074, %v2123
        %v2140 = vmul.f32 %v2076, %v2124
        %v2141 = vpack.c.bf16 %v2126, %v2125
        %v2142 = vpack.c.bf16 %v2128, %v2127
        %v2143 = vpack.c.bf16 %v2130, %v2129
        %v2144 = vpack.c.bf16 %v2132, %v2131
        %v2145 = vpack.c.bf16 %v2134, %v2133
        %v2146 = vpack.c.bf16 %v2136, %v2135
        %v2147 = vpack.c.bf16 %v2138, %v2137
        %v2148 = vpack.c.bf16 %v2140, %v2139
        %v2165 = vunpack.c.l.b16 %v1755
        %v2166 = vunpack.c.l.b16 %v1756
        %v2167 = vunpack.c.l.b16 %v1757
        %v2168 = vunpack.c.l.b16 %v1758
        %v2169 = vunpack.c.l.b16 %v1759
        %v2170 = vunpack.c.l.b16 %v1760
        %v2171 = vunpack.c.l.b16 %v1761
        %v2172 = vunpack.c.l.b16 %v1762
        %v2173 = vunpack.c.l.b16 %v1763
        %v2174 = vunpack.c.l.b16 %v1764
        %v2175 = vunpack.c.l.b16 %v1765
        %v2176 = vunpack.c.l.b16 %v1766
        %v2177 = vunpack.c.l.b16 %v1767
        %v2178 = vunpack.c.l.b16 %v1768
        %v2179 = vunpack.c.l.b16 %v1769
        %v2180 = vunpack.c.l.b16 %v1770
        %v2181 = vpack.c.b16 %v2166, %v2165
        %v2182 = vpack.c.b16 %v2168, %v2167
        %v2183 = vpack.c.b16 %v2170, %v2169
        %v2184 = vpack.c.b16 %v2172, %v2171
        %v2185 = vpack.c.b16 %v2174, %v2173
        %v2186 = vpack.c.b16 %v2176, %v2175
        %v2187 = vpack.c.b16 %v2178, %v2177
        %v2188 = vpack.c.b16 %v2180, %v2179
        %2197 = vmatpush.bf16.msra.mxu0 %v2188
        %2198 = vmatpush.bf16.msra.mxu0 %v2187
        %2199 = vmatpush.bf16.msra.mxu0 %v2186
        %2200 = vmatpush.bf16.msra.mxu0 %v2185
        %2201 = vmatpush.bf16.msra.mxu0 %v2184
        %2202 = vmatpush.bf16.msra.mxu0 %v2183
        %2203 = vmatpush.bf16.msra.mxu0 %v2182
        %2204 = vmatpush.bf16.msra.mxu0 %v2181
        %2205 = vmatmul.bf16.gmra.mxu0 %v2141
        %v2206 = vpop.f32.mrf.mxu0
        %v2207 = vadd.f32 0.0, %v2206
        %v2208 = vpop.f32.mrf.mxu0
        %v2209 = vadd.f32 0.0, %v2208
        %2210 = vmatmul.bf16.gmra.mxu0 %v2142
        %v2211 = vpop.f32.mrf.mxu0
        %v2212 = vadd.f32 0.0, %v2211
        %v2213 = vpop.f32.mrf.mxu0
        %v2214 = vadd.f32 0.0, %v2213
        %2215 = vmatmul.bf16.gmra.mxu0 %v2143
        %v2216 = vpop.f32.mrf.mxu0
        %v2217 = vadd.f32 0.0, %v2216
        %v2218 = vpop.f32.mrf.mxu0
        %v2219 = vadd.f32 0.0, %v2218
        %2220 = vmatmul.bf16.gmra.mxu0 %v2144
        %v2221 = vpop.f32.mrf.mxu0
        %v2222 = vadd.f32 0.0, %v2221
        %v2223 = vpop.f32.mrf.mxu0
        %v2224 = vadd.f32 0.0, %v2223
        %2225 = vmatmul.bf16.gmra.mxu0 %v2145
        %v2226 = vpop.f32.mrf.mxu0
        %v2227 = vadd.f32 0.0, %v2226
        %v2228 = vpop.f32.mrf.mxu0
        %v2229 = vadd.f32 0.0, %v2228
        %2230 = vmatmul.bf16.gmra.mxu0 %v2146
        %v2231 = vpop.f32.mrf.mxu0
        %v2232 = vadd.f32 0.0, %v2231
        %v2233 = vpop.f32.mrf.mxu0
        %v2234 = vadd.f32 0.0, %v2233
        %2235 = vmatmul.bf16.gmra.mxu0 %v2147
        %v2236 = vpop.f32.mrf.mxu0
        %v2237 = vadd.f32 0.0, %v2236
        %v2238 = vpop.f32.mrf.mxu0
        %v2239 = vadd.f32 0.0, %v2238
        %2240 = vmatmul.bf16.gmra.mxu0 %v2148
        %v2241 = vpop.f32.mrf.mxu0
        %v2242 = vadd.f32 0.0, %v2241
        %v2243 = vpop.f32.mrf.mxu0
        %v2244 = vadd.f32 0.0, %v2243
        %2245 = vdwg.mxu0
        %v2246 = vpack.c.bf16 %v2209, %v2207
        %v2247 = vpack.c.bf16 %v2214, %v2212
        %v2248 = vld [vmem:[%s4] sm:$0xf]
        %v2249 = vld [vmem:[%s4 + $0x4] sm:$0xf]
        %v2250 = vld [vmem:[%s4 + $0x8] sm:$0xf]
        %v2251 = vld [vmem:[%s4 + $0xc] sm:$0xf]
        %v2252 = vpack.c.bf16 %v2219, %v2217
        %v2253 = vpack.c.bf16 %v2224, %v2222
        %v2254 = vld [vmem:[%s4 + $0x10] sm:$0xf]
        %v2255 = vld [vmem:[%s4 + $0x14] sm:$0xf]
        %v2256 = vld [vmem:[%s4 + $0x18] sm:$0xf]
        %v2257 = vld [vmem:[%s4 + $0x1c] sm:$0xf]
        %v2262 = vunpack.c.l.b16 %v2254
        %v2263 = vunpack.c.l.b16 %v2255
        %v2264 = vunpack.c.l.b16 %v2256
        %v2265 = vunpack.c.l.b16 %v2257
        %v2266 = vpack.c.b16 %v2263, %v2262
        %v2267 = vpack.c.b16 %v2265, %v2264
        %v2271 = vsel %vm420, %v2252, 0
        %v2274 = vsel %vm420, %v2253, 0
        %2276 = vmatpush.bf16.msra.mxu0 0
        %2277 = vmatpush.bf16.msra.mxu0 0
        %2278 = vmatpush.bf16.msra.mxu0 0
        %2279 = vmatpush.bf16.msra.mxu0 0
        %2280 = vmatpush.bf16.msra.mxu0 0
        %2281 = vmatpush.bf16.msra.mxu0 0
        %2282 = vmatpush.bf16.msra.mxu0 %v2267
        %2283 = vmatpush.bf16.msra.mxu0 %v2266
        %2284 = vmatmul.bf16.gmra.mxu0 %v2271
        %v2285 = vpop.f32.mrf.mxu0
        %v2286 = vadd.f32 0.0, %v2285
        %v2287 = vpop.f32.mrf.mxu0
        %v2288 = vadd.f32 0.0, %v2287
        %2289 = vmatmul.bf16.gmra.mxu0 %v2274
        %v2290 = vpop.f32.mrf.mxu0
        %v2291 = vadd.f32 0.0, %v2290
        %v2292 = vpop.f32.mrf.mxu0
        %v2293 = vadd.f32 0.0, %v2292
        %2294 = vdwg.mxu0
        %v2299 = vunpack.c.l.b16 %v2248
        %v2300 = vunpack.c.l.b16 %v2249
        %v2301 = vunpack.c.l.b16 %v2250
        %v2302 = vunpack.c.l.b16 %v2251
        %v2303 = vpack.c.b16 %v2300, %v2299
        %v2304 = vpack.c.b16 %v2302, %v2301
        %v2308 = vsel %vm420, %v2246, 0
        %v2311 = vsel %vm420, %v2247, 0
        %2313 = vmatpush.bf16.msra.mxu0 0
        %2314 = vmatpush.bf16.msra.mxu0 0
        %2315 = vmatpush.bf16.msra.mxu0 0
        %2316 = vmatpush.bf16.msra.mxu0 0
        %2317 = vmatpush.bf16.msra.mxu0 0
        %2318 = vmatpush.bf16.msra.mxu0 0
        %2319 = vmatpush.bf16.msra.mxu0 %v2304
        %2320 = vmatpush.bf16.msra.mxu0 %v2303
        %2321 = vmatmul.bf16.gmra.mxu0 %v2308
        %v2322 = vpop.f32.mrf.mxu0
        %v2323 = vadd.f32 %v2286, %v2322
        %v2324 = vpop.f32.mrf.mxu0
        %v2325 = vadd.f32 %v2288, %v2324
        %2326 = vmatmul.bf16.gmra.mxu0 %v2311
        %v2327 = vpop.f32.mrf.mxu0
        %v2328 = vadd.f32 %v2291, %v2327
        %v2329 = vpop.f32.mrf.mxu0
        %v2330 = vadd.f32 %v2293, %v2329
        %2331 = vdwg.mxu0
        %v2332 = vpack.c.bf16 %v2229, %v2227
        %v2333 = vpack.c.bf16 %v2234, %v2232
        %v2334 = vld [vmem:[%s4 + $0x20] sm:$0xf]
        %v2335 = vld [vmem:[%s4 + $0x24] sm:$0xf]
        %v2336 = vld [vmem:[%s4 + $0x28] sm:$0xf]
        %v2337 = vld [vmem:[%s4 + $0x2c] sm:$0xf]
        %v2342 = vunpack.c.l.b16 %v2334
        %v2343 = vunpack.c.l.b16 %v2335
        %v2344 = vunpack.c.l.b16 %v2336
        %v2345 = vunpack.c.l.b16 %v2337
        %v2346 = vpack.c.b16 %v2343, %v2342
        %v2347 = vpack.c.b16 %v2345, %v2344
        %v2351 = vsel %vm420, %v2332, 0
        %v2354 = vsel %vm420, %v2333, 0
        %2356 = vmatpush.bf16.msra.mxu0 0
        %2357 = vmatpush.bf16.msra.mxu0 0
        %2358 = vmatpush.bf16.msra.mxu0 0
        %2359 = vmatpush.bf16.msra.mxu0 0
        %2360 = vmatpush.bf16.msra.mxu0 0
        %2361 = vmatpush.bf16.msra.mxu0 0
        %2362 = vmatpush.bf16.msra.mxu0 %v2347
        %2363 = vmatpush.bf16.msra.mxu0 %v2346
        %2364 = vmatmul.bf16.gmra.mxu0 %v2351
        %v2365 = vpop.f32.mrf.mxu0
        %v2366 = vadd.f32 0.0, %v2365
        %v2367 = vpop.f32.mrf.mxu0
        %v2368 = vadd.f32 0.0, %v2367
        %2369 = vmatmul.bf16.gmra.mxu0 %v2354
        %v2370 = vpop.f32.mrf.mxu0
        %v2371 = vadd.f32 0.0, %v2370
        %v2372 = vpop.f32.mrf.mxu0
        %v2373 = vadd.f32 0.0, %v2372
        %2374 = vdwg.mxu0
        %v2375 = vadd.f32 %v2323, %v2366
        %v2376 = vadd.f32 %v2325, %v2368
        %v2377 = vadd.f32 %v2328, %v2371
        %v2378 = vadd.f32 %v2330, %v2373
        %v2379 = vpack.c.bf16 %v2239, %v2237
        %v2380 = vpack.c.bf16 %v2244, %v2242
        %v2381 = vld [vmem:[%s4 + $0x30] sm:$0xf]
        %v2382 = vld [vmem:[%s4 + $0x34] sm:$0xf]
        %v2383 = vld [vmem:[%s4 + $0x38] sm:$0xf]
        %v2384 = vld [vmem:[%s4 + $0x3c] sm:$0xf]
        %v2389 = vunpack.c.l.b16 %v2381
        %v2390 = vunpack.c.l.b16 %v2382
        %v2391 = vunpack.c.l.b16 %v2383
        %v2392 = vunpack.c.l.b16 %v2384
        %v2393 = vpack.c.b16 %v2390, %v2389
        %v2394 = vpack.c.b16 %v2392, %v2391
        %v2398 = vsel %vm420, %v2379, 0
        %v2401 = vsel %vm420, %v2380, 0
        %2403 = vmatpush.bf16.msra.mxu0 0
        %2404 = vmatpush.bf16.msra.mxu0 0
        %2405 = vmatpush.bf16.msra.mxu0 0
        %2406 = vmatpush.bf16.msra.mxu0 0
        %2407 = vmatpush.bf16.msra.mxu0 0
        %2408 = vmatpush.bf16.msra.mxu0 0
        %2409 = vmatpush.bf16.msra.mxu0 %v2394
        %2410 = vmatpush.bf16.msra.mxu0 %v2393
        %2411 = vmatmul.bf16.gmra.mxu0 %v2398
        %v2412 = vpop.f32.mrf.mxu0
        %v2413 = vadd.f32 0.0, %v2412
        %v2414 = vpop.f32.mrf.mxu0
        %v2415 = vadd.f32 0.0, %v2414
        %2416 = vmatmul.bf16.gmra.mxu0 %v2401
        %v2417 = vpop.f32.mrf.mxu0
        %v2418 = vadd.f32 0.0, %v2417
        %v2419 = vpop.f32.mrf.mxu0
        %v2420 = vadd.f32 0.0, %v2419
        %2421 = vdwg.mxu0
        %v2422 = vadd.f32 %v2375, %v2413
        %v2423 = vadd.f32 %v2376, %v2415
        %v2424 = vadd.f32 %v2377, %v2418
        %v2425 = vadd.f32 %v2378, %v2420
        %v2426 = vadd.f32 %v2422, %v996
        %v2427 = vadd.f32 %v2423, %v996
        %v2428 = vadd.f32 %v2424, %v996
        %v2429 = vadd.f32 %v2425, %v996
        %2430 = vst [vmem:[%s274 + $0x40] sm:$0xff] %v2426
        %2431 = vst [vmem:[%s274 + $0x48] sm:$0xff] %v2427
        %2432 = vst [vmem:[%s274 + $0x50] sm:$0xff] %v2428
        %2433 = vst [vmem:[%s274 + $0x58] sm:$0xff] %v2429
        %s2434 = scalar_lea.vmem %s279, 192
        %v2435 = vld [vmem:[%s2434] sm:$0xf]
        %v2436 = vld [vmem:[%s2434 + $0x4] sm:$0xf]
        %v2437 = vld [vmem:[%s2434 + $0x8] sm:$0xf]
        %v2438 = vld [vmem:[%s2434 + $0xc] sm:$0xf]
        %v2439 = vld [vmem:[%s2434 + $0x10] sm:$0xf]
        %v2440 = vld [vmem:[%s2434 + $0x14] sm:$0xf]
        %v2441 = vld [vmem:[%s2434 + $0x18] sm:$0xf]
        %v2442 = vld [vmem:[%s2434 + $0x1c] sm:$0xf]
        %v2443 = vld [vmem:[%s2434 + $0x20] sm:$0xf]
        %v2444 = vld [vmem:[%s2434 + $0x24] sm:$0xf]
        %v2445 = vld [vmem:[%s2434 + $0x28] sm:$0xf]
        %v2446 = vld [vmem:[%s2434 + $0x2c] sm:$0xf]
        %v2447 = vld [vmem:[%s2434 + $0x30] sm:$0xf]
        %v2448 = vld [vmem:[%s2434 + $0x34] sm:$0xf]
        %v2449 = vld [vmem:[%s2434 + $0x38] sm:$0xf]
        %v2450 = vld [vmem:[%s2434 + $0x3c] sm:$0xf]
        %s2451 = scalar_lea.vmem %s284, 192
        %v2452 = vld [vmem:[%s2451] sm:$0xf]
        %v2453 = vld [vmem:[%s2451 + $0x4] sm:$0xf]
        %v2454 = vld [vmem:[%s2451 + $0x8] sm:$0xf]
        %v2455 = vld [vmem:[%s2451 + $0xc] sm:$0xf]
        %v2456 = vld [vmem:[%s2451 + $0x10] sm:$0xf]
        %v2457 = vld [vmem:[%s2451 + $0x14] sm:$0xf]
        %v2458 = vld [vmem:[%s2451 + $0x18] sm:$0xf]
        %v2459 = vld [vmem:[%s2451 + $0x1c] sm:$0xf]
        %v2460 = vld [vmem:[%s2451 + $0x20] sm:$0xf]
        %v2461 = vld [vmem:[%s2451 + $0x24] sm:$0xf]
        %v2462 = vld [vmem:[%s2451 + $0x28] sm:$0xf]
        %v2463 = vld [vmem:[%s2451 + $0x2c] sm:$0xf]
        %v2464 = vld [vmem:[%s2451 + $0x30] sm:$0xf]
        %v2465 = vld [vmem:[%s2451 + $0x34] sm:$0xf]
        %v2466 = vld [vmem:[%s2451 + $0x38] sm:$0xf]
        %v2467 = vld [vmem:[%s2451 + $0x3c] sm:$0xf]
        %s2468 = scalar_lea.vmem %s289, 192
        %v2469 = vld [vmem:[%s2468] sm:$0xf]
        %v2470 = vld [vmem:[%s2468 + $0x4] sm:$0xf]
        %v2471 = vld [vmem:[%s2468 + $0x8] sm:$0xf]
        %v2472 = vld [vmem:[%s2468 + $0xc] sm:$0xf]
        %v2473 = vld [vmem:[%s2468 + $0x10] sm:$0xf]
        %v2474 = vld [vmem:[%s2468 + $0x14] sm:$0xf]
        %v2475 = vld [vmem:[%s2468 + $0x18] sm:$0xf]
        %v2476 = vld [vmem:[%s2468 + $0x1c] sm:$0xf]
        %v2477 = vld [vmem:[%s2468 + $0x20] sm:$0xf]
        %v2478 = vld [vmem:[%s2468 + $0x24] sm:$0xf]
        %v2479 = vld [vmem:[%s2468 + $0x28] sm:$0xf]
        %v2480 = vld [vmem:[%s2468 + $0x2c] sm:$0xf]
        %v2481 = vld [vmem:[%s2468 + $0x30] sm:$0xf]
        %v2482 = vld [vmem:[%s2468 + $0x34] sm:$0xf]
        %v2483 = vld [vmem:[%s2468 + $0x38] sm:$0xf]
        %v2484 = vld [vmem:[%s2468 + $0x3c] sm:$0xf]
        %v2501 = vunpack.c.l.b16 %v2435
        %v2502 = vunpack.c.l.b16 %v2436
        %v2503 = vunpack.c.l.b16 %v2437
        %v2504 = vunpack.c.l.b16 %v2438
        %v2505 = vunpack.c.l.b16 %v2439
        %v2506 = vunpack.c.l.b16 %v2440
        %v2507 = vunpack.c.l.b16 %v2441
        %v2508 = vunpack.c.l.b16 %v2442
        %v2509 = vunpack.c.l.b16 %v2443
        %v2510 = vunpack.c.l.b16 %v2444
        %v2511 = vunpack.c.l.b16 %v2445
        %v2512 = vunpack.c.l.b16 %v2446
        %v2513 = vunpack.c.l.b16 %v2447
        %v2514 = vunpack.c.l.b16 %v2448
        %v2515 = vunpack.c.l.b16 %v2449
        %v2516 = vunpack.c.l.b16 %v2450
        %v2517 = vpack.c.b16 %v2502, %v2501
        %v2518 = vpack.c.b16 %v2504, %v2503
        %v2519 = vpack.c.b16 %v2506, %v2505
        %v2520 = vpack.c.b16 %v2508, %v2507
        %v2521 = vpack.c.b16 %v2510, %v2509
        %v2522 = vpack.c.b16 %v2512, %v2511
        %v2523 = vpack.c.b16 %v2514, %v2513
        %v2524 = vpack.c.b16 %v2516, %v2515
        %v2541 = vunpack.c.l.b16 %v2452
        %v2542 = vunpack.c.l.b16 %v2453
        %v2543 = vunpack.c.l.b16 %v2454
        %v2544 = vunpack.c.l.b16 %v2455
        %v2545 = vunpack.c.l.b16 %v2456
        %v2546 = vunpack.c.l.b16 %v2457
        %v2547 = vunpack.c.l.b16 %v2458
        %v2548 = vunpack.c.l.b16 %v2459
        %v2549 = vunpack.c.l.b16 %v2460
        %v2550 = vunpack.c.l.b16 %v2461
        %v2551 = vunpack.c.l.b16 %v2462
        %v2552 = vunpack.c.l.b16 %v2463
        %v2553 = vunpack.c.l.b16 %v2464
        %v2554 = vunpack.c.l.b16 %v2465
        %v2555 = vunpack.c.l.b16 %v2466
        %v2556 = vunpack.c.l.b16 %v2467
        %v2557 = vpack.c.b16 %v2542, %v2541
        %v2558 = vpack.c.b16 %v2544, %v2543
        %v2559 = vpack.c.b16 %v2546, %v2545
        %v2560 = vpack.c.b16 %v2548, %v2547
        %v2561 = vpack.c.b16 %v2550, %v2549
        %v2562 = vpack.c.b16 %v2552, %v2551
        %v2563 = vpack.c.b16 %v2554, %v2553
        %v2564 = vpack.c.b16 %v2556, %v2555
        %v2566 = vsel %vm420, %v2517, 0
        %v2569 = vsel %vm420, %v2518, 0
        %v2572 = vsel %vm420, %v2519, 0
        %v2575 = vsel %vm420, %v2520, 0
        %v2578 = vsel %vm420, %v2521, 0
        %v2581 = vsel %vm420, %v2522, 0
        %v2584 = vsel %vm420, %v2523, 0
        %v2587 = vsel %vm420, %v2524, 0
        %v2590 = vsel %vm420, %v2557, 0
        %v2593 = vsel %vm420, %v2558, 0
        %v2596 = vsel %vm420, %v2559, 0
        %v2599 = vsel %vm420, %v2560, 0
        %v2602 = vsel %vm420, %v2561, 0
        %v2605 = vsel %vm420, %v2562, 0
        %v2608 = vsel %vm420, %v2563, 0
        %v2611 = vsel %vm420, %v2564, 0
        %2613 = vmatpush.bf16.xpose.msra.mxu0 %v2611
        %2614 = vmatpush.bf16.xpose.msra.mxu0 %v2608
        %2615 = vmatpush.bf16.xpose.msra.mxu0 %v2605
        %2616 = vmatpush.bf16.xpose.msra.mxu0 %v2602
        %2617 = vmatpush.bf16.xpose.msra.mxu0 %v2599
        %2618 = vmatpush.bf16.xpose.msra.mxu0 %v2596
        %2619 = vmatpush.bf16.xpose.msra.mxu0 %v2593
        %2620 = vmatpush.bf16.xpose.msra.mxu0 %v2590
        %2621 = vmatmul.bf16.gmra.mxu0 %v2566
        %v2622 = vpop.f32.mrf.mxu0
        %v2623 = vadd.f32 0.0, %v2622
        %v2624 = vpop.f32.mrf.mxu0
        %v2625 = vadd.f32 0.0, %v2624
        %2626 = vmatmul.bf16.gmra.mxu0 %v2569
        %v2627 = vpop.f32.mrf.mxu0
        %v2628 = vadd.f32 0.0, %v2627
        %v2629 = vpop.f32.mrf.mxu0
        %v2630 = vadd.f32 0.0, %v2629
        %2631 = vmatmul.bf16.gmra.mxu0 %v2572
        %v2632 = vpop.f32.mrf.mxu0
        %v2633 = vadd.f32 0.0, %v2632
        %v2634 = vpop.f32.mrf.mxu0
        %v2635 = vadd.f32 0.0, %v2634
        %2636 = vmatmul.bf16.gmra.mxu0 %v2575
        %v2637 = vpop.f32.mrf.mxu0
        %v2638 = vadd.f32 0.0, %v2637
        %v2639 = vpop.f32.mrf.mxu0
        %v2640 = vadd.f32 0.0, %v2639
        %2641 = vmatmul.bf16.gmra.mxu0 %v2578
        %v2642 = vpop.f32.mrf.mxu0
        %v2643 = vadd.f32 0.0, %v2642
        %v2644 = vpop.f32.mrf.mxu0
        %v2645 = vadd.f32 0.0, %v2644
        %2646 = vmatmul.bf16.gmra.mxu0 %v2581
        %v2647 = vpop.f32.mrf.mxu0
        %v2648 = vadd.f32 0.0, %v2647
        %v2649 = vpop.f32.mrf.mxu0
        %v2650 = vadd.f32 0.0, %v2649
        %2651 = vmatmul.bf16.gmra.mxu0 %v2584
        %v2652 = vpop.f32.mrf.mxu0
        %v2653 = vadd.f32 0.0, %v2652
        %v2654 = vpop.f32.mrf.mxu0
        %v2655 = vadd.f32 0.0, %v2654
        %2656 = vmatmul.bf16.gmra.mxu0 %v2587
        %v2657 = vpop.f32.mrf.mxu0
        %v2658 = vadd.f32 0.0, %v2657
        %v2659 = vpop.f32.mrf.mxu0
        %v2660 = vadd.f32 0.0, %v2659
        %2661 = vdwg.mxu0
        %v2662 = vmul.f32 %v2623, 0.17677669
        %v2663 = vmul.f32 %v2625, 0.17677669
        %v2664 = vmul.f32 %v2628, 0.17677669
        %v2665 = vmul.f32 %v2630, 0.17677669
        %v2666 = vmul.f32 %v2633, 0.17677669
        %v2667 = vmul.f32 %v2635, 0.17677669
        %v2668 = vmul.f32 %v2638, 0.17677669
        %v2669 = vmul.f32 %v2640, 0.17677669
        %v2670 = vmul.f32 %v2643, 0.17677669
        %v2671 = vmul.f32 %v2645, 0.17677669
        %v2672 = vmul.f32 %v2648, 0.17677669
        %v2673 = vmul.f32 %v2650, 0.17677669
        %v2674 = vmul.f32 %v2653, 0.17677669
        %v2675 = vmul.f32 %v2655, 0.17677669
        %v2676 = vmul.f32 %v2658, 0.17677669
        %v2677 = vmul.f32 %v2660, 0.17677669
        %s2678 = scalar_lea.vmem %s3, 384
        %v2679 = vld [vmem:[%s2678] sm:$0xff]
        %v2680 = vld [vmem:[%s2678 + $0x8] sm:$0xff]
        %v2681 = vld [vmem:[%s2678 + $0x10] sm:$0xff]
        %v2682 = vld [vmem:[%s2678 + $0x18] sm:$0xff]
        %v2683 = vld [vmem:[%s2678 + $0x20] sm:$0xff]
        %v2684 = vld [vmem:[%s2678 + $0x28] sm:$0xff]
        %v2685 = vld [vmem:[%s2678 + $0x30] sm:$0xff]
        %v2686 = vld [vmem:[%s2678 + $0x38] sm:$0xff]
        %v2687 = vld [vmem:[%s2678 + $0x40] sm:$0xff]
        %v2688 = vld [vmem:[%s2678 + $0x48] sm:$0xff]
        %v2689 = vld [vmem:[%s2678 + $0x50] sm:$0xff]
        %v2690 = vld [vmem:[%s2678 + $0x58] sm:$0xff]
        %v2691 = vld [vmem:[%s2678 + $0x60] sm:$0xff]
        %v2692 = vld [vmem:[%s2678 + $0x68] sm:$0xff]
        %v2693 = vld [vmem:[%s2678 + $0x70] sm:$0xff]
        %v2694 = vld [vmem:[%s2678 + $0x78] sm:$0xff]
        %v2695 = vadd.f32 %v2662, %v2679
        %v2696 = vadd.f32 %v2663, %v2680
        %v2697 = vadd.f32 %v2664, %v2681
        %v2698 = vadd.f32 %v2665, %v2682
        %v2699 = vadd.f32 %v2666, %v2683
        %v2700 = vadd.f32 %v2667, %v2684
        %v2701 = vadd.f32 %v2668, %v2685
        %v2702 = vadd.f32 %v2669, %v2686
        %v2703 = vadd.f32 %v2670, %v2687
        %v2704 = vadd.f32 %v2671, %v2688
        %v2705 = vadd.f32 %v2672, %v2689
        %v2706 = vadd.f32 %v2673, %v2690
        %v2707 = vadd.f32 %v2674, %v2691
        %v2708 = vadd.f32 %v2675, %v2692
        %v2709 = vadd.f32 %v2676, %v2693
        %v2710 = vadd.f32 %v2677, %v2694
        %2711 = vmax.xlane.f32.xlu0 %v2695
        %v2712 = vpop.xlane.xlu0 %2711
        %2713 = vmax.xlane.f32.xlu0 %v2696
        %v2714 = vpop.xlane.xlu0 %2713
        %2715 = vmax.xlane.f32.xlu0 %v2697
        %v2716 = vpop.xlane.xlu0 %2715
        %2717 = vmax.xlane.f32.xlu0 %v2698
        %v2718 = vpop.xlane.xlu0 %2717
        %2719 = vmax.xlane.f32.xlu0 %v2699
        %v2720 = vpop.xlane.xlu0 %2719
        %2721 = vmax.xlane.f32.xlu0 %v2700
        %v2722 = vpop.xlane.xlu0 %2721
        %2723 = vmax.xlane.f32.xlu0 %v2701
        %v2724 = vpop.xlane.xlu0 %2723
        %2725 = vmax.xlane.f32.xlu0 %v2702
        %v2726 = vpop.xlane.xlu0 %2725
        %2727 = vmax.xlane.f32.xlu0 %v2703
        %v2728 = vpop.xlane.xlu0 %2727
        %2729 = vmax.xlane.f32.xlu0 %v2704
        %v2730 = vpop.xlane.xlu0 %2729
        %2731 = vmax.xlane.f32.xlu0 %v2705
        %v2732 = vpop.xlane.xlu0 %2731
        %2733 = vmax.xlane.f32.xlu0 %v2706
        %v2734 = vpop.xlane.xlu0 %2733
        %2735 = vmax.xlane.f32.xlu0 %v2707
        %v2736 = vpop.xlane.xlu0 %2735
        %2737 = vmax.xlane.f32.xlu0 %v2708
        %v2738 = vpop.xlane.xlu0 %2737
        %2739 = vmax.xlane.f32.xlu0 %v2709
        %v2740 = vpop.xlane.xlu0 %2739
        %2741 = vmax.xlane.f32.xlu0 %v2710
        %v2742 = vpop.xlane.xlu0 %2741
        %v2743 = vsub.f32 %v2695, %v2712
        %v2744 = vsub.f32 %v2696, %v2714
        %v2745 = vsub.f32 %v2697, %v2716
        %v2746 = vsub.f32 %v2698, %v2718
        %v2747 = vsub.f32 %v2699, %v2720
        %v2748 = vsub.f32 %v2700, %v2722
        %v2749 = vsub.f32 %v2701, %v2724
        %v2750 = vsub.f32 %v2702, %v2726
        %v2751 = vsub.f32 %v2703, %v2728
        %v2752 = vsub.f32 %v2704, %v2730
        %v2753 = vsub.f32 %v2705, %v2732
        %v2754 = vsub.f32 %v2706, %v2734
        %v2755 = vsub.f32 %v2707, %v2736
        %v2756 = vsub.f32 %v2708, %v2738
        %v2757 = vsub.f32 %v2709, %v2740
        %v2758 = vsub.f32 %v2710, %v2742
        %v2759 = vmul.f32 %v2743, 1.442695
        %v2760 = vpow.pop %v2759
        %v2761 = vmul.f32 %v2744, 1.442695
        %v2762 = vpow.pop %v2761
        %v2763 = vmul.f32 %v2745, 1.442695
        %v2764 = vpow.pop %v2763
        %v2765 = vmul.f32 %v2746, 1.442695
        %v2766 = vpow.pop %v2765
        %v2767 = vmul.f32 %v2747, 1.442695
        %v2768 = vpow.pop %v2767
        %v2769 = vmul.f32 %v2748, 1.442695
        %v2770 = vpow.pop %v2769
        %v2771 = vmul.f32 %v2749, 1.442695
        %v2772 = vpow.pop %v2771
        %v2773 = vmul.f32 %v2750, 1.442695
        %v2774 = vpow.pop %v2773
        %v2775 = vmul.f32 %v2751, 1.442695
        %v2776 = vpow.pop %v2775
        %v2777 = vmul.f32 %v2752, 1.442695
        %v2778 = vpow.pop %v2777
        %v2779 = vmul.f32 %v2753, 1.442695
        %v2780 = vpow.pop %v2779
        %v2781 = vmul.f32 %v2754, 1.442695
        %v2782 = vpow.pop %v2781
        %v2783 = vmul.f32 %v2755, 1.442695
        %v2784 = vpow.pop %v2783
        %v2785 = vmul.f32 %v2756, 1.442695
        %v2786 = vpow.pop %v2785
        %v2787 = vmul.f32 %v2757, 1.442695
        %v2788 = vpow.pop %v2787
        %v2789 = vmul.f32 %v2758, 1.442695
        %v2790 = vpow.pop %v2789
        %2791 = vadd.xlane.f32.xlu0 %v2760
        %v2792 = vpop.xlane.xlu0 %2791
        %2793 = vadd.xlane.f32.xlu0 %v2762
        %v2794 = vpop.xlane.xlu0 %2793
        %2795 = vadd.xlane.f32.xlu0 %v2764
        %v2796 = vpop.xlane.xlu0 %2795
        %2797 = vadd.xlane.f32.xlu0 %v2766
        %v2798 = vpop.xlane.xlu0 %2797
        %2799 = vadd.xlane.f32.xlu0 %v2768
        %v2800 = vpop.xlane.xlu0 %2799
        %2801 = vadd.xlane.f32.xlu0 %v2770
        %v2802 = vpop.xlane.xlu0 %2801
        %2803 = vadd.xlane.f32.xlu0 %v2772
        %v2804 = vpop.xlane.xlu0 %2803
        %2805 = vadd.xlane.f32.xlu0 %v2774
        %v2806 = vpop.xlane.xlu0 %2805
        %2807 = vadd.xlane.f32.xlu0 %v2776
        %v2808 = vpop.xlane.xlu0 %2807
        %2809 = vadd.xlane.f32.xlu0 %v2778
        %v2810 = vpop.xlane.xlu0 %2809
        %2811 = vadd.xlane.f32.xlu0 %v2780
        %v2812 = vpop.xlane.xlu0 %2811
        %2813 = vadd.xlane.f32.xlu0 %v2782
        %v2814 = vpop.xlane.xlu0 %2813
        %2815 = vadd.xlane.f32.xlu0 %v2784
        %v2816 = vpop.xlane.xlu0 %2815
        %2817 = vadd.xlane.f32.xlu0 %v2786
        %v2818 = vpop.xlane.xlu0 %2817
        %2819 = vadd.xlane.f32.xlu0 %v2788
        %v2820 = vpop.xlane.xlu0 %2819
        %2821 = vadd.xlane.f32.xlu0 %v2790
        %v2822 = vpop.xlane.xlu0 %2821
        %v2823 = vrcp.pop %v2792
        %v2824 = vrcp.pop %v2794
        %v2825 = vrcp.pop %v2796
        %v2826 = vrcp.pop %v2798
        %v2827 = vrcp.pop %v2800
        %v2828 = vrcp.pop %v2802
        %v2829 = vrcp.pop %v2804
        %v2830 = vrcp.pop %v2806
        %v2831 = vrcp.pop %v2808
        %v2832 = vrcp.pop %v2810
        %v2833 = vrcp.pop %v2812
        %v2834 = vrcp.pop %v2814
        %v2835 = vrcp.pop %v2816
        %v2836 = vrcp.pop %v2818
        %v2837 = vrcp.pop %v2820
        %v2838 = vrcp.pop %v2822
        %v2839 = vmul.f32 %v2760, %v2823
        %v2840 = vmul.f32 %v2762, %v2824
        %v2841 = vmul.f32 %v2764, %v2825
        %v2842 = vmul.f32 %v2766, %v2826
        %v2843 = vmul.f32 %v2768, %v2827
        %v2844 = vmul.f32 %v2770, %v2828
        %v2845 = vmul.f32 %v2772, %v2829
        %v2846 = vmul.f32 %v2774, %v2830
        %v2847 = vmul.f32 %v2776, %v2831
        %v2848 = vmul.f32 %v2778, %v2832
        %v2849 = vmul.f32 %v2780, %v2833
        %v2850 = vmul.f32 %v2782, %v2834
        %v2851 = vmul.f32 %v2784, %v2835
        %v2852 = vmul.f32 %v2786, %v2836
        %v2853 = vmul.f32 %v2788, %v2837
        %v2854 = vmul.f32 %v2790, %v2838
        %v2855 = vpack.c.bf16 %v2840, %v2839
        %v2856 = vpack.c.bf16 %v2842, %v2841
        %v2857 = vpack.c.bf16 %v2844, %v2843
        %v2858 = vpack.c.bf16 %v2846, %v2845
        %v2859 = vpack.c.bf16 %v2848, %v2847
        %v2860 = vpack.c.bf16 %v2850, %v2849
        %v2861 = vpack.c.bf16 %v2852, %v2851
        %v2862 = vpack.c.bf16 %v2854, %v2853
        %v2879 = vunpack.c.l.b16 %v2469
        %v2880 = vunpack.c.l.b16 %v2470
        %v2881 = vunpack.c.l.b16 %v2471
        %v2882 = vunpack.c.l.b16 %v2472
        %v2883 = vunpack.c.l.b16 %v2473
        %v2884 = vunpack.c.l.b16 %v2474
        %v2885 = vunpack.c.l.b16 %v2475
        %v2886 = vunpack.c.l.b16 %v2476
        %v2887 = vunpack.c.l.b16 %v2477
        %v2888 = vunpack.c.l.b16 %v2478
        %v2889 = vunpack.c.l.b16 %v2479
        %v2890 = vunpack.c.l.b16 %v2480
        %v2891 = vunpack.c.l.b16 %v2481
        %v2892 = vunpack.c.l.b16 %v2482
        %v2893 = vunpack.c.l.b16 %v2483
        %v2894 = vunpack.c.l.b16 %v2484
        %v2895 = vpack.c.b16 %v2880, %v2879
        %v2896 = vpack.c.b16 %v2882, %v2881
        %v2897 = vpack.c.b16 %v2884, %v2883
        %v2898 = vpack.c.b16 %v2886, %v2885
        %v2899 = vpack.c.b16 %v2888, %v2887
        %v2900 = vpack.c.b16 %v2890, %v2889
        %v2901 = vpack.c.b16 %v2892, %v2891
        %v2902 = vpack.c.b16 %v2894, %v2893
        %2911 = vmatpush.bf16.msra.mxu0 %v2902
        %2912 = vmatpush.bf16.msra.mxu0 %v2901
        %2913 = vmatpush.bf16.msra.mxu0 %v2900
        %2914 = vmatpush.bf16.msra.mxu0 %v2899
        %2915 = vmatpush.bf16.msra.mxu0 %v2898
        %2916 = vmatpush.bf16.msra.mxu0 %v2897
        %2917 = vmatpush.bf16.msra.mxu0 %v2896
        %2918 = vmatpush.bf16.msra.mxu0 %v2895
        %2919 = vmatmul.bf16.gmra.mxu0 %v2855
        %v2920 = vpop.f32.mrf.mxu0
        %v2921 = vadd.f32 0.0, %v2920
        %v2922 = vpop.f32.mrf.mxu0
        %v2923 = vadd.f32 0.0, %v2922
        %2924 = vmatmul.bf16.gmra.mxu0 %v2856
        %v2925 = vpop.f32.mrf.mxu0
        %v2926 = vadd.f32 0.0, %v2925
        %v2927 = vpop.f32.mrf.mxu0
        %v2928 = vadd.f32 0.0, %v2927
        %2929 = vmatmul.bf16.gmra.mxu0 %v2857
        %v2930 = vpop.f32.mrf.mxu0
        %v2931 = vadd.f32 0.0, %v2930
        %v2932 = vpop.f32.mrf.mxu0
        %v2933 = vadd.f32 0.0, %v2932
        %2934 = vmatmul.bf16.gmra.mxu0 %v2858
        %v2935 = vpop.f32.mrf.mxu0
        %v2936 = vadd.f32 0.0, %v2935
        %v2937 = vpop.f32.mrf.mxu0
        %v2938 = vadd.f32 0.0, %v2937
        %2939 = vmatmul.bf16.gmra.mxu0 %v2859
        %v2940 = vpop.f32.mrf.mxu0
        %v2941 = vadd.f32 0.0, %v2940
        %v2942 = vpop.f32.mrf.mxu0
        %v2943 = vadd.f32 0.0, %v2942
        %2944 = vmatmul.bf16.gmra.mxu0 %v2860
        %v2945 = vpop.f32.mrf.mxu0
        %v2946 = vadd.f32 0.0, %v2945
        %v2947 = vpop.f32.mrf.mxu0
        %v2948 = vadd.f32 0.0, %v2947
        %2949 = vmatmul.bf16.gmra.mxu0 %v2861
        %v2950 = vpop.f32.mrf.mxu0
        %v2951 = vadd.f32 0.0, %v2950
        %v2952 = vpop.f32.mrf.mxu0
        %v2953 = vadd.f32 0.0, %v2952
        %2954 = vmatmul.bf16.gmra.mxu0 %v2862
        %v2955 = vpop.f32.mrf.mxu0
        %v2956 = vadd.f32 0.0, %v2955
        %v2957 = vpop.f32.mrf.mxu0
        %v2958 = vadd.f32 0.0, %v2957
        %2959 = vdwg.mxu0
        %v2960 = vpack.c.bf16 %v2923, %v2921
        %v2961 = vpack.c.bf16 %v2928, %v2926
        %v2962 = vld [vmem:[%s4] sm:$0xf]
        %v2963 = vld [vmem:[%s4 + $0x4] sm:$0xf]
        %v2964 = vld [vmem:[%s4 + $0x8] sm:$0xf]
        %v2965 = vld [vmem:[%s4 + $0xc] sm:$0xf]
        %v2966 = vpack.c.bf16 %v2933, %v2931
        %v2967 = vpack.c.bf16 %v2938, %v2936
        %v2968 = vld [vmem:[%s4 + $0x10] sm:$0xf]
        %v2969 = vld [vmem:[%s4 + $0x14] sm:$0xf]
        %v2970 = vld [vmem:[%s4 + $0x18] sm:$0xf]
        %v2971 = vld [vmem:[%s4 + $0x1c] sm:$0xf]
        %v2976 = vunpack.c.l.b16 %v2968
        %v2977 = vunpack.c.l.b16 %v2969
        %v2978 = vunpack.c.l.b16 %v2970
        %v2979 = vunpack.c.l.b16 %v2971
        %v2980 = vpack.c.b16 %v2977, %v2976
        %v2981 = vpack.c.b16 %v2979, %v2978
        %v2985 = vsel %vm420, %v2966, 0
        %v2988 = vsel %vm420, %v2967, 0
        %2990 = vmatpush.bf16.msra.mxu0 0
        %2991 = vmatpush.bf16.msra.mxu0 0
        %2992 = vmatpush.bf16.msra.mxu0 0
        %2993 = vmatpush.bf16.msra.mxu0 0
        %2994 = vmatpush.bf16.msra.mxu0 0
        %2995 = vmatpush.bf16.msra.mxu0 0
        %2996 = vmatpush.bf16.msra.mxu0 %v2981
        %2997 = vmatpush.bf16.msra.mxu0 %v2980
        %2998 = vmatmul.bf16.gmra.mxu0 %v2985
        %v2999 = vpop.f32.mrf.mxu0
        %v3000 = vadd.f32 0.0, %v2999
        %v3001 = vpop.f32.mrf.mxu0
        %v3002 = vadd.f32 0.0, %v3001
        %3003 = vmatmul.bf16.gmra.mxu0 %v2988
        %v3004 = vpop.f32.mrf.mxu0
        %v3005 = vadd.f32 0.0, %v3004
        %v3006 = vpop.f32.mrf.mxu0
        %v3007 = vadd.f32 0.0, %v3006
        %3008 = vdwg.mxu0
        %v3013 = vunpack.c.l.b16 %v2962
        %v3014 = vunpack.c.l.b16 %v2963
        %v3015 = vunpack.c.l.b16 %v2964
        %v3016 = vunpack.c.l.b16 %v2965
        %v3017 = vpack.c.b16 %v3014, %v3013
        %v3018 = vpack.c.b16 %v3016, %v3015
        %v3022 = vsel %vm420, %v2960, 0
        %v3025 = vsel %vm420, %v2961, 0
        %3027 = vmatpush.bf16.msra.mxu0 0
        %3028 = vmatpush.bf16.msra.mxu0 0
        %3029 = vmatpush.bf16.msra.mxu0 0
        %3030 = vmatpush.bf16.msra.mxu0 0
        %3031 = vmatpush.bf16.msra.mxu0 0
        %3032 = vmatpush.bf16.msra.mxu0 0
        %3033 = vmatpush.bf16.msra.mxu0 %v3018
        %3034 = vmatpush.bf16.msra.mxu0 %v3017
        %3035 = vmatmul.bf16.gmra.mxu0 %v3022
        %v3036 = vpop.f32.mrf.mxu0
        %v3037 = vadd.f32 %v3000, %v3036
        %v3038 = vpop.f32.mrf.mxu0
        %v3039 = vadd.f32 %v3002, %v3038
        %3040 = vmatmul.bf16.gmra.mxu0 %v3025
        %v3041 = vpop.f32.mrf.mxu0
        %v3042 = vadd.f32 %v3005, %v3041
        %v3043 = vpop.f32.mrf.mxu0
        %v3044 = vadd.f32 %v3007, %v3043
        %3045 = vdwg.mxu0
        %v3046 = vpack.c.bf16 %v2943, %v2941
        %v3047 = vpack.c.bf16 %v2948, %v2946
        %v3048 = vld [vmem:[%s4 + $0x20] sm:$0xf]
        %v3049 = vld [vmem:[%s4 + $0x24] sm:$0xf]
        %v3050 = vld [vmem:[%s4 + $0x28] sm:$0xf]
        %v3051 = vld [vmem:[%s4 + $0x2c] sm:$0xf]
        %v3056 = vunpack.c.l.b16 %v3048
        %v3057 = vunpack.c.l.b16 %v3049
        %v3058 = vunpack.c.l.b16 %v3050
        %v3059 = vunpack.c.l.b16 %v3051
        %v3060 = vpack.c.b16 %v3057, %v3056
        %v3061 = vpack.c.b16 %v3059, %v3058
        %v3065 = vsel %vm420, %v3046, 0
        %v3068 = vsel %vm420, %v3047, 0
        %3070 = vmatpush.bf16.msra.mxu0 0
        %3071 = vmatpush.bf16.msra.mxu0 0
        %3072 = vmatpush.bf16.msra.mxu0 0
        %3073 = vmatpush.bf16.msra.mxu0 0
        %3074 = vmatpush.bf16.msra.mxu0 0
        %3075 = vmatpush.bf16.msra.mxu0 0
        %3076 = vmatpush.bf16.msra.mxu0 %v3061
        %3077 = vmatpush.bf16.msra.mxu0 %v3060
        %3078 = vmatmul.bf16.gmra.mxu0 %v3065
        %v3079 = vpop.f32.mrf.mxu0
        %v3080 = vadd.f32 0.0, %v3079
        %v3081 = vpop.f32.mrf.mxu0
        %v3082 = vadd.f32 0.0, %v3081
        %3083 = vmatmul.bf16.gmra.mxu0 %v3068
        %v3084 = vpop.f32.mrf.mxu0
        %v3085 = vadd.f32 0.0, %v3084
        %v3086 = vpop.f32.mrf.mxu0
        %v3087 = vadd.f32 0.0, %v3086
        %3088 = vdwg.mxu0
        %v3089 = vadd.f32 %v3037, %v3080
        %v3090 = vadd.f32 %v3039, %v3082
        %v3091 = vadd.f32 %v3042, %v3085
        %v3092 = vadd.f32 %v3044, %v3087
        %v3093 = vpack.c.bf16 %v2953, %v2951
        %v3094 = vpack.c.bf16 %v2958, %v2956
        %v3095 = vld [vmem:[%s4 + $0x30] sm:$0xf]
        %v3096 = vld [vmem:[%s4 + $0x34] sm:$0xf]
        %v3097 = vld [vmem:[%s4 + $0x38] sm:$0xf]
        %v3098 = vld [vmem:[%s4 + $0x3c] sm:$0xf]
        %v3103 = vunpack.c.l.b16 %v3095
        %v3104 = vunpack.c.l.b16 %v3096
        %v3105 = vunpack.c.l.b16 %v3097
        %v3106 = vunpack.c.l.b16 %v3098
        %v3107 = vpack.c.b16 %v3104, %v3103
        %v3108 = vpack.c.b16 %v3106, %v3105
        %v3112 = vsel %vm420, %v3093, 0
        %v3115 = vsel %vm420, %v3094, 0
        %3117 = vmatpush.bf16.msra.mxu0 0
        %3118 = vmatpush.bf16.msra.mxu0 0
        %3119 = vmatpush.bf16.msra.mxu0 0
        %3120 = vmatpush.bf16.msra.mxu0 0
        %3121 = vmatpush.bf16.msra.mxu0 0
        %3122 = vmatpush.bf16.msra.mxu0 0
        %3123 = vmatpush.bf16.msra.mxu0 %v3108
        %3124 = vmatpush.bf16.msra.mxu0 %v3107
        %3125 = vmatmul.bf16.gmra.mxu0 %v3112
        %v3126 = vpop.f32.mrf.mxu0
        %v3127 = vadd.f32 0.0, %v3126
        %v3128 = vpop.f32.mrf.mxu0
        %v3129 = vadd.f32 0.0, %v3128
        %3130 = vmatmul.bf16.gmra.mxu0 %v3115
        %v3131 = vpop.f32.mrf.mxu0
        %v3132 = vadd.f32 0.0, %v3131
        %v3133 = vpop.f32.mrf.mxu0
        %v3134 = vadd.f32 0.0, %v3133
        %3135 = vdwg.mxu0
        %v3136 = vadd.f32 %v3089, %v3127
        %v3137 = vadd.f32 %v3090, %v3129
        %v3138 = vadd.f32 %v3091, %v3132
        %v3139 = vadd.f32 %v3092, %v3134
        %v3140 = vadd.f32 %v3136, %v996
        %v3141 = vadd.f32 %v3137, %v996
        %v3142 = vadd.f32 %v3138, %v996
        %v3143 = vadd.f32 %v3139, %v996
        %3144 = vst [vmem:[%s274 + $0x60] sm:$0xff] %v3140
        %3145 = vst [vmem:[%s274 + $0x68] sm:$0xff] %v3141
        %3146 = vst [vmem:[%s274 + $0x70] sm:$0xff] %v3142
        %3147 = vst [vmem:[%s274 + $0x78] sm:$0xff] %v3143
        %s3148 = sand.u32 %s169, 1
        %s3149 = scalar_lea.sflag [#allocation3], %s3148
        %s3150 = sand.u32 %s169, 1
        %s3151 = smul.addr %s3150, 128
        %s3152 = scalar_lea.vmem [#allocation2], %s3151
        // Predicated region
        $region45: #{hydra_na_forward.3} parent=43 // pred_check
          %p3153 = pneg %p179
        $region46: #{hydra_na_forward.3} parent=43 // pred_check_branch
          %3155 = sbr.rel (%p3153) target = $region48
        $region47: #{hydra_na_forward.3} parent=43 // pred_region
          %3157 = vsyncadd %s3149, 0
          %s3158 = smul.addr %s20, 16
          %s3159 = smul.addr %s3158, 8
          %s3160 = scalar_lea.hbm %s6, %s3159
          %s3161 = sshll.u32 %s3152, 4
          %s3162 = int_to_ptr.vmem [resolvable:$true] %s3161
          %s3163 = sshll.u32 %s3160, 4
          %s3164 = int_to_ptr.hbm [resolvable:$true] %s3163
          %3169 = dma.vmem_to_hbm [thread:$0]  %s3162, 2048, %s3164, %s3149, 128, 128, 8
        $region48: #{hydra_na_forward.3} parent=43 // pred_fallthru
          _
      $region44: #{hydra_na_forward.3} parent=5 // pred_fallthru
        _
      %p3170 = scmp.le.s32.totalorder 2, %s15
      // Predicated region
      $region49: #{hydra_na_forward.3} parent=5 // pred_check
        %p3171 = pneg %p3170
      $region50: #{hydra_na_forward.3} parent=5 // pred_check_branch
        %3173 = sbr.rel (%p3171) target = $region52
      $region51: #{hydra_na_forward.3} parent=5 // pred_region
        %s3174 = ssub.s32 %s15, 2
        // Predicated region
        $region53: #{hydra_na_forward.3} parent=51 // pred_check
          %p3175 = pneg %p185
        $region54: #{hydra_na_forward.3} parent=51 // pred_check_branch
          %3177 = sbr.rel (%p3175) target = $region56
        $region55: #{hydra_na_forward.3} parent=51 // pred_region
          %s3178 = sand.u32 %s170, 1
          %s3179 = scalar_lea.sflag [#allocation3], %s3178
          %s3180 = sand.u32 %s170, 1
          %s3181 = smul.addr %s3180, 128
          %s3182 = scalar_lea.vmem [#allocation2], %s3181
          %3184 = dma.done %s3179, 2048
        $region56: #{hydra_na_forward.3} parent=51 // pred_fallthru
          _
      $region52: #{hydra_na_forward.3} parent=5 // pred_fallthru
        _
    $region6: #{hydra_na_forward.3} parent=1 // loop_footer
      %s19 = sadd.s32 1, %s15
    $region7: #{hydra_na_forward.3} parent=1 // loop_footer_branch
      %14 = sbr.rel target = $region3
    $region8: #{hydra_na_forward.3} parent=1 // loop_exit
      _
    %3185 = vsyncpa [#allocation3], 1
    %s3186 = scalar_lea.sflag [#allocation3], 1
    %3187 = vsyncpa %s3186, 1

</llo_original>
